<compile_context>
chip_gen: v7x
topology: tpu7x:2x2x1
jax: 0.10.0
libtpu: 0.0.40
codegen_flags: <defaults>
</compile_context>

<pallas_src>
import jax
import jax.numpy as jnp
from jax.experimental import pallas as pl
from jax.experimental.pallas import tpu as pltpu

DROP_P = 0.3
LEAKY_SLOPE = 0.2
N_FEATURES = 28 * 28          # 784
K_PAD = 896                   # 784 padded up to a multiple of 128 (7 * 128)
H1, H2, H3 = 1024, 512, 256
TILE_B = 256                  # batch tile size for the grid


def dnet_kernel(x_ref, m1_ref, m2_ref, m3_ref,
                w1_ref, b1_ref, w2_ref, b2_ref, w3_ref, b3_ref,
                w4_ref, b4_ref, out_ref):
    inv_keep = jnp.float32(1.0 / (1.0 - DROP_P))
    slope = jnp.float32(LEAKY_SLOPE)

    def hidden(h, w_ref, b_ref, m_ref):
        # bf16 operands into the MXU, f32 accumulation.
        y = jnp.dot(h.astype(jnp.bfloat16), w_ref[...],
                    preferred_element_type=jnp.float32) + b_ref[...]
        y = jnp.where(y > 0, y, slope * y)                        # LeakyReLU(0.2), f32 VPU
        return y * (m_ref[...].astype(jnp.float32) * inv_keep)    # inverted dropout

    h = x_ref[...]                                                # (tb, K_PAD) f32
    h = hidden(h, w1_ref, b1_ref, m1_ref)                         # (tb, 1024)
    h = hidden(h, w2_ref, b2_ref, m2_ref)                         # (tb, 512)
    h = hidden(h, w3_ref, b3_ref, m3_ref)                         # (tb, 256)

    # Head 256 -> 1: VPU multiply + lane reduce (an N=1 MXU matmul wastes the MXU).
    logits = jnp.sum(h * w4_ref[...], axis=-1, keepdims=True) + b4_ref[...]
    out_ref[...] = jax.nn.sigmoid(logits)


@jax.jit
def dnet_forward(x, kparams, key):
    """x: (B, 784) f32; kparams: prepared (padded / bf16) params; key: dropout PRNG key."""
    B = x.shape[0]
    tb = TILE_B if B >= TILE_B else B
    n_tiles = -(-B // tb)
    bp = n_tiles * tb

    # Zero-pad batch to a multiple of the tile and features 784 -> 896.
    xp = jnp.pad(x.astype(jnp.float32), ((0, bp - B), (0, K_PAD - x.shape[1])))

    # Train-mode dropout keep-masks ({0,1} bf16, exact); independent per sample,
    # so no mask correlation across batch tiles.
    k1, k2, k3 = jax.random.split(key, 3)
    m1 = jax.random.bernoulli(k1, 1.0 - DROP_P, (bp, H1)).astype(jnp.bfloat16)
    m2 = jax.random.bernoulli(k2, 1.0 - DROP_P, (bp, H2)).astype(jnp.bfloat16)
    m3 = jax.random.bernoulli(k3, 1.0 - DROP_P, (bp, H3)).astype(jnp.bfloat16)

    resident = lambda shape: pl.BlockSpec(shape, lambda i: (0, 0))   # weights: VMEM-resident
    batched = lambda shape: pl.BlockSpec(shape, lambda i: (i, 0))    # per batch tile

    out = pl.pallas_call(
        dnet_kernel,
        out_shape=jax.ShapeDtypeStruct((bp, 1), jnp.float32),
        grid=(n_tiles,),
        in_specs=[
            batched((tb, K_PAD)),
            batched((tb, H1)), batched((tb, H2)), batched((tb, H3)),
            resident((K_PAD, H1)), resident((1, H1)),
            resident((H1, H2)), resident((1, H2)),
            resident((H2, H3)), resident((1, H3)),
            resident((1, H3)), resident((1, 1)),
        ],
        out_specs=batched((tb, 1)),
        compiler_params=pltpu.CompilerParams(
            dimension_semantics=("parallel",),
            vmem_limit_bytes=32 << 20,
        ),
    )(
        xp, m1, m2, m3,
        kparams["w1"], kparams["b1"],
        kparams["w2"], kparams["b2"],
        kparams["w3"], kparams["b3"],
        kparams["w4_row"], kparams["b4"],
    )
    return out[:B]


def init_params(key):
    """Deterministic PyTorch-style init: U(-1/sqrt(fan_in), 1/sqrt(fan_in)); W as (in, out)."""
    dims = [(N_FEATURES, H1), (H1, H2), (H2, H3), (H3, 1)]
    params = {}
    for i, (fan_in, fan_out) in enumerate(dims, start=1):
        key, kw, kb = jax.random.split(key, 3)
        bound = 1.0 / (fan_in ** 0.5)
        params[f"w{i}"] = jax.random.uniform(
            kw, (fan_in, fan_out), jnp.float32, minval=-bound, maxval=bound)
        params[f"b{i}"] = jax.random.uniform(
            kb, (1, fan_out), jnp.float32, minval=-bound, maxval=bound)
    return params


def prepare_params(params):
    """Pad w1 K-dim to 896, cast hidden-layer weights to bf16, head weight as f32 row."""
    kp = {}
    w1 = jnp.pad(params["w1"], ((0, K_PAD - N_FEATURES), (0, 0)))
    kp["w1"] = w1.astype(jnp.bfloat16)
    kp["w2"] = params["w2"].astype(jnp.bfloat16)
    kp["w3"] = params["w3"].astype(jnp.bfloat16)
    kp["b1"] = params["b1"]
    kp["b2"] = params["b2"]
    kp["b3"] = params["b3"]
    kp["w4_row"] = params["w4"].T          # (1, 256) f32, used on the VPU reduce path
    kp["b4"] = params["b4"]                # (1, 1) f32
    return kp


if __name__ == "__main__":
    root = jax.random.PRNGKey(0)
    k_params, k_x, k_drop = jax.random.split(root, 3)

    params = init_params(k_params)
    kparams = prepare_params(params)

    B = 2
    x = jax.random.normal(k_x, (B, N_FEATURES), dtype=jnp.float32)

    out = dnet_forward(x, kparams, k_drop)
    out = jax.block_until_ready(out)

    assert out.shape == (B, 1), out.shape
    assert out.dtype == jnp.float32
    # sigmoid output must lie in (0, 1)
    assert bool(jnp.all((out > 0.0) & (out < 1.0)))

    print("KERNEL_OK")
</pallas_src>

<mosaic_0001>
module attributes {stable_mosaic.version = 11 : i64} {
  func.func @dnet_kernel(%arg0: i32, %arg1: memref<2x896xf32, #tpu.memory_space<vmem>>, %arg2: memref<2x1024xbf16, #tpu.memory_space<vmem>>, %arg3: memref<2x512xbf16, #tpu.memory_space<vmem>>, %arg4: memref<2x256xbf16, #tpu.memory_space<vmem>>, %arg5: memref<896x1024xbf16, #tpu.memory_space<vmem>>, %arg6: memref<1x1024xf32, #tpu.memory_space<vmem>>, %arg7: memref<1024x512xbf16, #tpu.memory_space<vmem>>, %arg8: memref<1x512xf32, #tpu.memory_space<vmem>>, %arg9: memref<512x256xbf16, #tpu.memory_space<vmem>>, %arg10: memref<1x256xf32, #tpu.memory_space<vmem>>, %arg11: memref<1x256xf32, #tpu.memory_space<vmem>>, %arg12: memref<1x1xf32, #tpu.memory_space<vmem>>, %arg13: memref<2x1xf32, #tpu.memory_space<vmem>>) attributes {dimension_semantics = [#tpu.dimension_semantics<parallel>], iteration_bounds = array<i64: 1>, scalar_prefetch = 0 : i64, scratch_operands = 0 : i64, tpu.core_type = #tpu.core_type<tc>, window_params = [{transform_indices = @transform_0, window_bounds = array<i64: 2, 896>}, {transform_indices = @transform_1, window_bounds = array<i64: 2, 1024>}, {transform_indices = @transform_2, window_bounds = array<i64: 2, 512>}, {transform_indices = @transform_3, window_bounds = array<i64: 2, 256>}, {pipeline_mode = #tpu.pipeline_mode<synchronous>, transform_indices = @transform_4, window_bounds = array<i64: 896, 1024>}, {pipeline_mode = #tpu.pipeline_mode<synchronous>, transform_indices = @transform_5, window_bounds = array<i64: 1, 1024>}, {pipeline_mode = #tpu.pipeline_mode<synchronous>, transform_indices = @transform_6, window_bounds = array<i64: 1024, 512>}, {pipeline_mode = #tpu.pipeline_mode<synchronous>, transform_indices = @transform_7, window_bounds = array<i64: 1, 512>}, {pipeline_mode = #tpu.pipeline_mode<synchronous>, transform_indices = @transform_8, window_bounds = array<i64: 512, 256>}, {pipeline_mode = #tpu.pipeline_mode<synchronous>, transform_indices = @transform_9, window_bounds = array<i64: 1, 256>}, {pipeline_mode = #tpu.pipeline_mode<synchronous>, transform_indices = @transform_10, window_bounds = array<i64: 1, 256>}, {pipeline_mode = #tpu.pipeline_mode<synchronous>, transform_indices = @transform_11, window_bounds = array<i64: 1, 1>}, {transform_indices = @transform_12, window_bounds = array<i64: 2, 1>}]} {
    %c0 = arith.constant 0 : index
    %c0_0 = arith.constant 0 : index
    %0 = vector.load %arg1[%c0, %c0_0] : memref<2x896xf32, #tpu.memory_space<vmem>>, vector<2x896xf32>
    %1 = arith.truncf %0 : vector<2x896xf32> to vector<2x896xbf16>
    %c0_1 = arith.constant 0 : index
    %c0_2 = arith.constant 0 : index
    %2 = vector.load %arg5[%c0_1, %c0_2] : memref<896x1024xbf16, #tpu.memory_space<vmem>>, vector<896x1024xbf16>
    %cst = arith.constant dense<0.000000e+00> : vector<2x1024xf32>
    %3 = tpu.matmul %1, %2, %cst {dimension_numbers = #tpu.dot_dimension_numbers<[1], [0], [0], [1], [0, 0, 1, 1], [], []>} : vector<2x896xbf16>, vector<896x1024xbf16>, vector<2x1024xf32> -> vector<2x1024xf32>
    %c0_3 = arith.constant 0 : index
    %c0_4 = arith.constant 0 : index
    %4 = vector.load %arg6[%c0_3, %c0_4] : memref<1x1024xf32, #tpu.memory_space<vmem>>, vector<1x1024xf32>
    %5 = vector.broadcast %4 : vector<1x1024xf32> to vector<2x1024xf32>
    %6 = arith.addf %3, %5 : vector<2x1024xf32>
    %cst_5 = arith.constant 0.000000e+00 : f32
    %7 = vector.broadcast %cst_5 : f32 to vector<2x1024xf32>
    %8 = arith.cmpf ogt, %6, %7 : vector<2x1024xf32>
    %cst_6 = arith.constant 2.000000e-01 : f32
    %9 = vector.broadcast %cst_6 : f32 to vector<2x1024xf32>
    %10 = arith.mulf %9, %6 : vector<2x1024xf32>
    %11 = arith.select %8, %6, %10 : vector<2x1024xi1>, vector<2x1024xf32>
    %c0_7 = arith.constant 0 : index
    %c0_8 = arith.constant 0 : index
    %12 = vector.load %arg2[%c0_7, %c0_8] : memref<2x1024xbf16, #tpu.memory_space<vmem>>, vector<2x1024xbf16>
    %13 = arith.extf %12 : vector<2x1024xbf16> to vector<2x1024xf32>
    %cst_9 = arith.constant 1.42857146 : f32
    %14 = vector.broadcast %cst_9 : f32 to vector<2x1024xf32>
    %15 = arith.mulf %13, %14 : vector<2x1024xf32>
    %16 = arith.mulf %11, %15 : vector<2x1024xf32>
    %17 = arith.truncf %16 : vector<2x1024xf32> to vector<2x1024xbf16>
    %c0_10 = arith.constant 0 : index
    %c0_11 = arith.constant 0 : index
    %18 = vector.load %arg7[%c0_10, %c0_11] : memref<1024x512xbf16, #tpu.memory_space<vmem>>, vector<1024x512xbf16>
    %cst_12 = arith.constant dense<0.000000e+00> : vector<2x512xf32>
    %19 = tpu.matmul %17, %18, %cst_12 {dimension_numbers = #tpu.dot_dimension_numbers<[1], [0], [0], [1], [0, 0, 1, 1], [], []>} : vector<2x1024xbf16>, vector<1024x512xbf16>, vector<2x512xf32> -> vector<2x512xf32>
    %c0_13 = arith.constant 0 : index
    %c0_14 = arith.constant 0 : index
    %20 = vector.load %arg8[%c0_13, %c0_14] : memref<1x512xf32, #tpu.memory_space<vmem>>, vector<1x512xf32>
    %21 = vector.broadcast %20 : vector<1x512xf32> to vector<2x512xf32>
    %22 = arith.addf %19, %21 : vector<2x512xf32>
    %cst_15 = arith.constant 0.000000e+00 : f32
    %23 = vector.broadcast %cst_15 : f32 to vector<2x512xf32>
    %24 = arith.cmpf ogt, %22, %23 : vector<2x512xf32>
    %cst_16 = arith.constant 2.000000e-01 : f32
    %25 = vector.broadcast %cst_16 : f32 to vector<2x512xf32>
    %26 = arith.mulf %25, %22 : vector<2x512xf32>
    %27 = arith.select %24, %22, %26 : vector<2x512xi1>, vector<2x512xf32>
    %c0_17 = arith.constant 0 : index
    %c0_18 = arith.constant 0 : index
    %28 = vector.load %arg3[%c0_17, %c0_18] : memref<2x512xbf16, #tpu.memory_space<vmem>>, vector<2x512xbf16>
    %29 = arith.extf %28 : vector<2x512xbf16> to vector<2x512xf32>
    %cst_19 = arith.constant 1.42857146 : f32
    %30 = vector.broadcast %cst_19 : f32 to vector<2x512xf32>
    %31 = arith.mulf %29, %30 : vector<2x512xf32>
    %32 = arith.mulf %27, %31 : vector<2x512xf32>
    %33 = arith.truncf %32 : vector<2x512xf32> to vector<2x512xbf16>
    %c0_20 = arith.constant 0 : index
    %c0_21 = arith.constant 0 : index
    %34 = vector.load %arg9[%c0_20, %c0_21] : memref<512x256xbf16, #tpu.memory_space<vmem>>, vector<512x256xbf16>
    %cst_22 = arith.constant dense<0.000000e+00> : vector<2x256xf32>
    %35 = tpu.matmul %33, %34, %cst_22 {dimension_numbers = #tpu.dot_dimension_numbers<[1], [0], [0], [1], [0, 0, 1, 1], [], []>} : vector<2x512xbf16>, vector<512x256xbf16>, vector<2x256xf32> -> vector<2x256xf32>
    %c0_23 = arith.constant 0 : index
    %c0_24 = arith.constant 0 : index
    %36 = vector.load %arg10[%c0_23, %c0_24] : memref<1x256xf32, #tpu.memory_space<vmem>>, vector<1x256xf32>
    %37 = vector.broadcast %36 : vector<1x256xf32> to vector<2x256xf32>
    %38 = arith.addf %35, %37 : vector<2x256xf32>
    %cst_25 = arith.constant 0.000000e+00 : f32
    %39 = vector.broadcast %cst_25 : f32 to vector<2x256xf32>
    %40 = arith.cmpf ogt, %38, %39 : vector<2x256xf32>
    %cst_26 = arith.constant 2.000000e-01 : f32
    %41 = vector.broadcast %cst_26 : f32 to vector<2x256xf32>
    %42 = arith.mulf %41, %38 : vector<2x256xf32>
    %43 = arith.select %40, %38, %42 : vector<2x256xi1>, vector<2x256xf32>
    %c0_27 = arith.constant 0 : index
    %c0_28 = arith.constant 0 : index
    %44 = vector.load %arg4[%c0_27, %c0_28] : memref<2x256xbf16, #tpu.memory_space<vmem>>, vector<2x256xbf16>
    %45 = arith.extf %44 : vector<2x256xbf16> to vector<2x256xf32>
    %cst_29 = arith.constant 1.42857146 : f32
    %46 = vector.broadcast %cst_29 : f32 to vector<2x256xf32>
    %47 = arith.mulf %45, %46 : vector<2x256xf32>
    %48 = arith.mulf %43, %47 : vector<2x256xf32>
    %c0_30 = arith.constant 0 : index
    %c0_31 = arith.constant 0 : index
    %49 = vector.load %arg11[%c0_30, %c0_31] : memref<1x256xf32, #tpu.memory_space<vmem>>, vector<1x256xf32>
    %50 = vector.broadcast %49 : vector<1x256xf32> to vector<2x256xf32>
    %51 = arith.mulf %48, %50 : vector<2x256xf32>
    %cst_32 = arith.constant dense<0.000000e+00> : vector<2xf32>
    %52 = vector.multi_reduction <add>, %51, %cst_32 [1] : vector<2x256xf32> to vector<2xf32>
    %53 = vector.shape_cast %52 : vector<2xf32> to vector<2x1xf32>
    %c0_33 = arith.constant 0 : index
    %c0_34 = arith.constant 0 : index
    %54 = vector.load %arg12[%c0_33, %c0_34] : memref<1x1xf32, #tpu.memory_space<vmem>>, vector<1x1xf32>
    %55 = vector.broadcast %54 : vector<1x1xf32> to vector<2x1xf32>
    %56 = arith.addf %53, %55 : vector<2x1xf32>
    %57 = arith.negf %56 : vector<2x1xf32>
    %58 = math.exp %57 : vector<2x1xf32>
    %cst_35 = arith.constant 1.000000e+00 : f32
    %59 = vector.broadcast %cst_35 : f32 to vector<2x1xf32>
    %60 = arith.addf %59, %58 : vector<2x1xf32>
    %61 = arith.divf %59, %60 : vector<2x1xf32>
    %c0_36 = arith.constant 0 : index
    %c0_37 = arith.constant 0 : index
    %62 = vector.load %arg13[%c0_36, %c0_37] : memref<2x1xf32, #tpu.memory_space<vmem>>, vector<2x1xf32>
    tpu.vector_store %arg13[%c0_36, %c0_37], %61 {strides = array<i32>} : memref<2x1xf32, #tpu.memory_space<vmem>>, vector<2x1xf32>,
    return
  }
  func.func @transform_0(%arg0: i32) -> (i32, i32) {
    %c0_i32 = arith.constant 0 : i32
    %c0_i32_0 = arith.constant 0 : i32
    return %arg0, %c0_i32 : i32, i32
  }
  func.func @transform_1(%arg0: i32) -> (i32, i32) {
    %c0_i32 = arith.constant 0 : i32
    %c0_i32_0 = arith.constant 0 : i32
    return %arg0, %c0_i32 : i32, i32
  }
  func.func @transform_2(%arg0: i32) -> (i32, i32) {
    %c0_i32 = arith.constant 0 : i32
    %c0_i32_0 = arith.constant 0 : i32
    return %arg0, %c0_i32 : i32, i32
  }
  func.func @transform_3(%arg0: i32) -> (i32, i32) {
    %c0_i32 = arith.constant 0 : i32
    %c0_i32_0 = arith.constant 0 : i32
    return %arg0, %c0_i32 : i32, i32
  }
  func.func @transform_4(%arg0: i32) -> (i32, i32) {
    %c0_i32 = arith.constant 0 : i32
    %c0_i32_0 = arith.constant 0 : i32
    %c0_i32_1 = arith.constant 0 : i32
    return %c0_i32, %c0_i32_0 : i32, i32
  }
  func.func @transform_5(%arg0: i32) -> (i32, i32) {
    %c0_i32 = arith.constant 0 : i32
    %c0_i32_0 = arith.constant 0 : i32
    %c0_i32_1 = arith.constant 0 : i32
    return %c0_i32, %c0_i32_0 : i32, i32
  }
  func.func @transform_6(%arg0: i32) -> (i32, i32) {
    %c0_i32 = arith.constant 0 : i32
    %c0_i32_0 = arith.constant 0 : i32
    %c0_i32_1 = arith.constant 0 : i32
    return %c0_i32, %c0_i32_0 : i32, i32
  }
  func.func @transform_7(%arg0: i32) -> (i32, i32) {
    %c0_i32 = arith.constant 0 : i32
    %c0_i32_0 = arith.constant 0 : i32
    %c0_i32_1 = arith.constant 0 : i32
    return %c0_i32, %c0_i32_0 : i32, i32
  }
  func.func @transform_8(%arg0: i32) -> (i32, i32) {
    %c0_i32 = arith.constant 0 : i32
    %c0_i32_0 = arith.constant 0 : i32
    %c0_i32_1 = arith.constant 0 : i32
    return %c0_i32, %c0_i32_0 : i32, i32
  }
  func.func @transform_9(%arg0: i32) -> (i32, i32) {
    %c0_i32 = arith.constant 0 : i32
    %c0_i32_0 = arith.constant 0 : i32
    %c0_i32_1 = arith.constant 0 : i32
    return %c0_i32, %c0_i32_0 : i32, i32
  }
  func.func @transform_10(%arg0: i32) -> (i32, i32) {
    %c0_i32 = arith.constant 0 : i32
    %c0_i32_0 = arith.constant 0 : i32
    %c0_i32_1 = arith.constant 0 : i32
    return %c0_i32, %c0_i32_0 : i32, i32
  }
  func.func @transform_11(%arg0: i32) -> (i32, i32) {
    %c0_i32 = arith.constant 0 : i32
    %c0_i32_0 = arith.constant 0 : i32
    %c0_i32_1 = arith.constant 0 : i32
    return %c0_i32, %c0_i32_0 : i32, i32
  }
  func.func @transform_12(%arg0: i32) -> (i32, i32) {
    %c0_i32 = arith.constant 0 : i32
    %c0_i32_0 = arith.constant 0 : i32
    return %arg0, %c0_i32 : i32, i32
  }
}

</mosaic_0001>

<llo_original>
// kernel: dnet_forward.3
$region0: #{dnet_forward.3}
  #allocation0 [shape = 'u32[]', space=smem, size = 0x4, offset = 0x4, fixed_abs, tag = 'smem constant byte address 0x4 - core index']
  #allocation1 [shape = 'u32[144,128]{1,0:T(1,128)}', space=vmem, size = 0x12000, scoped, tag = 'internal scratch']
  #allocation2 [shape = 'f32[1,1]{1,0:T(1,128)S(1)}', space=vmem, size = 0x200, scoped, tag = 'scoped memory for dnet_forward.3']
  %s0 = inlined_call_operand.vmem [shape: f32[2,896], index: 0, kind: input, shape index: {}]
  %s1 = inlined_call_operand.vmem [shape: bf16[2,1024], index: 1, kind: input, shape index: {}]
  %s2 = inlined_call_operand.vmem [shape: bf16[2,512], index: 2, kind: input, shape index: {}]
  %s3 = inlined_call_operand.vmem [shape: bf16[2,256], index: 3, kind: input, shape index: {}]
  %s4 = inlined_call_operand.hbm [shape: bf16[896,1024], index: 4, kind: input, shape index: {}]
  %s5 = inlined_call_operand.hbm [shape: f32[1,1024], index: 5, kind: input, shape index: {}]
  %s6 = inlined_call_operand.hbm [shape: bf16[1024,512], index: 6, kind: input, shape index: {}]
  %s7 = inlined_call_operand.hbm [shape: f32[1,512], index: 7, kind: input, shape index: {}]
  %s8 = inlined_call_operand.hbm [shape: bf16[512,256], index: 8, kind: input, shape index: {}]
  %s9 = inlined_call_operand.hbm [shape: f32[1,256], index: 9, kind: input, shape index: {}]
  %s10 = inlined_call_operand.hbm [shape: f32[1,256], index: 10, kind: input, shape index: {}]
  %s11 = inlined_call_operand.<no memory space> [shape: f32[1,1], index: 11, kind: input, shape index: {}]
  %s12 = inlined_call_operand.vmem [shape: f32[2,1], index: 12, kind: output, shape index: {}]
  %s13 = sld [smem:[#allocation0]]
  $region86: #{dnet_forward.3} parent=0
    _
  %s15 = ssub.s32 1, %s13
  %s16 = scalar_select 0, %s15, %s13
  %v17 = vstv %s11
  %18 = vst [vmem:[#allocation2] sm:$0x1] %v17
  $region1: #{dnet_forward.3} parent=0
    #allocation3 [shape = 'u8[1835008]{0}', space=vmem, size = 0x1c0000, scoped, tag = 'input window, operand 4, single buffered']
    #allocation4 [shape = 's32[1]{0}', space=sflag, size = 0x4, scoped, tag = 'scoped memory for dnet_forward.3']
    #allocation5 [shape = 'u8[4096]{0}', space=vmem, size = 0x1000, scoped, tag = 'input window, operand 5, single buffered']
    #allocation6 [shape = 's32[1]{0}', space=sflag, size = 0x4, scoped, tag = 'scoped memory for dnet_forward.3']
    #allocation7 [shape = 'u8[1048576]{0}', space=vmem, size = 0x100000, scoped, tag = 'input window, operand 6, single buffered']
    #allocation8 [shape = 'u8[2048]{0}', space=vmem, size = 0x800, scoped, tag = 'input window, operand 7, single buffered']
    #allocation9 [shape = 's32[1]{0}', space=sflag, size = 0x4, scoped, tag = 'scoped memory for dnet_forward.3']
    #allocation10 [shape = 'u8[262144]{0}', space=vmem, size = 0x40000, scoped, tag = 'input window, operand 8, single buffered']
    #allocation11 [shape = 'u8[1024]{0}', space=vmem, size = 0x400, scoped, tag = 'input window, operand 9, single buffered']
    #allocation12 [shape = 's32[1]{0}', space=sflag, size = 0x4, scoped, tag = 'scoped memory for dnet_forward.3']
    #allocation13 [shape = 'u8[1024]{0}', space=vmem, size = 0x400, scoped, tag = 'input window, operand 10, single buffered']
    %19 = vsyncpa [#allocation4], 0
    %20 = vsyncpa [#allocation6], 0
    %21 = vsyncpa [#allocation9], 0
    %22 = vsyncpa [#allocation12], 0
    // Predicated region
    $region2: #{dnet_forward.3} parent=1 // pred_check
      _
    $region3: #{dnet_forward.3} parent=1 // pred_check_branch
      %24 = sbr.rel (0) target = $region5
    $region4: #{dnet_forward.3} parent=1 // pred_region
      _
    $region5: #{dnet_forward.3} parent=1 // pred_fallthru
      _
    // Predicated region
    $region6: #{dnet_forward.3} parent=1 // pred_check
      _
    $region7: #{dnet_forward.3} parent=1 // pred_check_branch
      %26 = sbr.rel (0) target = $region9
    $region8: #{dnet_forward.3} parent=1 // pred_region
      _
    $region9: #{dnet_forward.3} parent=1 // pred_fallthru
      _
    // Predicated region
    $region10: #{dnet_forward.3} parent=1 // pred_check
      _
    $region11: #{dnet_forward.3} parent=1 // pred_check_branch
      %28 = sbr.rel (0) target = $region13
    $region12: #{dnet_forward.3} parent=1 // pred_region
      _
    $region13: #{dnet_forward.3} parent=1 // pred_fallthru
      _
    // Predicated region
    $region14: #{dnet_forward.3} parent=1 // pred_check
      _
    $region15: #{dnet_forward.3} parent=1 // pred_check_branch
      %30 = sbr.rel (0) target = $region17
    $region16: #{dnet_forward.3} parent=1 // pred_region
      _
    $region17: #{dnet_forward.3} parent=1 // pred_fallthru
      _
    // Predicated region
    $region18: #{dnet_forward.3} parent=1 // pred_check
      _
    $region19: #{dnet_forward.3} parent=1 // pred_check_branch
      %32 = sbr.rel (0) target = $region21
    $region20: #{dnet_forward.3} parent=1 // pred_region
      %s34 = ssub.s32 57344, 57344
      %35 = vsyncadd [#allocation4], %s34
      %s36 = sshll.u32 [#allocation3], 4
      %s37 = int_to_ptr.vmem [resolvable:$true] %s36
      %42 = dma.hbm_to_vmem [thread:$0]  %s4, 57344, %s37, [#allocation4], 512, 512, 32
    $region21: #{dnet_forward.3} parent=1 // pred_fallthru
      _
    // Predicated region
    $region22: #{dnet_forward.3} parent=1 // pred_check
      _
    $region23: #{dnet_forward.3} parent=1 // pred_check_branch
      %44 = sbr.rel (0) target = $region25
    $region24: #{dnet_forward.3} parent=1 // pred_region
      %s46 = ssub.s32 128, 128
      %47 = vsyncadd [#allocation6], %s46
      %s49 = sshll.u32 [#allocation5], 4
      %s50 = int_to_ptr.vmem [resolvable:$true] %s49
      %52 = dma.hbm_to_vmem [thread:$0]  %s5, 128, %s50, [#allocation6]
    $region25: #{dnet_forward.3} parent=1 // pred_fallthru
      _
    // Predicated region
    $region26: #{dnet_forward.3} parent=1 // pred_check
      _
    $region27: #{dnet_forward.3} parent=1 // pred_check_branch
      %54 = sbr.rel (0) target = $region29
    $region28: #{dnet_forward.3} parent=1 // pred_region
      %s56 = ssub.s32 32768, 32768
      %57 = vsyncadd [#allocation6], %s56
      %s58 = sshll.u32 [#allocation7], 4
      %s59 = int_to_ptr.vmem [resolvable:$true] %s58
      %64 = dma.hbm_to_vmem [thread:$0]  %s6, 32768, %s59, [#allocation6], 256, 256, 16
    $region29: #{dnet_forward.3} parent=1 // pred_fallthru
      _
    // Predicated region
    $region30: #{dnet_forward.3} parent=1 // pred_check
      _
    $region31: #{dnet_forward.3} parent=1 // pred_check_branch
      %66 = sbr.rel (0) target = $region33
    $region32: #{dnet_forward.3} parent=1 // pred_region
      %s68 = ssub.s32 64, 64
      %69 = vsyncadd [#allocation9], %s68
      %s71 = sshll.u32 [#allocation8], 4
      %s72 = int_to_ptr.vmem [resolvable:$true] %s71
      %74 = dma.hbm_to_vmem [thread:$0]  %s7, 64, %s72, [#allocation9]
    $region33: #{dnet_forward.3} parent=1 // pred_fallthru
      _
    // Predicated region
    $region34: #{dnet_forward.3} parent=1 // pred_check
      _
    $region35: #{dnet_forward.3} parent=1 // pred_check_branch
      %76 = sbr.rel (0) target = $region37
    $region36: #{dnet_forward.3} parent=1 // pred_region
      %s78 = ssub.s32 8192, 8192
      %79 = vsyncadd [#allocation9], %s78
      %s80 = sshll.u32 [#allocation10], 4
      %s81 = int_to_ptr.vmem [resolvable:$true] %s80
      %86 = dma.hbm_to_vmem [thread:$0]  %s8, 8192, %s81, [#allocation9], 128, 128, 8
    $region37: #{dnet_forward.3} parent=1 // pred_fallthru
      _
    // Predicated region
    $region38: #{dnet_forward.3} parent=1 // pred_check
      _
    $region39: #{dnet_forward.3} parent=1 // pred_check_branch
      %88 = sbr.rel (0) target = $region41
    $region40: #{dnet_forward.3} parent=1 // pred_region
      %s90 = ssub.s32 32, 32
      %91 = vsyncadd [#allocation12], %s90
      %s93 = sshll.u32 [#allocation11], 4
      %s94 = int_to_ptr.vmem [resolvable:$true] %s93
      %96 = dma.hbm_to_vmem [thread:$0]  %s9, 32, %s94, [#allocation12]
    $region41: #{dnet_forward.3} parent=1 // pred_fallthru
      _
    // Predicated region
    $region42: #{dnet_forward.3} parent=1 // pred_check
      _
    $region43: #{dnet_forward.3} parent=1 // pred_check_branch
      %98 = sbr.rel (0) target = $region45
    $region44: #{dnet_forward.3} parent=1 // pred_region
      %s100 = ssub.s32 32, 32
      %101 = vsyncadd [#allocation12], %s100
      %s103 = sshll.u32 [#allocation13], 4
      %s104 = int_to_ptr.vmem [resolvable:$true] %s103
      %106 = dma.hbm_to_vmem [thread:$0]  %s10, 32, %s104, [#allocation12]
    $region45: #{dnet_forward.3} parent=1 // pred_fallthru
      _
    // Predicated region
    $region46: #{dnet_forward.3} parent=1 // pred_check
      _
    $region47: #{dnet_forward.3} parent=1 // pred_check_branch
      %108 = sbr.rel (0) target = $region49
    $region48: #{dnet_forward.3} parent=1 // pred_region
      _
    $region49: #{dnet_forward.3} parent=1 // pred_fallthru
      _
    // Predicated region
    $region50: #{dnet_forward.3} parent=1 // pred_check
      _
    $region51: #{dnet_forward.3} parent=1 // pred_check_branch
      %110 = sbr.rel (0) target = $region53
    $region52: #{dnet_forward.3} parent=1 // pred_region
      %111 = dma.done [#allocation4], 57344
    $region53: #{dnet_forward.3} parent=1 // pred_fallthru
      _
    // Predicated region
    $region54: #{dnet_forward.3} parent=1 // pred_check
      _
    $region55: #{dnet_forward.3} parent=1 // pred_check_branch
      %113 = sbr.rel (0) target = $region57
    $region56: #{dnet_forward.3} parent=1 // pred_region
      %114 = dma.done [#allocation6], 128
    $region57: #{dnet_forward.3} parent=1 // pred_fallthru
      _
    // Predicated region
    $region58: #{dnet_forward.3} parent=1 // pred_check
      _
    $region59: #{dnet_forward.3} parent=1 // pred_check_branch
      %116 = sbr.rel (0) target = $region61
    $region60: #{dnet_forward.3} parent=1 // pred_region
      %117 = dma.done [#allocation6], 32768
    $region61: #{dnet_forward.3} parent=1 // pred_fallthru
      _
    // Predicated region
    $region62: #{dnet_forward.3} parent=1 // pred_check
      _
    $region63: #{dnet_forward.3} parent=1 // pred_check_branch
      %119 = sbr.rel (0) target = $region65
    $region64: #{dnet_forward.3} parent=1 // pred_region
      %120 = dma.done [#allocation9], 64
    $region65: #{dnet_forward.3} parent=1 // pred_fallthru
      _
    // Predicated region
    $region66: #{dnet_forward.3} parent=1 // pred_check
      _
    $region67: #{dnet_forward.3} parent=1 // pred_check_branch
      %122 = sbr.rel (0) target = $region69
    $region68: #{dnet_forward.3} parent=1 // pred_region
      %123 = dma.done [#allocation9], 8192
    $region69: #{dnet_forward.3} parent=1 // pred_fallthru
      _
    // Predicated region
    $region70: #{dnet_forward.3} parent=1 // pred_check
      _
    $region71: #{dnet_forward.3} parent=1 // pred_check_branch
      %125 = sbr.rel (0) target = $region73
    $region72: #{dnet_forward.3} parent=1 // pred_region
      %126 = dma.done [#allocation12], 32
    $region73: #{dnet_forward.3} parent=1 // pred_fallthru
      _
    // Predicated region
    $region74: #{dnet_forward.3} parent=1 // pred_check
      _
    $region75: #{dnet_forward.3} parent=1 // pred_check_branch
      %128 = sbr.rel (0) target = $region77
    $region76: #{dnet_forward.3} parent=1 // pred_region
      %129 = dma.done [#allocation12], 32
    $region77: #{dnet_forward.3} parent=1 // pred_fallthru
      _
    %v131 = vld [vmem:[%s0] sm:$0xff]
    %v132 = vld [vmem:[%s0 + $0x8] sm:$0x3f]
    %v135 = vcombine.high %v131, %v131
    %v137 = vunpack.c.l.s4 1983009808
    %v138 = vunpack.c.0.s8 %v137
    %v139 = vlaneseq
    %v140 = vshrl.u32 %v139, 7
    %v141 = vsub.s32 %v138, %v140
    %v142 = vrot.slane %v131, %v141
    %v144 = vunpack.c.l.s4 1983009808
    %v145 = vunpack.c.0.s8 %v144
    %v146 = vlaneseq
    %v147 = vshrl.u32 %v146, 7
    %v148 = vsub.s32 %v145, %v147
    %v149 = vrot.slane %v135, %v148
    %v150 = vcombine.high %v142, %v142
    %v151 = vcombine.high %v149, %v149
    %v152 = vcombine.high %v132, %v132
    %v154 = vunpack.c.l.s4 1983009808
    %v155 = vunpack.c.0.s8 %v154
    %v156 = vlaneseq
    %v157 = vshrl.u32 %v156, 7
    %v158 = vsub.s32 %v155, %v157
    %v159 = vrot.slane %v132, %v158
    %v161 = vunpack.c.l.s4 1983009808
    %v162 = vunpack.c.0.s8 %v161
    %v163 = vlaneseq
    %v164 = vshrl.u32 %v163, 7
    %v165 = vsub.s32 %v162, %v164
    %v166 = vrot.slane %v152, %v165
    %v167 = vcombine.high %v159, %v159
    %v175 = vpack.c.bf16 %v142, %v142
    %v176 = vpack.c.bf16 %v150, %v150
    %v177 = vpack.c.bf16 %v149, %v149
    %v178 = vpack.c.bf16 %v151, %v151
    %v179 = vpack.c.bf16 %v159, %v159
    %v180 = vpack.c.bf16 %v167, %v167
    %v181 = vpack.c.bf16 %v166, %v166
    %v182 = vld [vmem:[#allocation3] sm:$0xff]
    %v183 = vld [vmem:[#allocation3 + $0x8] sm:$0xff]
    %v184 = vld [vmem:[#allocation3 + $0x10] sm:$0xff]
    %v185 = vld [vmem:[#allocation3 + $0x18] sm:$0xff]
    %v186 = vld [vmem:[#allocation3 + $0x20] sm:$0xff]
    %v187 = vld [vmem:[#allocation3 + $0x28] sm:$0xff]
    %v188 = vld [vmem:[#allocation3 + $0x30] sm:$0xff]
    %v189 = vld [vmem:[#allocation3 + $0x38] sm:$0xff]
    %v190 = vld [vmem:[#allocation3 + $0x40] sm:$0xff]
    %v191 = vld [vmem:[#allocation3 + $0x48] sm:$0xff]
    %v192 = vld [vmem:[#allocation3 + $0x50] sm:$0xff]
    %v193 = vld [vmem:[#allocation3 + $0x58] sm:$0xff]
    %v194 = vld [vmem:[#allocation3 + $0x60] sm:$0xff]
    %v195 = vld [vmem:[#allocation3 + $0x68] sm:$0xff]
    %v196 = vld [vmem:[#allocation3 + $0x70] sm:$0xff]
    %v197 = vld [vmem:[#allocation3 + $0x78] sm:$0xff]
    %v198 = vld [vmem:[#allocation3 + $0x80] sm:$0xff]
    %v199 = vld [vmem:[#allocation3 + $0x88] sm:$0xff]
    %v200 = vld [vmem:[#allocation3 + $0x90] sm:$0xff]
    %v201 = vld [vmem:[#allocation3 + $0x98] sm:$0xff]
    %v202 = vld [vmem:[#allocation3 + $0xa0] sm:$0xff]
    %v203 = vld [vmem:[#allocation3 + $0xa8] sm:$0xff]
    %v204 = vld [vmem:[#allocation3 + $0xb0] sm:$0xff]
    %v205 = vld [vmem:[#allocation3 + $0xb8] sm:$0xff]
    %v206 = vld [vmem:[#allocation3 + $0xc0] sm:$0xff]
    %v207 = vld [vmem:[#allocation3 + $0xc8] sm:$0xff]
    %v208 = vld [vmem:[#allocation3 + $0xd0] sm:$0xff]
    %v209 = vld [vmem:[#allocation3 + $0xd8] sm:$0xff]
    %v210 = vld [vmem:[#allocation3 + $0xe0] sm:$0xff]
    %v211 = vld [vmem:[#allocation3 + $0xe8] sm:$0xff]
    %v212 = vld [vmem:[#allocation3 + $0xf0] sm:$0xff]
    %v213 = vld [vmem:[#allocation3 + $0xf8] sm:$0xff]
    %v214 = vld [vmem:[#allocation3 + $0x100] sm:$0xff]
    %v215 = vld [vmem:[#allocation3 + $0x108] sm:$0xff]
    %v216 = vld [vmem:[#allocation3 + $0x110] sm:$0xff]
    %v217 = vld [vmem:[#allocation3 + $0x118] sm:$0xff]
    %v218 = vld [vmem:[#allocation3 + $0x120] sm:$0xff]
    %v219 = vld [vmem:[#allocation3 + $0x128] sm:$0xff]
    %v220 = vld [vmem:[#allocation3 + $0x130] sm:$0xff]
    %v221 = vld [vmem:[#allocation3 + $0x138] sm:$0xff]
    %v222 = vld [vmem:[#allocation3 + $0x140] sm:$0xff]
    %v223 = vld [vmem:[#allocation3 + $0x148] sm:$0xff]
    %v224 = vld [vmem:[#allocation3 + $0x150] sm:$0xff]
    %v225 = vld [vmem:[#allocation3 + $0x158] sm:$0xff]
    %v226 = vld [vmem:[#allocation3 + $0x160] sm:$0xff]
    %v227 = vld [vmem:[#allocation3 + $0x168] sm:$0xff]
    %v228 = vld [vmem:[#allocation3 + $0x170] sm:$0xff]
    %v229 = vld [vmem:[#allocation3 + $0x178] sm:$0xff]
    %v230 = vld [vmem:[#allocation3 + $0x180] sm:$0xff]
    %v231 = vld [vmem:[#allocation3 + $0x188] sm:$0xff]
    %v232 = vld [vmem:[#allocation3 + $0x190] sm:$0xff]
    %v233 = vld [vmem:[#allocation3 + $0x198] sm:$0xff]
    %v234 = vld [vmem:[#allocation3 + $0x1a0] sm:$0xff]
    %v235 = vld [vmem:[#allocation3 + $0x1a8] sm:$0xff]
    %v236 = vld [vmem:[#allocation3 + $0x1b0] sm:$0xff]
    %v237 = vld [vmem:[#allocation3 + $0x1b8] sm:$0xff]
    %v238 = vld [vmem:[#allocation3 + $0x1c0] sm:$0xff]
    %v239 = vld [vmem:[#allocation3 + $0x1c8] sm:$0xff]
    %v240 = vld [vmem:[#allocation3 + $0x1d0] sm:$0xff]
    %v241 = vld [vmem:[#allocation3 + $0x1d8] sm:$0xff]
    %v242 = vld [vmem:[#allocation3 + $0x1e0] sm:$0xff]
    %v243 = vld [vmem:[#allocation3 + $0x1e8] sm:$0xff]
    %v244 = vld [vmem:[#allocation3 + $0x1f0] sm:$0xff]
    %v245 = vld [vmem:[#allocation3 + $0x1f8] sm:$0xff]
    %v246 = vld [vmem:[#allocation3 + $0x200] sm:$0xff]
    %v247 = vld [vmem:[#allocation3 + $0x208] sm:$0xff]
    %v248 = vld [vmem:[#allocation3 + $0x210] sm:$0xff]
    %v249 = vld [vmem:[#allocation3 + $0x218] sm:$0xff]
    %v250 = vld [vmem:[#allocation3 + $0x220] sm:$0xff]
    %v251 = vld [vmem:[#allocation3 + $0x228] sm:$0xff]
    %v252 = vld [vmem:[#allocation3 + $0x230] sm:$0xff]
    %v253 = vld [vmem:[#allocation3 + $0x238] sm:$0xff]
    %v254 = vld [vmem:[#allocation3 + $0x240] sm:$0xff]
    %v255 = vld [vmem:[#allocation3 + $0x248] sm:$0xff]
    %v256 = vld [vmem:[#allocation3 + $0x250] sm:$0xff]
    %v257 = vld [vmem:[#allocation3 + $0x258] sm:$0xff]
    %v258 = vld [vmem:[#allocation3 + $0x260] sm:$0xff]
    %v259 = vld [vmem:[#allocation3 + $0x268] sm:$0xff]
    %v260 = vld [vmem:[#allocation3 + $0x270] sm:$0xff]
    %v261 = vld [vmem:[#allocation3 + $0x278] sm:$0xff]
    %v262 = vld [vmem:[#allocation3 + $0x280] sm:$0xff]
    %v263 = vld [vmem:[#allocation3 + $0x288] sm:$0xff]
    %v264 = vld [vmem:[#allocation3 + $0x290] sm:$0xff]
    %v265 = vld [vmem:[#allocation3 + $0x298] sm:$0xff]
    %v266 = vld [vmem:[#allocation3 + $0x2a0] sm:$0xff]
    %v267 = vld [vmem:[#allocation3 + $0x2a8] sm:$0xff]
    %v268 = vld [vmem:[#allocation3 + $0x2b0] sm:$0xff]
    %v269 = vld [vmem:[#allocation3 + $0x2b8] sm:$0xff]
    %v270 = vld [vmem:[#allocation3 + $0x2c0] sm:$0xff]
    %v271 = vld [vmem:[#allocation3 + $0x2c8] sm:$0xff]
    %v272 = vld [vmem:[#allocation3 + $0x2d0] sm:$0xff]
    %v273 = vld [vmem:[#allocation3 + $0x2d8] sm:$0xff]
    %v274 = vld [vmem:[#allocation3 + $0x2e0] sm:$0xff]
    %v275 = vld [vmem:[#allocation3 + $0x2e8] sm:$0xff]
    %v276 = vld [vmem:[#allocation3 + $0x2f0] sm:$0xff]
    %v277 = vld [vmem:[#allocation3 + $0x2f8] sm:$0xff]
    %v278 = vld [vmem:[#allocation3 + $0x300] sm:$0xff]
    %v279 = vld [vmem:[#allocation3 + $0x308] sm:$0xff]
    %v280 = vld [vmem:[#allocation3 + $0x310] sm:$0xff]
    %v281 = vld [vmem:[#allocation3 + $0x318] sm:$0xff]
    %v282 = vld [vmem:[#allocation3 + $0x320] sm:$0xff]
    %v283 = vld [vmem:[#allocation3 + $0x328] sm:$0xff]
    %v284 = vld [vmem:[#allocation3 + $0x330] sm:$0xff]
    %v285 = vld [vmem:[#allocation3 + $0x338] sm:$0xff]
    %v286 = vld [vmem:[#allocation3 + $0x340] sm:$0xff]
    %v287 = vld [vmem:[#allocation3 + $0x348] sm:$0xff]
    %v288 = vld [vmem:[#allocation3 + $0x350] sm:$0xff]
    %v289 = vld [vmem:[#allocation3 + $0x358] sm:$0xff]
    %v290 = vld [vmem:[#allocation3 + $0x360] sm:$0xff]
    %v291 = vld [vmem:[#allocation3 + $0x368] sm:$0xff]
    %v292 = vld [vmem:[#allocation3 + $0x370] sm:$0xff]
    %v293 = vld [vmem:[#allocation3 + $0x378] sm:$0xff]
    %v294 = vld [vmem:[#allocation3 + $0x380] sm:$0xff]
    %v295 = vld [vmem:[#allocation3 + $0x388] sm:$0xff]
    %v296 = vld [vmem:[#allocation3 + $0x390] sm:$0xff]
    %v297 = vld [vmem:[#allocation3 + $0x398] sm:$0xff]
    %v298 = vld [vmem:[#allocation3 + $0x3a0] sm:$0xff]
    %v299 = vld [vmem:[#allocation3 + $0x3a8] sm:$0xff]
    %v300 = vld [vmem:[#allocation3 + $0x3b0] sm:$0xff]
    %v301 = vld [vmem:[#allocation3 + $0x3b8] sm:$0xff]
    %v302 = vld [vmem:[#allocation3 + $0x3c0] sm:$0xff]
    %v303 = vld [vmem:[#allocation3 + $0x3c8] sm:$0xff]
    %v304 = vld [vmem:[#allocation3 + $0x3d0] sm:$0xff]
    %v305 = vld [vmem:[#allocation3 + $0x3d8] sm:$0xff]
    %v306 = vld [vmem:[#allocation3 + $0x3e0] sm:$0xff]
    %v307 = vld [vmem:[#allocation3 + $0x3e8] sm:$0xff]
    %v308 = vld [vmem:[#allocation3 + $0x3f0] sm:$0xff]
    %v309 = vld [vmem:[#allocation3 + $0x3f8] sm:$0xff]
    %v310 = vld [vmem:[#allocation3 + $0x400] sm:$0xff]
    %v311 = vld [vmem:[#allocation3 + $0x408] sm:$0xff]
    %v312 = vld [vmem:[#allocation3 + $0x410] sm:$0xff]
    %v313 = vld [vmem:[#allocation3 + $0x418] sm:$0xff]
    %v314 = vld [vmem:[#allocation3 + $0x420] sm:$0xff]
    %v315 = vld [vmem:[#allocation3 + $0x428] sm:$0xff]
    %v316 = vld [vmem:[#allocation3 + $0x430] sm:$0xff]
    %v317 = vld [vmem:[#allocation3 + $0x438] sm:$0xff]
    %v318 = vld [vmem:[#allocation3 + $0x440] sm:$0xff]
    %v319 = vld [vmem:[#allocation3 + $0x448] sm:$0xff]
    %v320 = vld [vmem:[#allocation3 + $0x450] sm:$0xff]
    %v321 = vld [vmem:[#allocation3 + $0x458] sm:$0xff]
    %v322 = vld [vmem:[#allocation3 + $0x460] sm:$0xff]
    %v323 = vld [vmem:[#allocation3 + $0x468] sm:$0xff]
    %v324 = vld [vmem:[#allocation3 + $0x470] sm:$0xff]
    %v325 = vld [vmem:[#allocation3 + $0x478] sm:$0xff]
    %v326 = vld [vmem:[#allocation3 + $0x480] sm:$0xff]
    %v327 = vld [vmem:[#allocation3 + $0x488] sm:$0xff]
    %v328 = vld [vmem:[#allocation3 + $0x490] sm:$0xff]
    %v329 = vld [vmem:[#allocation3 + $0x498] sm:$0xff]
    %v330 = vld [vmem:[#allocation3 + $0x4a0] sm:$0xff]
    %v331 = vld [vmem:[#allocation3 + $0x4a8] sm:$0xff]
    %v332 = vld [vmem:[#allocation3 + $0x4b0] sm:$0xff]
    %v333 = vld [vmem:[#allocation3 + $0x4b8] sm:$0xff]
    %v334 = vld [vmem:[#allocation3 + $0x4c0] sm:$0xff]
    %v335 = vld [vmem:[#allocation3 + $0x4c8] sm:$0xff]
    %v336 = vld [vmem:[#allocation3 + $0x4d0] sm:$0xff]
    %v337 = vld [vmem:[#allocation3 + $0x4d8] sm:$0xff]
    %v338 = vld [vmem:[#allocation3 + $0x4e0] sm:$0xff]
    %v339 = vld [vmem:[#allocation3 + $0x4e8] sm:$0xff]
    %v340 = vld [vmem:[#allocation3 + $0x4f0] sm:$0xff]
    %v341 = vld [vmem:[#allocation3 + $0x4f8] sm:$0xff]
    %v342 = vld [vmem:[#allocation3 + $0x500] sm:$0xff]
    %v343 = vld [vmem:[#allocation3 + $0x508] sm:$0xff]
    %v344 = vld [vmem:[#allocation3 + $0x510] sm:$0xff]
    %v345 = vld [vmem:[#allocation3 + $0x518] sm:$0xff]
    %v346 = vld [vmem:[#allocation3 + $0x520] sm:$0xff]
    %v347 = vld [vmem:[#allocation3 + $0x528] sm:$0xff]
    %v348 = vld [vmem:[#allocation3 + $0x530] sm:$0xff]
    %v349 = vld [vmem:[#allocation3 + $0x538] sm:$0xff]
    %v350 = vld [vmem:[#allocation3 + $0x540] sm:$0xff]
    %v351 = vld [vmem:[#allocation3 + $0x548] sm:$0xff]
    %v352 = vld [vmem:[#allocation3 + $0x550] sm:$0xff]
    %v353 = vld [vmem:[#allocation3 + $0x558] sm:$0xff]
    %v354 = vld [vmem:[#allocation3 + $0x560] sm:$0xff]
    %v355 = vld [vmem:[#allocation3 + $0x568] sm:$0xff]
    %v356 = vld [vmem:[#allocation3 + $0x570] sm:$0xff]
    %v357 = vld [vmem:[#allocation3 + $0x578] sm:$0xff]
    %v358 = vld [vmem:[#allocation3 + $0x580] sm:$0xff]
    %v359 = vld [vmem:[#allocation3 + $0x588] sm:$0xff]
    %v360 = vld [vmem:[#allocation3 + $0x590] sm:$0xff]
    %v361 = vld [vmem:[#allocation3 + $0x598] sm:$0xff]
    %v362 = vld [vmem:[#allocation3 + $0x5a0] sm:$0xff]
    %v363 = vld [vmem:[#allocation3 + $0x5a8] sm:$0xff]
    %v364 = vld [vmem:[#allocation3 + $0x5b0] sm:$0xff]
    %v365 = vld [vmem:[#allocation3 + $0x5b8] sm:$0xff]
    %v366 = vld [vmem:[#allocation3 + $0x5c0] sm:$0xff]
    %v367 = vld [vmem:[#allocation3 + $0x5c8] sm:$0xff]
    %v368 = vld [vmem:[#allocation3 + $0x5d0] sm:$0xff]
    %v369 = vld [vmem:[#allocation3 + $0x5d8] sm:$0xff]
    %v370 = vld [vmem:[#allocation3 + $0x5e0] sm:$0xff]
    %v371 = vld [vmem:[#allocation3 + $0x5e8] sm:$0xff]
    %v372 = vld [vmem:[#allocation3 + $0x5f0] sm:$0xff]
    %v373 = vld [vmem:[#allocation3 + $0x5f8] sm:$0xff]
    %v374 = vld [vmem:[#allocation3 + $0x600] sm:$0xff]
    %v375 = vld [vmem:[#allocation3 + $0x608] sm:$0xff]
    %v376 = vld [vmem:[#allocation3 + $0x610] sm:$0xff]
    %v377 = vld [vmem:[#allocation3 + $0x618] sm:$0xff]
    %v378 = vld [vmem:[#allocation3 + $0x620] sm:$0xff]
    %v379 = vld [vmem:[#allocation3 + $0x628] sm:$0xff]
    %v380 = vld [vmem:[#allocation3 + $0x630] sm:$0xff]
    %v381 = vld [vmem:[#allocation3 + $0x638] sm:$0xff]
    %v382 = vld [vmem:[#allocation3 + $0x640] sm:$0xff]
    %v383 = vld [vmem:[#allocation3 + $0x648] sm:$0xff]
    %v384 = vld [vmem:[#allocation3 + $0x650] sm:$0xff]
    %v385 = vld [vmem:[#allocation3 + $0x658] sm:$0xff]
    %v386 = vld [vmem:[#allocation3 + $0x660] sm:$0xff]
    %v387 = vld [vmem:[#allocation3 + $0x668] sm:$0xff]
    %v388 = vld [vmem:[#allocation3 + $0x670] sm:$0xff]
    %v389 = vld [vmem:[#allocation3 + $0x678] sm:$0xff]
    %v390 = vld [vmem:[#allocation3 + $0x680] sm:$0xff]
    %v391 = vld [vmem:[#allocation3 + $0x688] sm:$0xff]
    %v392 = vld [vmem:[#allocation3 + $0x690] sm:$0xff]
    %v393 = vld [vmem:[#allocation3 + $0x698] sm:$0xff]
    %v394 = vld [vmem:[#allocation3 + $0x6a0] sm:$0xff]
    %v395 = vld [vmem:[#allocation3 + $0x6a8] sm:$0xff]
    %v396 = vld [vmem:[#allocation3 + $0x6b0] sm:$0xff]
    %v397 = vld [vmem:[#allocation3 + $0x6b8] sm:$0xff]
    %v398 = vld [vmem:[#allocation3 + $0x6c0] sm:$0xff]
    %v399 = vld [vmem:[#allocation3 + $0x6c8] sm:$0xff]
    %v400 = vld [vmem:[#allocation3 + $0x6d0] sm:$0xff]
    %v401 = vld [vmem:[#allocation3 + $0x6d8] sm:$0xff]
    %v402 = vld [vmem:[#allocation3 + $0x6e0] sm:$0xff]
    %v403 = vld [vmem:[#allocation3 + $0x6e8] sm:$0xff]
    %v404 = vld [vmem:[#allocation3 + $0x6f0] sm:$0xff]
    %v405 = vld [vmem:[#allocation3 + $0x6f8] sm:$0xff]
    %v406 = vld [vmem:[#allocation3 + $0x700] sm:$0xff]
    %v407 = vld [vmem:[#allocation3 + $0x708] sm:$0xff]
    %v408 = vld [vmem:[#allocation3 + $0x710] sm:$0xff]
    %v409 = vld [vmem:[#allocation3 + $0x718] sm:$0xff]
    %v410 = vld [vmem:[#allocation3 + $0x720] sm:$0xff]
    %v411 = vld [vmem:[#allocation3 + $0x728] sm:$0xff]
    %v412 = vld [vmem:[#allocation3 + $0x730] sm:$0xff]
    %v413 = vld [vmem:[#allocation3 + $0x738] sm:$0xff]
    %v414 = vld [vmem:[#allocation3 + $0x740] sm:$0xff]
    %v415 = vld [vmem:[#allocation3 + $0x748] sm:$0xff]
    %v416 = vld [vmem:[#allocation3 + $0x750] sm:$0xff]
    %v417 = vld [vmem:[#allocation3 + $0x758] sm:$0xff]
    %v418 = vld [vmem:[#allocation3 + $0x760] sm:$0xff]
    %v419 = vld [vmem:[#allocation3 + $0x768] sm:$0xff]
    %v420 = vld [vmem:[#allocation3 + $0x770] sm:$0xff]
    %v421 = vld [vmem:[#allocation3 + $0x778] sm:$0xff]
    %v422 = vld [vmem:[#allocation3 + $0x780] sm:$0xff]
    %v423 = vld [vmem:[#allocation3 + $0x788] sm:$0xff]
    %v424 = vld [vmem:[#allocation3 + $0x790] sm:$0xff]
    %v425 = vld [vmem:[#allocation3 + $0x798] sm:$0xff]
    %v426 = vld [vmem:[#allocation3 + $0x7a0] sm:$0xff]
    %v427 = vld [vmem:[#allocation3 + $0x7a8] sm:$0xff]
    %v428 = vld [vmem:[#allocation3 + $0x7b0] sm:$0xff]
    %v429 = vld [vmem:[#allocation3 + $0x7b8] sm:$0xff]
    %v430 = vld [vmem:[#allocation3 + $0x7c0] sm:$0xff]
    %v431 = vld [vmem:[#allocation3 + $0x7c8] sm:$0xff]
    %v432 = vld [vmem:[#allocation3 + $0x7d0] sm:$0xff]
    %v433 = vld [vmem:[#allocation3 + $0x7d8] sm:$0xff]
    %v434 = vld [vmem:[#allocation3 + $0x7e0] sm:$0xff]
    %v435 = vld [vmem:[#allocation3 + $0x7e8] sm:$0xff]
    %v436 = vld [vmem:[#allocation3 + $0x7f0] sm:$0xff]
    %v437 = vld [vmem:[#allocation3 + $0x7f8] sm:$0xff]
    %v438 = vld [vmem:[#allocation3 + $0x800] sm:$0xff]
    %v439 = vld [vmem:[#allocation3 + $0x808] sm:$0xff]
    %v440 = vld [vmem:[#allocation3 + $0x810] sm:$0xff]
    %v441 = vld [vmem:[#allocation3 + $0x818] sm:$0xff]
    %v442 = vld [vmem:[#allocation3 + $0x820] sm:$0xff]
    %v443 = vld [vmem:[#allocation3 + $0x828] sm:$0xff]
    %v444 = vld [vmem:[#allocation3 + $0x830] sm:$0xff]
    %v445 = vld [vmem:[#allocation3 + $0x838] sm:$0xff]
    %v446 = vld [vmem:[#allocation3 + $0x840] sm:$0xff]
    %v447 = vld [vmem:[#allocation3 + $0x848] sm:$0xff]
    %v448 = vld [vmem:[#allocation3 + $0x850] sm:$0xff]
    %v449 = vld [vmem:[#allocation3 + $0x858] sm:$0xff]
    %v450 = vld [vmem:[#allocation3 + $0x860] sm:$0xff]
    %v451 = vld [vmem:[#allocation3 + $0x868] sm:$0xff]
    %v452 = vld [vmem:[#allocation3 + $0x870] sm:$0xff]
    %v453 = vld [vmem:[#allocation3 + $0x878] sm:$0xff]
    %v454 = vld [vmem:[#allocation3 + $0x880] sm:$0xff]
    %v455 = vld [vmem:[#allocation3 + $0x888] sm:$0xff]
    %v456 = vld [vmem:[#allocation3 + $0x890] sm:$0xff]
    %v457 = vld [vmem:[#allocation3 + $0x898] sm:$0xff]
    %v458 = vld [vmem:[#allocation3 + $0x8a0] sm:$0xff]
    %v459 = vld [vmem:[#allocation3 + $0x8a8] sm:$0xff]
    %v460 = vld [vmem:[#allocation3 + $0x8b0] sm:$0xff]
    %v461 = vld [vmem:[#allocation3 + $0x8b8] sm:$0xff]
    %v462 = vld [vmem:[#allocation3 + $0x8c0] sm:$0xff]
    %v463 = vld [vmem:[#allocation3 + $0x8c8] sm:$0xff]
    %v464 = vld [vmem:[#allocation3 + $0x8d0] sm:$0xff]
    %v465 = vld [vmem:[#allocation3 + $0x8d8] sm:$0xff]
    %v466 = vld [vmem:[#allocation3 + $0x8e0] sm:$0xff]
    %v467 = vld [vmem:[#allocation3 + $0x8e8] sm:$0xff]
    %v468 = vld [vmem:[#allocation3 + $0x8f0] sm:$0xff]
    %v469 = vld [vmem:[#allocation3 + $0x8f8] sm:$0xff]
    %v470 = vld [vmem:[#allocation3 + $0x900] sm:$0xff]
    %v471 = vld [vmem:[#allocation3 + $0x908] sm:$0xff]
    %v472 = vld [vmem:[#allocation3 + $0x910] sm:$0xff]
    %v473 = vld [vmem:[#allocation3 + $0x918] sm:$0xff]
    %v474 = vld [vmem:[#allocation3 + $0x920] sm:$0xff]
    %v475 = vld [vmem:[#allocation3 + $0x928] sm:$0xff]
    %v476 = vld [vmem:[#allocation3 + $0x930] sm:$0xff]
    %v477 = vld [vmem:[#allocation3 + $0x938] sm:$0xff]
    %v478 = vld [vmem:[#allocation3 + $0x940] sm:$0xff]
    %v479 = vld [vmem:[#allocation3 + $0x948] sm:$0xff]
    %v480 = vld [vmem:[#allocation3 + $0x950] sm:$0xff]
    %v481 = vld [vmem:[#allocation3 + $0x958] sm:$0xff]
    %v482 = vld [vmem:[#allocation3 + $0x960] sm:$0xff]
    %v483 = vld [vmem:[#allocation3 + $0x968] sm:$0xff]
    %v484 = vld [vmem:[#allocation3 + $0x970] sm:$0xff]
    %v485 = vld [vmem:[#allocation3 + $0x978] sm:$0xff]
    %v486 = vld [vmem:[#allocation3 + $0x980] sm:$0xff]
    %v487 = vld [vmem:[#allocation3 + $0x988] sm:$0xff]
    %v488 = vld [vmem:[#allocation3 + $0x990] sm:$0xff]
    %v489 = vld [vmem:[#allocation3 + $0x998] sm:$0xff]
    %v490 = vld [vmem:[#allocation3 + $0x9a0] sm:$0xff]
    %v491 = vld [vmem:[#allocation3 + $0x9a8] sm:$0xff]
    %v492 = vld [vmem:[#allocation3 + $0x9b0] sm:$0xff]
    %v493 = vld [vmem:[#allocation3 + $0x9b8] sm:$0xff]
    %v494 = vld [vmem:[#allocation3 + $0x9c0] sm:$0xff]
    %v495 = vld [vmem:[#allocation3 + $0x9c8] sm:$0xff]
    %v496 = vld [vmem:[#allocation3 + $0x9d0] sm:$0xff]
    %v497 = vld [vmem:[#allocation3 + $0x9d8] sm:$0xff]
    %v498 = vld [vmem:[#allocation3 + $0x9e0] sm:$0xff]
    %v499 = vld [vmem:[#allocation3 + $0x9e8] sm:$0xff]
    %v500 = vld [vmem:[#allocation3 + $0x9f0] sm:$0xff]
    %v501 = vld [vmem:[#allocation3 + $0x9f8] sm:$0xff]
    %v502 = vld [vmem:[#allocation3 + $0xa00] sm:$0xff]
    %v503 = vld [vmem:[#allocation3 + $0xa08] sm:$0xff]
    %v504 = vld [vmem:[#allocation3 + $0xa10] sm:$0xff]
    %v505 = vld [vmem:[#allocation3 + $0xa18] sm:$0xff]
    %v506 = vld [vmem:[#allocation3 + $0xa20] sm:$0xff]
    %v507 = vld [vmem:[#allocation3 + $0xa28] sm:$0xff]
    %v508 = vld [vmem:[#allocation3 + $0xa30] sm:$0xff]
    %v509 = vld [vmem:[#allocation3 + $0xa38] sm:$0xff]
    %v510 = vld [vmem:[#allocation3 + $0xa40] sm:$0xff]
    %v511 = vld [vmem:[#allocation3 + $0xa48] sm:$0xff]
    %v512 = vld [vmem:[#allocation3 + $0xa50] sm:$0xff]
    %v513 = vld [vmem:[#allocation3 + $0xa58] sm:$0xff]
    %v514 = vld [vmem:[#allocation3 + $0xa60] sm:$0xff]
    %v515 = vld [vmem:[#allocation3 + $0xa68] sm:$0xff]
    %v516 = vld [vmem:[#allocation3 + $0xa70] sm:$0xff]
    %v517 = vld [vmem:[#allocation3 + $0xa78] sm:$0xff]
    %v518 = vld [vmem:[#allocation3 + $0xa80] sm:$0xff]
    %v519 = vld [vmem:[#allocation3 + $0xa88] sm:$0xff]
    %v520 = vld [vmem:[#allocation3 + $0xa90] sm:$0xff]
    %v521 = vld [vmem:[#allocation3 + $0xa98] sm:$0xff]
    %v522 = vld [vmem:[#allocation3 + $0xaa0] sm:$0xff]
    %v523 = vld [vmem:[#allocation3 + $0xaa8] sm:$0xff]
    %v524 = vld [vmem:[#allocation3 + $0xab0] sm:$0xff]
    %v525 = vld [vmem:[#allocation3 + $0xab8] sm:$0xff]
    %v526 = vld [vmem:[#allocation3 + $0xac0] sm:$0xff]
    %v527 = vld [vmem:[#allocation3 + $0xac8] sm:$0xff]
    %v528 = vld [vmem:[#allocation3 + $0xad0] sm:$0xff]
    %v529 = vld [vmem:[#allocation3 + $0xad8] sm:$0xff]
    %v530 = vld [vmem:[#allocation3 + $0xae0] sm:$0xff]
    %v531 = vld [vmem:[#allocation3 + $0xae8] sm:$0xff]
    %v532 = vld [vmem:[#allocation3 + $0xaf0] sm:$0xff]
    %v533 = vld [vmem:[#allocation3 + $0xaf8] sm:$0xff]
    %v534 = vld [vmem:[#allocation3 + $0xb00] sm:$0xff]
    %v535 = vld [vmem:[#allocation3 + $0xb08] sm:$0xff]
    %v536 = vld [vmem:[#allocation3 + $0xb10] sm:$0xff]
    %v537 = vld [vmem:[#allocation3 + $0xb18] sm:$0xff]
    %v538 = vld [vmem:[#allocation3 + $0xb20] sm:$0xff]
    %v539 = vld [vmem:[#allocation3 + $0xb28] sm:$0xff]
    %v540 = vld [vmem:[#allocation3 + $0xb30] sm:$0xff]
    %v541 = vld [vmem:[#allocation3 + $0xb38] sm:$0xff]
    %v542 = vld [vmem:[#allocation3 + $0xb40] sm:$0xff]
    %v543 = vld [vmem:[#allocation3 + $0xb48] sm:$0xff]
    %v544 = vld [vmem:[#allocation3 + $0xb50] sm:$0xff]
    %v545 = vld [vmem:[#allocation3 + $0xb58] sm:$0xff]
    %v546 = vld [vmem:[#allocation3 + $0xb60] sm:$0xff]
    %v547 = vld [vmem:[#allocation3 + $0xb68] sm:$0xff]
    %v548 = vld [vmem:[#allocation3 + $0xb70] sm:$0xff]
    %v549 = vld [vmem:[#allocation3 + $0xb78] sm:$0xff]
    %v550 = vld [vmem:[#allocation3 + $0xb80] sm:$0xff]
    %v551 = vld [vmem:[#allocation3 + $0xb88] sm:$0xff]
    %v552 = vld [vmem:[#allocation3 + $0xb90] sm:$0xff]
    %v553 = vld [vmem:[#allocation3 + $0xb98] sm:$0xff]
    %v554 = vld [vmem:[#allocation3 + $0xba0] sm:$0xff]
    %v555 = vld [vmem:[#allocation3 + $0xba8] sm:$0xff]
    %v556 = vld [vmem:[#allocation3 + $0xbb0] sm:$0xff]
    %v557 = vld [vmem:[#allocation3 + $0xbb8] sm:$0xff]
    %v558 = vld [vmem:[#allocation3 + $0xbc0] sm:$0xff]
    %v559 = vld [vmem:[#allocation3 + $0xbc8] sm:$0xff]
    %v560 = vld [vmem:[#allocation3 + $0xbd0] sm:$0xff]
    %v561 = vld [vmem:[#allocation3 + $0xbd8] sm:$0xff]
    %v562 = vld [vmem:[#allocation3 + $0xbe0] sm:$0xff]
    %v563 = vld [vmem:[#allocation3 + $0xbe8] sm:$0xff]
    %v564 = vld [vmem:[#allocation3 + $0xbf0] sm:$0xff]
    %v565 = vld [vmem:[#allocation3 + $0xbf8] sm:$0xff]
    %v566 = vld [vmem:[#allocation3 + $0xc00] sm:$0xff]
    %v567 = vld [vmem:[#allocation3 + $0xc08] sm:$0xff]
    %v568 = vld [vmem:[#allocation3 + $0xc10] sm:$0xff]
    %v569 = vld [vmem:[#allocation3 + $0xc18] sm:$0xff]
    %v570 = vld [vmem:[#allocation3 + $0xc20] sm:$0xff]
    %v571 = vld [vmem:[#allocation3 + $0xc28] sm:$0xff]
    %v572 = vld [vmem:[#allocation3 + $0xc30] sm:$0xff]
    %v573 = vld [vmem:[#allocation3 + $0xc38] sm:$0xff]
    %v574 = vld [vmem:[#allocation3 + $0xc40] sm:$0xff]
    %v575 = vld [vmem:[#allocation3 + $0xc48] sm:$0xff]
    %v576 = vld [vmem:[#allocation3 + $0xc50] sm:$0xff]
    %v577 = vld [vmem:[#allocation3 + $0xc58] sm:$0xff]
    %v578 = vld [vmem:[#allocation3 + $0xc60] sm:$0xff]
    %v579 = vld [vmem:[#allocation3 + $0xc68] sm:$0xff]
    %v580 = vld [vmem:[#allocation3 + $0xc70] sm:$0xff]
    %v581 = vld [vmem:[#allocation3 + $0xc78] sm:$0xff]
    %v582 = vld [vmem:[#allocation3 + $0xc80] sm:$0xff]
    %v583 = vld [vmem:[#allocation3 + $0xc88] sm:$0xff]
    %v584 = vld [vmem:[#allocation3 + $0xc90] sm:$0xff]
    %v585 = vld [vmem:[#allocation3 + $0xc98] sm:$0xff]
    %v586 = vld [vmem:[#allocation3 + $0xca0] sm:$0xff]
    %v587 = vld [vmem:[#allocation3 + $0xca8] sm:$0xff]
    %v588 = vld [vmem:[#allocation3 + $0xcb0] sm:$0xff]
    %v589 = vld [vmem:[#allocation3 + $0xcb8] sm:$0xff]
    %v590 = vld [vmem:[#allocation3 + $0xcc0] sm:$0xff]
    %v591 = vld [vmem:[#allocation3 + $0xcc8] sm:$0xff]
    %v592 = vld [vmem:[#allocation3 + $0xcd0] sm:$0xff]
    %v593 = vld [vmem:[#allocation3 + $0xcd8] sm:$0xff]
    %v594 = vld [vmem:[#allocation3 + $0xce0] sm:$0xff]
    %v595 = vld [vmem:[#allocation3 + $0xce8] sm:$0xff]
    %v596 = vld [vmem:[#allocation3 + $0xcf0] sm:$0xff]
    %v597 = vld [vmem:[#allocation3 + $0xcf8] sm:$0xff]
    %v598 = vld [vmem:[#allocation3 + $0xd00] sm:$0xff]
    %v599 = vld [vmem:[#allocation3 + $0xd08] sm:$0xff]
    %v600 = vld [vmem:[#allocation3 + $0xd10] sm:$0xff]
    %v601 = vld [vmem:[#allocation3 + $0xd18] sm:$0xff]
    %v602 = vld [vmem:[#allocation3 + $0xd20] sm:$0xff]
    %v603 = vld [vmem:[#allocation3 + $0xd28] sm:$0xff]
    %v604 = vld [vmem:[#allocation3 + $0xd30] sm:$0xff]
    %v605 = vld [vmem:[#allocation3 + $0xd38] sm:$0xff]
    %v606 = vld [vmem:[#allocation3 + $0xd40] sm:$0xff]
    %v607 = vld [vmem:[#allocation3 + $0xd48] sm:$0xff]
    %v608 = vld [vmem:[#allocation3 + $0xd50] sm:$0xff]
    %v609 = vld [vmem:[#allocation3 + $0xd58] sm:$0xff]
    %v610 = vld [vmem:[#allocation3 + $0xd60] sm:$0xff]
    %v611 = vld [vmem:[#allocation3 + $0xd68] sm:$0xff]
    %v612 = vld [vmem:[#allocation3 + $0xd70] sm:$0xff]
    %v613 = vld [vmem:[#allocation3 + $0xd78] sm:$0xff]
    %v614 = vld [vmem:[#allocation3 + $0xd80] sm:$0xff]
    %v615 = vld [vmem:[#allocation3 + $0xd88] sm:$0xff]
    %v616 = vld [vmem:[#allocation3 + $0xd90] sm:$0xff]
    %v617 = vld [vmem:[#allocation3 + $0xd98] sm:$0xff]
    %v618 = vld [vmem:[#allocation3 + $0xda0] sm:$0xff]
    %v619 = vld [vmem:[#allocation3 + $0xda8] sm:$0xff]
    %v620 = vld [vmem:[#allocation3 + $0xdb0] sm:$0xff]
    %v621 = vld [vmem:[#allocation3 + $0xdb8] sm:$0xff]
    %v622 = vld [vmem:[#allocation3 + $0xdc0] sm:$0xff]
    %v623 = vld [vmem:[#allocation3 + $0xdc8] sm:$0xff]
    %v624 = vld [vmem:[#allocation3 + $0xdd0] sm:$0xff]
    %v625 = vld [vmem:[#allocation3 + $0xdd8] sm:$0xff]
    %v626 = vld [vmem:[#allocation3 + $0xde0] sm:$0xff]
    %v627 = vld [vmem:[#allocation3 + $0xde8] sm:$0xff]
    %v628 = vld [vmem:[#allocation3 + $0xdf0] sm:$0xff]
    %v629 = vld [vmem:[#allocation3 + $0xdf8] sm:$0xff]
    %v630 = vld [vmem:[#allocation5] sm:$0xff]
    %v632 = vlaneseq
    %v633 = vshrl.u32 %v632, 7
    %v634 = vsub.s32 0, %v633
    %v635 = vrot.slane %v630, %v634
    %v636 = vlaneseq
    %v637 = vshrl.u32 %v636, 7
    %v638 = vsub.s32 1, %v637
    %v639 = vrot.slane %v630, %v638
    %v640 = vlaneseq
    %v641 = vshrl.u32 %v640, 7
    %v642 = vsub.s32 2, %v641
    %v643 = vrot.slane %v630, %v642
    %v644 = vlaneseq
    %v645 = vshrl.u32 %v644, 7
    %v646 = vsub.s32 3, %v645
    %v647 = vrot.slane %v630, %v646
    %v648 = vlaneseq
    %v649 = vshrl.u32 %v648, 7
    %v650 = vsub.s32 4, %v649
    %v651 = vrot.slane %v630, %v650
    %v652 = vlaneseq
    %v653 = vshrl.u32 %v652, 7
    %v654 = vsub.s32 5, %v653
    %v655 = vrot.slane %v630, %v654
    %v656 = vlaneseq
    %v657 = vshrl.u32 %v656, 7
    %v658 = vsub.s32 6, %v657
    %v659 = vrot.slane %v630, %v658
    %v660 = vlaneseq
    %v661 = vshrl.u32 %v660, 7
    %v662 = vsub.s32 7, %v661
    %v663 = vrot.slane %v630, %v662
    %v1120 = vunpack.c.l.b16 %v182
    %v1121 = vunpack.c.h.b16 %v182
    %v1122 = vunpack.c.l.b16 %v183
    %v1123 = vunpack.c.h.b16 %v183
    %v1124 = vunpack.c.l.b16 %v184
    %v1125 = vunpack.c.h.b16 %v184
    %v1126 = vunpack.c.l.b16 %v185
    %v1127 = vunpack.c.h.b16 %v185
    %v1128 = vunpack.c.l.b16 %v186
    %v1129 = vunpack.c.h.b16 %v186
    %v1130 = vunpack.c.l.b16 %v187
    %v1131 = vunpack.c.h.b16 %v187
    %v1132 = vunpack.c.l.b16 %v188
    %v1133 = vunpack.c.h.b16 %v188
    %v1134 = vunpack.c.l.b16 %v189
    %v1135 = vunpack.c.h.b16 %v189
    %v1136 = vunpack.c.l.b16 %v190
    %v1137 = vunpack.c.h.b16 %v190
    %v1138 = vunpack.c.l.b16 %v191
    %v1139 = vunpack.c.h.b16 %v191
    %v1140 = vunpack.c.l.b16 %v192
    %v1141 = vunpack.c.h.b16 %v192
    %v1142 = vunpack.c.l.b16 %v193
    %v1143 = vunpack.c.h.b16 %v193
    %v1144 = vunpack.c.l.b16 %v194
    %v1145 = vunpack.c.h.b16 %v194
    %v1146 = vunpack.c.l.b16 %v195
    %v1147 = vunpack.c.h.b16 %v195
    %v1148 = vunpack.c.l.b16 %v196
    %v1149 = vunpack.c.h.b16 %v196
    %v1150 = vunpack.c.l.b16 %v197
    %v1151 = vunpack.c.h.b16 %v197
    %v1152 = vunpack.c.l.b16 %v198
    %v1153 = vunpack.c.h.b16 %v198
    %v1154 = vunpack.c.l.b16 %v199
    %v1155 = vunpack.c.h.b16 %v199
    %v1156 = vunpack.c.l.b16 %v200
    %v1157 = vunpack.c.h.b16 %v200
    %v1158 = vunpack.c.l.b16 %v201
    %v1159 = vunpack.c.h.b16 %v201
    %v1160 = vunpack.c.l.b16 %v202
    %v1161 = vunpack.c.h.b16 %v202
    %v1162 = vunpack.c.l.b16 %v203
    %v1163 = vunpack.c.h.b16 %v203
    %v1164 = vunpack.c.l.b16 %v204
    %v1165 = vunpack.c.h.b16 %v204
    %v1166 = vunpack.c.l.b16 %v205
    %v1167 = vunpack.c.h.b16 %v205
    %v1168 = vunpack.c.l.b16 %v206
    %v1169 = vunpack.c.h.b16 %v206
    %v1170 = vunpack.c.l.b16 %v207
    %v1171 = vunpack.c.h.b16 %v207
    %v1172 = vunpack.c.l.b16 %v208
    %v1173 = vunpack.c.h.b16 %v208
    %v1174 = vunpack.c.l.b16 %v209
    %v1175 = vunpack.c.h.b16 %v209
    %v1176 = vunpack.c.l.b16 %v210
    %v1177 = vunpack.c.h.b16 %v210
    %v1178 = vunpack.c.l.b16 %v211
    %v1179 = vunpack.c.h.b16 %v211
    %v1180 = vunpack.c.l.b16 %v212
    %v1181 = vunpack.c.h.b16 %v212
    %v1182 = vunpack.c.l.b16 %v213
    %v1183 = vunpack.c.h.b16 %v213
    %v1184 = vunpack.c.l.b16 %v214
    %v1185 = vunpack.c.h.b16 %v214
    %v1186 = vunpack.c.l.b16 %v215
    %v1187 = vunpack.c.h.b16 %v215
    %v1188 = vunpack.c.l.b16 %v216
    %v1189 = vunpack.c.h.b16 %v216
    %v1190 = vunpack.c.l.b16 %v217
    %v1191 = vunpack.c.h.b16 %v217
    %v1192 = vunpack.c.l.b16 %v218
    %v1193 = vunpack.c.h.b16 %v218
    %v1194 = vunpack.c.l.b16 %v219
    %v1195 = vunpack.c.h.b16 %v219
    %v1196 = vunpack.c.l.b16 %v220
    %v1197 = vunpack.c.h.b16 %v220
    %v1198 = vunpack.c.l.b16 %v221
    %v1199 = vunpack.c.h.b16 %v221
    %v1200 = vunpack.c.l.b16 %v222
    %v1201 = vunpack.c.h.b16 %v222
    %v1202 = vunpack.c.l.b16 %v223
    %v1203 = vunpack.c.h.b16 %v223
    %v1204 = vunpack.c.l.b16 %v224
    %v1205 = vunpack.c.h.b16 %v224
    %v1206 = vunpack.c.l.b16 %v225
    %v1207 = vunpack.c.h.b16 %v225
    %v1208 = vunpack.c.l.b16 %v226
    %v1209 = vunpack.c.h.b16 %v226
    %v1210 = vunpack.c.l.b16 %v227
    %v1211 = vunpack.c.h.b16 %v227
    %v1212 = vunpack.c.l.b16 %v228
    %v1213 = vunpack.c.h.b16 %v228
    %v1214 = vunpack.c.l.b16 %v229
    %v1215 = vunpack.c.h.b16 %v229
    %v1216 = vunpack.c.l.b16 %v230
    %v1217 = vunpack.c.h.b16 %v230
    %v1218 = vunpack.c.l.b16 %v231
    %v1219 = vunpack.c.h.b16 %v231
    %v1220 = vunpack.c.l.b16 %v232
    %v1221 = vunpack.c.h.b16 %v232
    %v1222 = vunpack.c.l.b16 %v233
    %v1223 = vunpack.c.h.b16 %v233
    %v1224 = vunpack.c.l.b16 %v234
    %v1225 = vunpack.c.h.b16 %v234
    %v1226 = vunpack.c.l.b16 %v235
    %v1227 = vunpack.c.h.b16 %v235
    %v1228 = vunpack.c.l.b16 %v236
    %v1229 = vunpack.c.h.b16 %v236
    %v1230 = vunpack.c.l.b16 %v237
    %v1231 = vunpack.c.h.b16 %v237
    %v1232 = vunpack.c.l.b16 %v238
    %v1233 = vunpack.c.h.b16 %v238
    %v1234 = vunpack.c.l.b16 %v239
    %v1235 = vunpack.c.h.b16 %v239
    %v1236 = vunpack.c.l.b16 %v240
    %v1237 = vunpack.c.h.b16 %v240
    %v1238 = vunpack.c.l.b16 %v241
    %v1239 = vunpack.c.h.b16 %v241
    %v1240 = vunpack.c.l.b16 %v242
    %v1241 = vunpack.c.h.b16 %v242
    %v1242 = vunpack.c.l.b16 %v243
    %v1243 = vunpack.c.h.b16 %v243
    %v1244 = vunpack.c.l.b16 %v244
    %v1245 = vunpack.c.h.b16 %v244
    %v1246 = vunpack.c.l.b16 %v245
    %v1247 = vunpack.c.h.b16 %v245
    %v1248 = vunpack.c.l.b16 %v246
    %v1249 = vunpack.c.h.b16 %v246
    %v1250 = vunpack.c.l.b16 %v247
    %v1251 = vunpack.c.h.b16 %v247
    %v1252 = vunpack.c.l.b16 %v248
    %v1253 = vunpack.c.h.b16 %v248
    %v1254 = vunpack.c.l.b16 %v249
    %v1255 = vunpack.c.h.b16 %v249
    %v1256 = vunpack.c.l.b16 %v250
    %v1257 = vunpack.c.h.b16 %v250
    %v1258 = vunpack.c.l.b16 %v251
    %v1259 = vunpack.c.h.b16 %v251
    %v1260 = vunpack.c.l.b16 %v252
    %v1261 = vunpack.c.h.b16 %v252
    %v1262 = vunpack.c.l.b16 %v253
    %v1263 = vunpack.c.h.b16 %v253
    %v1264 = vunpack.c.l.b16 %v254
    %v1265 = vunpack.c.h.b16 %v254
    %v1266 = vunpack.c.l.b16 %v255
    %v1267 = vunpack.c.h.b16 %v255
    %v1268 = vunpack.c.l.b16 %v256
    %v1269 = vunpack.c.h.b16 %v256
    %v1270 = vunpack.c.l.b16 %v257
    %v1271 = vunpack.c.h.b16 %v257
    %v1272 = vunpack.c.l.b16 %v258
    %v1273 = vunpack.c.h.b16 %v258
    %v1274 = vunpack.c.l.b16 %v259
    %v1275 = vunpack.c.h.b16 %v259
    %v1276 = vunpack.c.l.b16 %v260
    %v1277 = vunpack.c.h.b16 %v260
    %v1278 = vunpack.c.l.b16 %v261
    %v1279 = vunpack.c.h.b16 %v261
    %v1280 = vunpack.c.l.b16 %v262
    %v1281 = vunpack.c.h.b16 %v262
    %v1282 = vunpack.c.l.b16 %v263
    %v1283 = vunpack.c.h.b16 %v263
    %v1284 = vunpack.c.l.b16 %v264
    %v1285 = vunpack.c.h.b16 %v264
    %v1286 = vunpack.c.l.b16 %v265
    %v1287 = vunpack.c.h.b16 %v265
    %v1288 = vunpack.c.l.b16 %v266
    %v1289 = vunpack.c.h.b16 %v266
    %v1290 = vunpack.c.l.b16 %v267
    %v1291 = vunpack.c.h.b16 %v267
    %v1292 = vunpack.c.l.b16 %v268
    %v1293 = vunpack.c.h.b16 %v268
    %v1294 = vunpack.c.l.b16 %v269
    %v1295 = vunpack.c.h.b16 %v269
    %v1296 = vunpack.c.l.b16 %v270
    %v1297 = vunpack.c.h.b16 %v270
    %v1298 = vunpack.c.l.b16 %v271
    %v1299 = vunpack.c.h.b16 %v271
    %v1300 = vunpack.c.l.b16 %v272
    %v1301 = vunpack.c.h.b16 %v272
    %v1302 = vunpack.c.l.b16 %v273
    %v1303 = vunpack.c.h.b16 %v273
    %v1304 = vunpack.c.l.b16 %v274
    %v1305 = vunpack.c.h.b16 %v274
    %v1306 = vunpack.c.l.b16 %v275
    %v1307 = vunpack.c.h.b16 %v275
    %v1308 = vunpack.c.l.b16 %v276
    %v1309 = vunpack.c.h.b16 %v276
    %v1310 = vunpack.c.l.b16 %v277
    %v1311 = vunpack.c.h.b16 %v277
    %v1312 = vunpack.c.l.b16 %v278
    %v1313 = vunpack.c.h.b16 %v278
    %v1314 = vunpack.c.l.b16 %v279
    %v1315 = vunpack.c.h.b16 %v279
    %v1316 = vunpack.c.l.b16 %v280
    %v1317 = vunpack.c.h.b16 %v280
    %v1318 = vunpack.c.l.b16 %v281
    %v1319 = vunpack.c.h.b16 %v281
    %v1320 = vunpack.c.l.b16 %v282
    %v1321 = vunpack.c.h.b16 %v282
    %v1322 = vunpack.c.l.b16 %v283
    %v1323 = vunpack.c.h.b16 %v283
    %v1324 = vunpack.c.l.b16 %v284
    %v1325 = vunpack.c.h.b16 %v284
    %v1326 = vunpack.c.l.b16 %v285
    %v1327 = vunpack.c.h.b16 %v285
    %v1328 = vunpack.c.l.b16 %v286
    %v1329 = vunpack.c.h.b16 %v286
    %v1330 = vunpack.c.l.b16 %v287
    %v1331 = vunpack.c.h.b16 %v287
    %v1332 = vunpack.c.l.b16 %v288
    %v1333 = vunpack.c.h.b16 %v288
    %v1334 = vunpack.c.l.b16 %v289
    %v1335 = vunpack.c.h.b16 %v289
    %v1336 = vunpack.c.l.b16 %v290
    %v1337 = vunpack.c.h.b16 %v290
    %v1338 = vunpack.c.l.b16 %v291
    %v1339 = vunpack.c.h.b16 %v291
    %v1340 = vunpack.c.l.b16 %v292
    %v1341 = vunpack.c.h.b16 %v292
    %v1342 = vunpack.c.l.b16 %v293
    %v1343 = vunpack.c.h.b16 %v293
    %v1344 = vunpack.c.l.b16 %v294
    %v1345 = vunpack.c.h.b16 %v294
    %v1346 = vunpack.c.l.b16 %v295
    %v1347 = vunpack.c.h.b16 %v295
    %v1348 = vunpack.c.l.b16 %v296
    %v1349 = vunpack.c.h.b16 %v296
    %v1350 = vunpack.c.l.b16 %v297
    %v1351 = vunpack.c.h.b16 %v297
    %v1352 = vunpack.c.l.b16 %v298
    %v1353 = vunpack.c.h.b16 %v298
    %v1354 = vunpack.c.l.b16 %v299
    %v1355 = vunpack.c.h.b16 %v299
    %v1356 = vunpack.c.l.b16 %v300
    %v1357 = vunpack.c.h.b16 %v300
    %v1358 = vunpack.c.l.b16 %v301
    %v1359 = vunpack.c.h.b16 %v301
    %v1360 = vunpack.c.l.b16 %v302
    %v1361 = vunpack.c.h.b16 %v302
    %v1362 = vunpack.c.l.b16 %v303
    %v1363 = vunpack.c.h.b16 %v303
    %v1364 = vunpack.c.l.b16 %v304
    %v1365 = vunpack.c.h.b16 %v304
    %v1366 = vunpack.c.l.b16 %v305
    %v1367 = vunpack.c.h.b16 %v305
    %v1368 = vunpack.c.l.b16 %v306
    %v1369 = vunpack.c.h.b16 %v306
    %v1370 = vunpack.c.l.b16 %v307
    %v1371 = vunpack.c.h.b16 %v307
    %v1372 = vunpack.c.l.b16 %v308
    %v1373 = vunpack.c.h.b16 %v308
    %v1374 = vunpack.c.l.b16 %v309
    %v1375 = vunpack.c.h.b16 %v309
    %v1376 = vunpack.c.l.b16 %v310
    %v1377 = vunpack.c.h.b16 %v310
    %v1378 = vunpack.c.l.b16 %v311
    %v1379 = vunpack.c.h.b16 %v311
    %v1380 = vunpack.c.l.b16 %v312
    %v1381 = vunpack.c.h.b16 %v312
    %v1382 = vunpack.c.l.b16 %v313
    %v1383 = vunpack.c.h.b16 %v313
    %v1384 = vunpack.c.l.b16 %v314
    %v1385 = vunpack.c.h.b16 %v314
    %v1386 = vunpack.c.l.b16 %v315
    %v1387 = vunpack.c.h.b16 %v315
    %v1388 = vunpack.c.l.b16 %v316
    %v1389 = vunpack.c.h.b16 %v316
    %v1390 = vunpack.c.l.b16 %v317
    %v1391 = vunpack.c.h.b16 %v317
    %v1392 = vunpack.c.l.b16 %v318
    %v1393 = vunpack.c.h.b16 %v318
    %v1394 = vunpack.c.l.b16 %v319
    %v1395 = vunpack.c.h.b16 %v319
    %v1396 = vunpack.c.l.b16 %v320
    %v1397 = vunpack.c.h.b16 %v320
    %v1398 = vunpack.c.l.b16 %v321
    %v1399 = vunpack.c.h.b16 %v321
    %v1400 = vunpack.c.l.b16 %v322
    %v1401 = vunpack.c.h.b16 %v322
    %v1402 = vunpack.c.l.b16 %v323
    %v1403 = vunpack.c.h.b16 %v323
    %v1404 = vunpack.c.l.b16 %v324
    %v1405 = vunpack.c.h.b16 %v324
    %v1406 = vunpack.c.l.b16 %v325
    %v1407 = vunpack.c.h.b16 %v325
    %v1408 = vunpack.c.l.b16 %v326
    %v1409 = vunpack.c.h.b16 %v326
    %v1410 = vunpack.c.l.b16 %v327
    %v1411 = vunpack.c.h.b16 %v327
    %v1412 = vunpack.c.l.b16 %v328
    %v1413 = vunpack.c.h.b16 %v328
    %v1414 = vunpack.c.l.b16 %v329
    %v1415 = vunpack.c.h.b16 %v329
    %v1416 = vunpack.c.l.b16 %v330
    %v1417 = vunpack.c.h.b16 %v330
    %v1418 = vunpack.c.l.b16 %v331
    %v1419 = vunpack.c.h.b16 %v331
    %v1420 = vunpack.c.l.b16 %v332
    %v1421 = vunpack.c.h.b16 %v332
    %v1422 = vunpack.c.l.b16 %v333
    %v1423 = vunpack.c.h.b16 %v333
    %v1424 = vunpack.c.l.b16 %v334
    %v1425 = vunpack.c.h.b16 %v334
    %v1426 = vunpack.c.l.b16 %v335
    %v1427 = vunpack.c.h.b16 %v335
    %v1428 = vunpack.c.l.b16 %v336
    %v1429 = vunpack.c.h.b16 %v336
    %v1430 = vunpack.c.l.b16 %v337
    %v1431 = vunpack.c.h.b16 %v337
    %v1432 = vunpack.c.l.b16 %v338
    %v1433 = vunpack.c.h.b16 %v338
    %v1434 = vunpack.c.l.b16 %v339
    %v1435 = vunpack.c.h.b16 %v339
    %v1436 = vunpack.c.l.b16 %v340
    %v1437 = vunpack.c.h.b16 %v340
    %v1438 = vunpack.c.l.b16 %v341
    %v1439 = vunpack.c.h.b16 %v341
    %v1440 = vunpack.c.l.b16 %v342
    %v1441 = vunpack.c.h.b16 %v342
    %v1442 = vunpack.c.l.b16 %v343
    %v1443 = vunpack.c.h.b16 %v343
    %v1444 = vunpack.c.l.b16 %v344
    %v1445 = vunpack.c.h.b16 %v344
    %v1446 = vunpack.c.l.b16 %v345
    %v1447 = vunpack.c.h.b16 %v345
    %v1448 = vunpack.c.l.b16 %v346
    %v1449 = vunpack.c.h.b16 %v346
    %v1450 = vunpack.c.l.b16 %v347
    %v1451 = vunpack.c.h.b16 %v347
    %v1452 = vunpack.c.l.b16 %v348
    %v1453 = vunpack.c.h.b16 %v348
    %v1454 = vunpack.c.l.b16 %v349
    %v1455 = vunpack.c.h.b16 %v349
    %v1456 = vunpack.c.l.b16 %v350
    %v1457 = vunpack.c.h.b16 %v350
    %v1458 = vunpack.c.l.b16 %v351
    %v1459 = vunpack.c.h.b16 %v351
    %v1460 = vunpack.c.l.b16 %v352
    %v1461 = vunpack.c.h.b16 %v352
    %v1462 = vunpack.c.l.b16 %v353
    %v1463 = vunpack.c.h.b16 %v353
    %v1464 = vunpack.c.l.b16 %v354
    %v1465 = vunpack.c.h.b16 %v354
    %v1466 = vunpack.c.l.b16 %v355
    %v1467 = vunpack.c.h.b16 %v355
    %v1468 = vunpack.c.l.b16 %v356
    %v1469 = vunpack.c.h.b16 %v356
    %v1470 = vunpack.c.l.b16 %v357
    %v1471 = vunpack.c.h.b16 %v357
    %v1472 = vunpack.c.l.b16 %v358
    %v1473 = vunpack.c.h.b16 %v358
    %v1474 = vunpack.c.l.b16 %v359
    %v1475 = vunpack.c.h.b16 %v359
    %v1476 = vunpack.c.l.b16 %v360
    %v1477 = vunpack.c.h.b16 %v360
    %v1478 = vunpack.c.l.b16 %v361
    %v1479 = vunpack.c.h.b16 %v361
    %v1480 = vunpack.c.l.b16 %v362
    %v1481 = vunpack.c.h.b16 %v362
    %v1482 = vunpack.c.l.b16 %v363
    %v1483 = vunpack.c.h.b16 %v363
    %v1484 = vunpack.c.l.b16 %v364
    %v1485 = vunpack.c.h.b16 %v364
    %v1486 = vunpack.c.l.b16 %v365
    %v1487 = vunpack.c.h.b16 %v365
    %v1488 = vunpack.c.l.b16 %v366
    %v1489 = vunpack.c.h.b16 %v366
    %v1490 = vunpack.c.l.b16 %v367
    %v1491 = vunpack.c.h.b16 %v367
    %v1492 = vunpack.c.l.b16 %v368
    %v1493 = vunpack.c.h.b16 %v368
    %v1494 = vunpack.c.l.b16 %v369
    %v1495 = vunpack.c.h.b16 %v369
    %v1496 = vunpack.c.l.b16 %v370
    %v1497 = vunpack.c.h.b16 %v370
    %v1498 = vunpack.c.l.b16 %v371
    %v1499 = vunpack.c.h.b16 %v371
    %v1500 = vunpack.c.l.b16 %v372
    %v1501 = vunpack.c.h.b16 %v372
    %v1502 = vunpack.c.l.b16 %v373
    %v1503 = vunpack.c.h.b16 %v373
    %v1504 = vunpack.c.l.b16 %v374
    %v1505 = vunpack.c.h.b16 %v374
    %v1506 = vunpack.c.l.b16 %v375
    %v1507 = vunpack.c.h.b16 %v375
    %v1508 = vunpack.c.l.b16 %v376
    %v1509 = vunpack.c.h.b16 %v376
    %v1510 = vunpack.c.l.b16 %v377
    %v1511 = vunpack.c.h.b16 %v377
    %v1512 = vunpack.c.l.b16 %v378
    %v1513 = vunpack.c.h.b16 %v378
    %v1514 = vunpack.c.l.b16 %v379
    %v1515 = vunpack.c.h.b16 %v379
    %v1516 = vunpack.c.l.b16 %v380
    %v1517 = vunpack.c.h.b16 %v380
    %v1518 = vunpack.c.l.b16 %v381
    %v1519 = vunpack.c.h.b16 %v381
    %v1520 = vunpack.c.l.b16 %v382
    %v1521 = vunpack.c.h.b16 %v382
    %v1522 = vunpack.c.l.b16 %v383
    %v1523 = vunpack.c.h.b16 %v383
    %v1524 = vunpack.c.l.b16 %v384
    %v1525 = vunpack.c.h.b16 %v384
    %v1526 = vunpack.c.l.b16 %v385
    %v1527 = vunpack.c.h.b16 %v385
    %v1528 = vunpack.c.l.b16 %v386
    %v1529 = vunpack.c.h.b16 %v386
    %v1530 = vunpack.c.l.b16 %v387
    %v1531 = vunpack.c.h.b16 %v387
    %v1532 = vunpack.c.l.b16 %v388
    %v1533 = vunpack.c.h.b16 %v388
    %v1534 = vunpack.c.l.b16 %v389
    %v1535 = vunpack.c.h.b16 %v389
    %v1536 = vunpack.c.l.b16 %v390
    %v1537 = vunpack.c.h.b16 %v390
    %v1538 = vunpack.c.l.b16 %v391
    %v1539 = vunpack.c.h.b16 %v391
    %v1540 = vunpack.c.l.b16 %v392
    %v1541 = vunpack.c.h.b16 %v392
    %v1542 = vunpack.c.l.b16 %v393
    %v1543 = vunpack.c.h.b16 %v393
    %v1544 = vunpack.c.l.b16 %v394
    %v1545 = vunpack.c.h.b16 %v394
    %v1546 = vunpack.c.l.b16 %v395
    %v1547 = vunpack.c.h.b16 %v395
    %v1548 = vunpack.c.l.b16 %v396
    %v1549 = vunpack.c.h.b16 %v396
    %v1550 = vunpack.c.l.b16 %v397
    %v1551 = vunpack.c.h.b16 %v397
    %v1552 = vunpack.c.l.b16 %v398
    %v1553 = vunpack.c.h.b16 %v398
    %v1554 = vunpack.c.l.b16 %v399
    %v1555 = vunpack.c.h.b16 %v399
    %v1556 = vunpack.c.l.b16 %v400
    %v1557 = vunpack.c.h.b16 %v400
    %v1558 = vunpack.c.l.b16 %v401
    %v1559 = vunpack.c.h.b16 %v401
    %v1560 = vunpack.c.l.b16 %v402
    %v1561 = vunpack.c.h.b16 %v402
    %v1562 = vunpack.c.l.b16 %v403
    %v1563 = vunpack.c.h.b16 %v403
    %v1564 = vunpack.c.l.b16 %v404
    %v1565 = vunpack.c.h.b16 %v404
    %v1566 = vunpack.c.l.b16 %v405
    %v1567 = vunpack.c.h.b16 %v405
    %v1568 = vunpack.c.l.b16 %v406
    %v1569 = vunpack.c.h.b16 %v406
    %v1570 = vunpack.c.l.b16 %v407
    %v1571 = vunpack.c.h.b16 %v407
    %v1572 = vunpack.c.l.b16 %v408
    %v1573 = vunpack.c.h.b16 %v408
    %v1574 = vunpack.c.l.b16 %v409
    %v1575 = vunpack.c.h.b16 %v409
    %v1576 = vunpack.c.l.b16 %v410
    %v1577 = vunpack.c.h.b16 %v410
    %v1578 = vunpack.c.l.b16 %v411
    %v1579 = vunpack.c.h.b16 %v411
    %v1580 = vunpack.c.l.b16 %v412
    %v1581 = vunpack.c.h.b16 %v412
    %v1582 = vunpack.c.l.b16 %v413
    %v1583 = vunpack.c.h.b16 %v413
    %v1584 = vunpack.c.l.b16 %v414
    %v1585 = vunpack.c.h.b16 %v414
    %v1586 = vunpack.c.l.b16 %v415
    %v1587 = vunpack.c.h.b16 %v415
    %v1588 = vunpack.c.l.b16 %v416
    %v1589 = vunpack.c.h.b16 %v416
    %v1590 = vunpack.c.l.b16 %v417
    %v1591 = vunpack.c.h.b16 %v417
    %v1592 = vunpack.c.l.b16 %v418
    %v1593 = vunpack.c.h.b16 %v418
    %v1594 = vunpack.c.l.b16 %v419
    %v1595 = vunpack.c.h.b16 %v419
    %v1596 = vunpack.c.l.b16 %v420
    %v1597 = vunpack.c.h.b16 %v420
    %v1598 = vunpack.c.l.b16 %v421
    %v1599 = vunpack.c.h.b16 %v421
    %v1600 = vunpack.c.l.b16 %v422
    %v1601 = vunpack.c.h.b16 %v422
    %v1602 = vunpack.c.l.b16 %v423
    %v1603 = vunpack.c.h.b16 %v423
    %v1604 = vunpack.c.l.b16 %v424
    %v1605 = vunpack.c.h.b16 %v424
    %v1606 = vunpack.c.l.b16 %v425
    %v1607 = vunpack.c.h.b16 %v425
    %v1608 = vunpack.c.l.b16 %v426
    %v1609 = vunpack.c.h.b16 %v426
    %v1610 = vunpack.c.l.b16 %v427
    %v1611 = vunpack.c.h.b16 %v427
    %v1612 = vunpack.c.l.b16 %v428
    %v1613 = vunpack.c.h.b16 %v428
    %v1614 = vunpack.c.l.b16 %v429
    %v1615 = vunpack.c.h.b16 %v429
    %v1616 = vunpack.c.l.b16 %v430
    %v1617 = vunpack.c.h.b16 %v430
    %v1618 = vunpack.c.l.b16 %v431
    %v1619 = vunpack.c.h.b16 %v431
    %v1620 = vunpack.c.l.b16 %v432
    %v1621 = vunpack.c.h.b16 %v432
    %v1622 = vunpack.c.l.b16 %v433
    %v1623 = vunpack.c.h.b16 %v433
    %v1624 = vunpack.c.l.b16 %v434
    %v1625 = vunpack.c.h.b16 %v434
    %v1626 = vunpack.c.l.b16 %v435
    %v1627 = vunpack.c.h.b16 %v435
    %v1628 = vunpack.c.l.b16 %v436
    %v1629 = vunpack.c.h.b16 %v436
    %v1630 = vunpack.c.l.b16 %v437
    %v1631 = vunpack.c.h.b16 %v437
    %v1632 = vunpack.c.l.b16 %v438
    %v1633 = vunpack.c.h.b16 %v438
    %v1634 = vunpack.c.l.b16 %v439
    %v1635 = vunpack.c.h.b16 %v439
    %v1636 = vunpack.c.l.b16 %v440
    %v1637 = vunpack.c.h.b16 %v440
    %v1638 = vunpack.c.l.b16 %v441
    %v1639 = vunpack.c.h.b16 %v441
    %v1640 = vunpack.c.l.b16 %v442
    %v1641 = vunpack.c.h.b16 %v442
    %v1642 = vunpack.c.l.b16 %v443
    %v1643 = vunpack.c.h.b16 %v443
    %v1644 = vunpack.c.l.b16 %v444
    %v1645 = vunpack.c.h.b16 %v444
    %v1646 = vunpack.c.l.b16 %v445
    %v1647 = vunpack.c.h.b16 %v445
    %v1648 = vunpack.c.l.b16 %v446
    %v1649 = vunpack.c.h.b16 %v446
    %v1650 = vunpack.c.l.b16 %v447
    %v1651 = vunpack.c.h.b16 %v447
    %v1652 = vunpack.c.l.b16 %v448
    %v1653 = vunpack.c.h.b16 %v448
    %v1654 = vunpack.c.l.b16 %v449
    %v1655 = vunpack.c.h.b16 %v449
    %v1656 = vunpack.c.l.b16 %v450
    %v1657 = vunpack.c.h.b16 %v450
    %v1658 = vunpack.c.l.b16 %v451
    %v1659 = vunpack.c.h.b16 %v451
    %v1660 = vunpack.c.l.b16 %v452
    %v1661 = vunpack.c.h.b16 %v452
    %v1662 = vunpack.c.l.b16 %v453
    %v1663 = vunpack.c.h.b16 %v453
    %v1664 = vunpack.c.l.b16 %v454
    %v1665 = vunpack.c.h.b16 %v454
    %v1666 = vunpack.c.l.b16 %v455
    %v1667 = vunpack.c.h.b16 %v455
    %v1668 = vunpack.c.l.b16 %v456
    %v1669 = vunpack.c.h.b16 %v456
    %v1670 = vunpack.c.l.b16 %v457
    %v1671 = vunpack.c.h.b16 %v457
    %v1672 = vunpack.c.l.b16 %v458
    %v1673 = vunpack.c.h.b16 %v458
    %v1674 = vunpack.c.l.b16 %v459
    %v1675 = vunpack.c.h.b16 %v459
    %v1676 = vunpack.c.l.b16 %v460
    %v1677 = vunpack.c.h.b16 %v460
    %v1678 = vunpack.c.l.b16 %v461
    %v1679 = vunpack.c.h.b16 %v461
    %v1680 = vunpack.c.l.b16 %v462
    %v1681 = vunpack.c.h.b16 %v462
    %v1682 = vunpack.c.l.b16 %v463
    %v1683 = vunpack.c.h.b16 %v463
    %v1684 = vunpack.c.l.b16 %v464
    %v1685 = vunpack.c.h.b16 %v464
    %v1686 = vunpack.c.l.b16 %v465
    %v1687 = vunpack.c.h.b16 %v465
    %v1688 = vunpack.c.l.b16 %v466
    %v1689 = vunpack.c.h.b16 %v466
    %v1690 = vunpack.c.l.b16 %v467
    %v1691 = vunpack.c.h.b16 %v467
    %v1692 = vunpack.c.l.b16 %v468
    %v1693 = vunpack.c.h.b16 %v468
    %v1694 = vunpack.c.l.b16 %v469
    %v1695 = vunpack.c.h.b16 %v469
    %v1696 = vunpack.c.l.b16 %v470
    %v1697 = vunpack.c.h.b16 %v470
    %v1698 = vunpack.c.l.b16 %v471
    %v1699 = vunpack.c.h.b16 %v471
    %v1700 = vunpack.c.l.b16 %v472
    %v1701 = vunpack.c.h.b16 %v472
    %v1702 = vunpack.c.l.b16 %v473
    %v1703 = vunpack.c.h.b16 %v473
    %v1704 = vunpack.c.l.b16 %v474
    %v1705 = vunpack.c.h.b16 %v474
    %v1706 = vunpack.c.l.b16 %v475
    %v1707 = vunpack.c.h.b16 %v475
    %v1708 = vunpack.c.l.b16 %v476
    %v1709 = vunpack.c.h.b16 %v476
    %v1710 = vunpack.c.l.b16 %v477
    %v1711 = vunpack.c.h.b16 %v477
    %v1712 = vunpack.c.l.b16 %v478
    %v1713 = vunpack.c.h.b16 %v478
    %v1714 = vunpack.c.l.b16 %v479
    %v1715 = vunpack.c.h.b16 %v479
    %v1716 = vunpack.c.l.b16 %v480
    %v1717 = vunpack.c.h.b16 %v480
    %v1718 = vunpack.c.l.b16 %v481
    %v1719 = vunpack.c.h.b16 %v481
    %v1720 = vunpack.c.l.b16 %v482
    %v1721 = vunpack.c.h.b16 %v482
    %v1722 = vunpack.c.l.b16 %v483
    %v1723 = vunpack.c.h.b16 %v483
    %v1724 = vunpack.c.l.b16 %v484
    %v1725 = vunpack.c.h.b16 %v484
    %v1726 = vunpack.c.l.b16 %v485
    %v1727 = vunpack.c.h.b16 %v485
    %v1728 = vunpack.c.l.b16 %v486
    %v1729 = vunpack.c.h.b16 %v486
    %v1730 = vunpack.c.l.b16 %v487
    %v1731 = vunpack.c.h.b16 %v487
    %v1732 = vunpack.c.l.b16 %v488
    %v1733 = vunpack.c.h.b16 %v488
    %v1734 = vunpack.c.l.b16 %v489
    %v1735 = vunpack.c.h.b16 %v489
    %v1736 = vunpack.c.l.b16 %v490
    %v1737 = vunpack.c.h.b16 %v490
    %v1738 = vunpack.c.l.b16 %v491
    %v1739 = vunpack.c.h.b16 %v491
    %v1740 = vunpack.c.l.b16 %v492
    %v1741 = vunpack.c.h.b16 %v492
    %v1742 = vunpack.c.l.b16 %v493
    %v1743 = vunpack.c.h.b16 %v493
    %v1744 = vunpack.c.l.b16 %v494
    %v1745 = vunpack.c.h.b16 %v494
    %v1746 = vunpack.c.l.b16 %v495
    %v1747 = vunpack.c.h.b16 %v495
    %v1748 = vunpack.c.l.b16 %v496
    %v1749 = vunpack.c.h.b16 %v496
    %v1750 = vunpack.c.l.b16 %v497
    %v1751 = vunpack.c.h.b16 %v497
    %v1752 = vunpack.c.l.b16 %v498
    %v1753 = vunpack.c.h.b16 %v498
    %v1754 = vunpack.c.l.b16 %v499
    %v1755 = vunpack.c.h.b16 %v499
    %v1756 = vunpack.c.l.b16 %v500
    %v1757 = vunpack.c.h.b16 %v500
    %v1758 = vunpack.c.l.b16 %v501
    %v1759 = vunpack.c.h.b16 %v501
    %v1760 = vunpack.c.l.b16 %v502
    %v1761 = vunpack.c.h.b16 %v502
    %v1762 = vunpack.c.l.b16 %v503
    %v1763 = vunpack.c.h.b16 %v503
    %v1764 = vunpack.c.l.b16 %v504
    %v1765 = vunpack.c.h.b16 %v504
    %v1766 = vunpack.c.l.b16 %v505
    %v1767 = vunpack.c.h.b16 %v505
    %v1768 = vunpack.c.l.b16 %v506
    %v1769 = vunpack.c.h.b16 %v506
    %v1770 = vunpack.c.l.b16 %v507
    %v1771 = vunpack.c.h.b16 %v507
    %v1772 = vunpack.c.l.b16 %v508
    %v1773 = vunpack.c.h.b16 %v508
    %v1774 = vunpack.c.l.b16 %v509
    %v1775 = vunpack.c.h.b16 %v509
    %v1776 = vunpack.c.l.b16 %v510
    %v1777 = vunpack.c.h.b16 %v510
    %v1778 = vunpack.c.l.b16 %v511
    %v1779 = vunpack.c.h.b16 %v511
    %v1780 = vunpack.c.l.b16 %v512
    %v1781 = vunpack.c.h.b16 %v512
    %v1782 = vunpack.c.l.b16 %v513
    %v1783 = vunpack.c.h.b16 %v513
    %v1784 = vunpack.c.l.b16 %v514
    %v1785 = vunpack.c.h.b16 %v514
    %v1786 = vunpack.c.l.b16 %v515
    %v1787 = vunpack.c.h.b16 %v515
    %v1788 = vunpack.c.l.b16 %v516
    %v1789 = vunpack.c.h.b16 %v516
    %v1790 = vunpack.c.l.b16 %v517
    %v1791 = vunpack.c.h.b16 %v517
    %v1792 = vunpack.c.l.b16 %v518
    %v1793 = vunpack.c.h.b16 %v518
    %v1794 = vunpack.c.l.b16 %v519
    %v1795 = vunpack.c.h.b16 %v519
    %v1796 = vunpack.c.l.b16 %v520
    %v1797 = vunpack.c.h.b16 %v520
    %v1798 = vunpack.c.l.b16 %v521
    %v1799 = vunpack.c.h.b16 %v521
    %v1800 = vunpack.c.l.b16 %v522
    %v1801 = vunpack.c.h.b16 %v522
    %v1802 = vunpack.c.l.b16 %v523
    %v1803 = vunpack.c.h.b16 %v523
    %v1804 = vunpack.c.l.b16 %v524
    %v1805 = vunpack.c.h.b16 %v524
    %v1806 = vunpack.c.l.b16 %v525
    %v1807 = vunpack.c.h.b16 %v525
    %v1808 = vunpack.c.l.b16 %v526
    %v1809 = vunpack.c.h.b16 %v526
    %v1810 = vunpack.c.l.b16 %v527
    %v1811 = vunpack.c.h.b16 %v527
    %v1812 = vunpack.c.l.b16 %v528
    %v1813 = vunpack.c.h.b16 %v528
    %v1814 = vunpack.c.l.b16 %v529
    %v1815 = vunpack.c.h.b16 %v529
    %v1816 = vunpack.c.l.b16 %v530
    %v1817 = vunpack.c.h.b16 %v530
    %v1818 = vunpack.c.l.b16 %v531
    %v1819 = vunpack.c.h.b16 %v531
    %v1820 = vunpack.c.l.b16 %v532
    %v1821 = vunpack.c.h.b16 %v532
    %v1822 = vunpack.c.l.b16 %v533
    %v1823 = vunpack.c.h.b16 %v533
    %v1824 = vunpack.c.l.b16 %v534
    %v1825 = vunpack.c.h.b16 %v534
    %v1826 = vunpack.c.l.b16 %v535
    %v1827 = vunpack.c.h.b16 %v535
    %v1828 = vunpack.c.l.b16 %v536
    %v1829 = vunpack.c.h.b16 %v536
    %v1830 = vunpack.c.l.b16 %v537
    %v1831 = vunpack.c.h.b16 %v537
    %v1832 = vunpack.c.l.b16 %v538
    %v1833 = vunpack.c.h.b16 %v538
    %v1834 = vunpack.c.l.b16 %v539
    %v1835 = vunpack.c.h.b16 %v539
    %v1836 = vunpack.c.l.b16 %v540
    %v1837 = vunpack.c.h.b16 %v540
    %v1838 = vunpack.c.l.b16 %v541
    %v1839 = vunpack.c.h.b16 %v541
    %v1840 = vunpack.c.l.b16 %v542
    %v1841 = vunpack.c.h.b16 %v542
    %v1842 = vunpack.c.l.b16 %v543
    %v1843 = vunpack.c.h.b16 %v543
    %v1844 = vunpack.c.l.b16 %v544
    %v1845 = vunpack.c.h.b16 %v544
    %v1846 = vunpack.c.l.b16 %v545
    %v1847 = vunpack.c.h.b16 %v545
    %v1848 = vunpack.c.l.b16 %v546
    %v1849 = vunpack.c.h.b16 %v546
    %v1850 = vunpack.c.l.b16 %v547
    %v1851 = vunpack.c.h.b16 %v547
    %v1852 = vunpack.c.l.b16 %v548
    %v1853 = vunpack.c.h.b16 %v548
    %v1854 = vunpack.c.l.b16 %v549
    %v1855 = vunpack.c.h.b16 %v549
    %v1856 = vunpack.c.l.b16 %v550
    %v1857 = vunpack.c.h.b16 %v550
    %v1858 = vunpack.c.l.b16 %v551
    %v1859 = vunpack.c.h.b16 %v551
    %v1860 = vunpack.c.l.b16 %v552
    %v1861 = vunpack.c.h.b16 %v552
    %v1862 = vunpack.c.l.b16 %v553
    %v1863 = vunpack.c.h.b16 %v553
    %v1864 = vunpack.c.l.b16 %v554
    %v1865 = vunpack.c.h.b16 %v554
    %v1866 = vunpack.c.l.b16 %v555
    %v1867 = vunpack.c.h.b16 %v555
    %v1868 = vunpack.c.l.b16 %v556
    %v1869 = vunpack.c.h.b16 %v556
    %v1870 = vunpack.c.l.b16 %v557
    %v1871 = vunpack.c.h.b16 %v557
    %v1872 = vunpack.c.l.b16 %v558
    %v1873 = vunpack.c.h.b16 %v558
    %v1874 = vunpack.c.l.b16 %v559
    %v1875 = vunpack.c.h.b16 %v559
    %v1876 = vunpack.c.l.b16 %v560
    %v1877 = vunpack.c.h.b16 %v560
    %v1878 = vunpack.c.l.b16 %v561
    %v1879 = vunpack.c.h.b16 %v561
    %v1880 = vunpack.c.l.b16 %v562
    %v1881 = vunpack.c.h.b16 %v562
    %v1882 = vunpack.c.l.b16 %v563
    %v1883 = vunpack.c.h.b16 %v563
    %v1884 = vunpack.c.l.b16 %v564
    %v1885 = vunpack.c.h.b16 %v564
    %v1886 = vunpack.c.l.b16 %v565
    %v1887 = vunpack.c.h.b16 %v565
    %v1888 = vunpack.c.l.b16 %v566
    %v1889 = vunpack.c.h.b16 %v566
    %v1890 = vunpack.c.l.b16 %v567
    %v1891 = vunpack.c.h.b16 %v567
    %v1892 = vunpack.c.l.b16 %v568
    %v1893 = vunpack.c.h.b16 %v568
    %v1894 = vunpack.c.l.b16 %v569
    %v1895 = vunpack.c.h.b16 %v569
    %v1896 = vunpack.c.l.b16 %v570
    %v1897 = vunpack.c.h.b16 %v570
    %v1898 = vunpack.c.l.b16 %v571
    %v1899 = vunpack.c.h.b16 %v571
    %v1900 = vunpack.c.l.b16 %v572
    %v1901 = vunpack.c.h.b16 %v572
    %v1902 = vunpack.c.l.b16 %v573
    %v1903 = vunpack.c.h.b16 %v573
    %v1904 = vunpack.c.l.b16 %v574
    %v1905 = vunpack.c.h.b16 %v574
    %v1906 = vunpack.c.l.b16 %v575
    %v1907 = vunpack.c.h.b16 %v575
    %v1908 = vunpack.c.l.b16 %v576
    %v1909 = vunpack.c.h.b16 %v576
    %v1910 = vunpack.c.l.b16 %v577
    %v1911 = vunpack.c.h.b16 %v577
    %v1912 = vunpack.c.l.b16 %v578
    %v1913 = vunpack.c.h.b16 %v578
    %v1914 = vunpack.c.l.b16 %v579
    %v1915 = vunpack.c.h.b16 %v579
    %v1916 = vunpack.c.l.b16 %v580
    %v1917 = vunpack.c.h.b16 %v580
    %v1918 = vunpack.c.l.b16 %v581
    %v1919 = vunpack.c.h.b16 %v581
    %v1920 = vunpack.c.l.b16 %v582
    %v1921 = vunpack.c.h.b16 %v582
    %v1922 = vunpack.c.l.b16 %v583
    %v1923 = vunpack.c.h.b16 %v583
    %v1924 = vunpack.c.l.b16 %v584
    %v1925 = vunpack.c.h.b16 %v584
    %v1926 = vunpack.c.l.b16 %v585
    %v1927 = vunpack.c.h.b16 %v585
    %v1928 = vunpack.c.l.b16 %v586
    %v1929 = vunpack.c.h.b16 %v586
    %v1930 = vunpack.c.l.b16 %v587
    %v1931 = vunpack.c.h.b16 %v587
    %v1932 = vunpack.c.l.b16 %v588
    %v1933 = vunpack.c.h.b16 %v588
    %v1934 = vunpack.c.l.b16 %v589
    %v1935 = vunpack.c.h.b16 %v589
    %v1936 = vunpack.c.l.b16 %v590
    %v1937 = vunpack.c.h.b16 %v590
    %v1938 = vunpack.c.l.b16 %v591
    %v1939 = vunpack.c.h.b16 %v591
    %v1940 = vunpack.c.l.b16 %v592
    %v1941 = vunpack.c.h.b16 %v592
    %v1942 = vunpack.c.l.b16 %v593
    %v1943 = vunpack.c.h.b16 %v593
    %v1944 = vunpack.c.l.b16 %v594
    %v1945 = vunpack.c.h.b16 %v594
    %v1946 = vunpack.c.l.b16 %v595
    %v1947 = vunpack.c.h.b16 %v595
    %v1948 = vunpack.c.l.b16 %v596
    %v1949 = vunpack.c.h.b16 %v596
    %v1950 = vunpack.c.l.b16 %v597
    %v1951 = vunpack.c.h.b16 %v597
    %v1952 = vunpack.c.l.b16 %v598
    %v1953 = vunpack.c.h.b16 %v598
    %v1954 = vunpack.c.l.b16 %v599
    %v1955 = vunpack.c.h.b16 %v599
    %v1956 = vunpack.c.l.b16 %v600
    %v1957 = vunpack.c.h.b16 %v600
    %v1958 = vunpack.c.l.b16 %v601
    %v1959 = vunpack.c.h.b16 %v601
    %v1960 = vunpack.c.l.b16 %v602
    %v1961 = vunpack.c.h.b16 %v602
    %v1962 = vunpack.c.l.b16 %v603
    %v1963 = vunpack.c.h.b16 %v603
    %v1964 = vunpack.c.l.b16 %v604
    %v1965 = vunpack.c.h.b16 %v604
    %v1966 = vunpack.c.l.b16 %v605
    %v1967 = vunpack.c.h.b16 %v605
    %v1968 = vunpack.c.l.b16 %v606
    %v1969 = vunpack.c.h.b16 %v606
    %v1970 = vunpack.c.l.b16 %v607
    %v1971 = vunpack.c.h.b16 %v607
    %v1972 = vunpack.c.l.b16 %v608
    %v1973 = vunpack.c.h.b16 %v608
    %v1974 = vunpack.c.l.b16 %v609
    %v1975 = vunpack.c.h.b16 %v609
    %v1976 = vunpack.c.l.b16 %v610
    %v1977 = vunpack.c.h.b16 %v610
    %v1978 = vunpack.c.l.b16 %v611
    %v1979 = vunpack.c.h.b16 %v611
    %v1980 = vunpack.c.l.b16 %v612
    %v1981 = vunpack.c.h.b16 %v612
    %v1982 = vunpack.c.l.b16 %v613
    %v1983 = vunpack.c.h.b16 %v613
    %v1984 = vunpack.c.l.b16 %v614
    %v1985 = vunpack.c.h.b16 %v614
    %v1986 = vunpack.c.l.b16 %v615
    %v1987 = vunpack.c.h.b16 %v615
    %v1988 = vunpack.c.l.b16 %v616
    %v1989 = vunpack.c.h.b16 %v616
    %v1990 = vunpack.c.l.b16 %v617
    %v1991 = vunpack.c.h.b16 %v617
    %v1992 = vunpack.c.l.b16 %v618
    %v1993 = vunpack.c.h.b16 %v618
    %v1994 = vunpack.c.l.b16 %v619
    %v1995 = vunpack.c.h.b16 %v619
    %v1996 = vunpack.c.l.b16 %v620
    %v1997 = vunpack.c.h.b16 %v620
    %v1998 = vunpack.c.l.b16 %v621
    %v1999 = vunpack.c.h.b16 %v621
    %v2000 = vunpack.c.l.b16 %v622
    %v2001 = vunpack.c.h.b16 %v622
    %v2002 = vunpack.c.l.b16 %v623
    %v2003 = vunpack.c.h.b16 %v623
    %v2004 = vunpack.c.l.b16 %v624
    %v2005 = vunpack.c.h.b16 %v624
    %v2006 = vunpack.c.l.b16 %v625
    %v2007 = vunpack.c.h.b16 %v625
    %v2008 = vunpack.c.l.b16 %v626
    %v2009 = vunpack.c.h.b16 %v626
    %v2010 = vunpack.c.l.b16 %v627
    %v2011 = vunpack.c.h.b16 %v627
    %v2012 = vunpack.c.l.b16 %v628
    %v2013 = vunpack.c.h.b16 %v628
    %v2014 = vunpack.c.l.b16 %v629
    %v2015 = vunpack.c.h.b16 %v629
    %v2016 = vpack.c.b16 %v1128, %v1120
    %v2017 = vpack.c.b16 %v1129, %v1121
    %v2018 = vpack.c.b16 %v1130, %v1122
    %v2019 = vpack.c.b16 %v1131, %v1123
    %v2020 = vpack.c.b16 %v1132, %v1124
    %v2021 = vpack.c.b16 %v1133, %v1125
    %v2022 = vpack.c.b16 %v1134, %v1126
    %v2023 = vpack.c.b16 %v1135, %v1127
    %v2024 = vpack.c.b16 %v1144, %v1136
    %v2025 = vpack.c.b16 %v1145, %v1137
    %v2026 = vpack.c.b16 %v1146, %v1138
    %v2027 = vpack.c.b16 %v1147, %v1139
    %v2028 = vpack.c.b16 %v1148, %v1140
    %v2029 = vpack.c.b16 %v1149, %v1141
    %v2030 = vpack.c.b16 %v1150, %v1142
    %v2031 = vpack.c.b16 %v1151, %v1143
    %v2032 = vpack.c.b16 %v1160, %v1152
    %v2033 = vpack.c.b16 %v1161, %v1153
    %v2034 = vpack.c.b16 %v1162, %v1154
    %v2035 = vpack.c.b16 %v1163, %v1155
    %v2036 = vpack.c.b16 %v1164, %v1156
    %v2037 = vpack.c.b16 %v1165, %v1157
    %v2038 = vpack.c.b16 %v1166, %v1158
    %v2039 = vpack.c.b16 %v1167, %v1159
    %v2040 = vpack.c.b16 %v1176, %v1168
    %v2041 = vpack.c.b16 %v1177, %v1169
    %v2042 = vpack.c.b16 %v1178, %v1170
    %v2043 = vpack.c.b16 %v1179, %v1171
    %v2044 = vpack.c.b16 %v1180, %v1172
    %v2045 = vpack.c.b16 %v1181, %v1173
    %v2046 = vpack.c.b16 %v1182, %v1174
    %v2047 = vpack.c.b16 %v1183, %v1175
    %v2048 = vpack.c.b16 %v1192, %v1184
    %v2049 = vpack.c.b16 %v1193, %v1185
    %v2050 = vpack.c.b16 %v1194, %v1186
    %v2051 = vpack.c.b16 %v1195, %v1187
    %v2052 = vpack.c.b16 %v1196, %v1188
    %v2053 = vpack.c.b16 %v1197, %v1189
    %v2054 = vpack.c.b16 %v1198, %v1190
    %v2055 = vpack.c.b16 %v1199, %v1191
    %v2056 = vpack.c.b16 %v1208, %v1200
    %v2057 = vpack.c.b16 %v1209, %v1201
    %v2058 = vpack.c.b16 %v1210, %v1202
    %v2059 = vpack.c.b16 %v1211, %v1203
    %v2060 = vpack.c.b16 %v1212, %v1204
    %v2061 = vpack.c.b16 %v1213, %v1205
    %v2062 = vpack.c.b16 %v1214, %v1206
    %v2063 = vpack.c.b16 %v1215, %v1207
    %v2064 = vpack.c.b16 %v1224, %v1216
    %v2065 = vpack.c.b16 %v1225, %v1217
    %v2066 = vpack.c.b16 %v1226, %v1218
    %v2067 = vpack.c.b16 %v1227, %v1219
    %v2068 = vpack.c.b16 %v1228, %v1220
    %v2069 = vpack.c.b16 %v1229, %v1221
    %v2070 = vpack.c.b16 %v1230, %v1222
    %v2071 = vpack.c.b16 %v1231, %v1223
    %v2072 = vpack.c.b16 %v1240, %v1232
    %v2073 = vpack.c.b16 %v1241, %v1233
    %v2074 = vpack.c.b16 %v1242, %v1234
    %v2075 = vpack.c.b16 %v1243, %v1235
    %v2076 = vpack.c.b16 %v1244, %v1236
    %v2077 = vpack.c.b16 %v1245, %v1237
    %v2078 = vpack.c.b16 %v1246, %v1238
    %v2079 = vpack.c.b16 %v1247, %v1239
    %v2080 = vpack.c.b16 %v1256, %v1248
    %v2081 = vpack.c.b16 %v1257, %v1249
    %v2082 = vpack.c.b16 %v1258, %v1250
    %v2083 = vpack.c.b16 %v1259, %v1251
    %v2084 = vpack.c.b16 %v1260, %v1252
    %v2085 = vpack.c.b16 %v1261, %v1253
    %v2086 = vpack.c.b16 %v1262, %v1254
    %v2087 = vpack.c.b16 %v1263, %v1255
    %v2088 = vpack.c.b16 %v1272, %v1264
    %v2089 = vpack.c.b16 %v1273, %v1265
    %v2090 = vpack.c.b16 %v1274, %v1266
    %v2091 = vpack.c.b16 %v1275, %v1267
    %v2092 = vpack.c.b16 %v1276, %v1268
    %v2093 = vpack.c.b16 %v1277, %v1269
    %v2094 = vpack.c.b16 %v1278, %v1270
    %v2095 = vpack.c.b16 %v1279, %v1271
    %v2096 = vpack.c.b16 %v1288, %v1280
    %v2097 = vpack.c.b16 %v1289, %v1281
    %v2098 = vpack.c.b16 %v1290, %v1282
    %v2099 = vpack.c.b16 %v1291, %v1283
    %v2100 = vpack.c.b16 %v1292, %v1284
    %v2101 = vpack.c.b16 %v1293, %v1285
    %v2102 = vpack.c.b16 %v1294, %v1286
    %v2103 = vpack.c.b16 %v1295, %v1287
    %v2104 = vpack.c.b16 %v1304, %v1296
    %v2105 = vpack.c.b16 %v1305, %v1297
    %v2106 = vpack.c.b16 %v1306, %v1298
    %v2107 = vpack.c.b16 %v1307, %v1299
    %v2108 = vpack.c.b16 %v1308, %v1300
    %v2109 = vpack.c.b16 %v1309, %v1301
    %v2110 = vpack.c.b16 %v1310, %v1302
    %v2111 = vpack.c.b16 %v1311, %v1303
    %v2112 = vpack.c.b16 %v1320, %v1312
    %v2113 = vpack.c.b16 %v1321, %v1313
    %v2114 = vpack.c.b16 %v1322, %v1314
    %v2115 = vpack.c.b16 %v1323, %v1315
    %v2116 = vpack.c.b16 %v1324, %v1316
    %v2117 = vpack.c.b16 %v1325, %v1317
    %v2118 = vpack.c.b16 %v1326, %v1318
    %v2119 = vpack.c.b16 %v1327, %v1319
    %v2120 = vpack.c.b16 %v1336, %v1328
    %v2121 = vpack.c.b16 %v1337, %v1329
    %v2122 = vpack.c.b16 %v1338, %v1330
    %v2123 = vpack.c.b16 %v1339, %v1331
    %v2124 = vpack.c.b16 %v1340, %v1332
    %v2125 = vpack.c.b16 %v1341, %v1333
    %v2126 = vpack.c.b16 %v1342, %v1334
    %v2127 = vpack.c.b16 %v1343, %v1335
    %v2128 = vpack.c.b16 %v1352, %v1344
    %v2129 = vpack.c.b16 %v1353, %v1345
    %v2130 = vpack.c.b16 %v1354, %v1346
    %v2131 = vpack.c.b16 %v1355, %v1347
    %v2132 = vpack.c.b16 %v1356, %v1348
    %v2133 = vpack.c.b16 %v1357, %v1349
    %v2134 = vpack.c.b16 %v1358, %v1350
    %v2135 = vpack.c.b16 %v1359, %v1351
    %v2136 = vpack.c.b16 %v1368, %v1360
    %v2137 = vpack.c.b16 %v1369, %v1361
    %v2138 = vpack.c.b16 %v1370, %v1362
    %v2139 = vpack.c.b16 %v1371, %v1363
    %v2140 = vpack.c.b16 %v1372, %v1364
    %v2141 = vpack.c.b16 %v1373, %v1365
    %v2142 = vpack.c.b16 %v1374, %v1366
    %v2143 = vpack.c.b16 %v1375, %v1367
    %v2144 = vpack.c.b16 %v1384, %v1376
    %v2145 = vpack.c.b16 %v1385, %v1377
    %v2146 = vpack.c.b16 %v1386, %v1378
    %v2147 = vpack.c.b16 %v1387, %v1379
    %v2148 = vpack.c.b16 %v1388, %v1380
    %v2149 = vpack.c.b16 %v1389, %v1381
    %v2150 = vpack.c.b16 %v1390, %v1382
    %v2151 = vpack.c.b16 %v1391, %v1383
    %v2152 = vpack.c.b16 %v1400, %v1392
    %v2153 = vpack.c.b16 %v1401, %v1393
    %v2154 = vpack.c.b16 %v1402, %v1394
    %v2155 = vpack.c.b16 %v1403, %v1395
    %v2156 = vpack.c.b16 %v1404, %v1396
    %v2157 = vpack.c.b16 %v1405, %v1397
    %v2158 = vpack.c.b16 %v1406, %v1398
    %v2159 = vpack.c.b16 %v1407, %v1399
    %v2160 = vpack.c.b16 %v1416, %v1408
    %v2161 = vpack.c.b16 %v1417, %v1409
    %v2162 = vpack.c.b16 %v1418, %v1410
    %v2163 = vpack.c.b16 %v1419, %v1411
    %v2164 = vpack.c.b16 %v1420, %v1412
    %v2165 = vpack.c.b16 %v1421, %v1413
    %v2166 = vpack.c.b16 %v1422, %v1414
    %v2167 = vpack.c.b16 %v1423, %v1415
    %v2168 = vpack.c.b16 %v1432, %v1424
    %v2169 = vpack.c.b16 %v1433, %v1425
    %v2170 = vpack.c.b16 %v1434, %v1426
    %v2171 = vpack.c.b16 %v1435, %v1427
    %v2172 = vpack.c.b16 %v1436, %v1428
    %v2173 = vpack.c.b16 %v1437, %v1429
    %v2174 = vpack.c.b16 %v1438, %v1430
    %v2175 = vpack.c.b16 %v1439, %v1431
    %v2176 = vpack.c.b16 %v1448, %v1440
    %v2177 = vpack.c.b16 %v1449, %v1441
    %v2178 = vpack.c.b16 %v1450, %v1442
    %v2179 = vpack.c.b16 %v1451, %v1443
    %v2180 = vpack.c.b16 %v1452, %v1444
    %v2181 = vpack.c.b16 %v1453, %v1445
    %v2182 = vpack.c.b16 %v1454, %v1446
    %v2183 = vpack.c.b16 %v1455, %v1447
    %v2184 = vpack.c.b16 %v1464, %v1456
    %v2185 = vpack.c.b16 %v1465, %v1457
    %v2186 = vpack.c.b16 %v1466, %v1458
    %v2187 = vpack.c.b16 %v1467, %v1459
    %v2188 = vpack.c.b16 %v1468, %v1460
    %v2189 = vpack.c.b16 %v1469, %v1461
    %v2190 = vpack.c.b16 %v1470, %v1462
    %v2191 = vpack.c.b16 %v1471, %v1463
    %v2192 = vpack.c.b16 %v1480, %v1472
    %v2193 = vpack.c.b16 %v1481, %v1473
    %v2194 = vpack.c.b16 %v1482, %v1474
    %v2195 = vpack.c.b16 %v1483, %v1475
    %v2196 = vpack.c.b16 %v1484, %v1476
    %v2197 = vpack.c.b16 %v1485, %v1477
    %v2198 = vpack.c.b16 %v1486, %v1478
    %v2199 = vpack.c.b16 %v1487, %v1479
    %v2200 = vpack.c.b16 %v1496, %v1488
    %v2201 = vpack.c.b16 %v1497, %v1489
    %v2202 = vpack.c.b16 %v1498, %v1490
    %v2203 = vpack.c.b16 %v1499, %v1491
    %v2204 = vpack.c.b16 %v1500, %v1492
    %v2205 = vpack.c.b16 %v1501, %v1493
    %v2206 = vpack.c.b16 %v1502, %v1494
    %v2207 = vpack.c.b16 %v1503, %v1495
    %v2208 = vpack.c.b16 %v1512, %v1504
    %v2209 = vpack.c.b16 %v1513, %v1505
    %v2210 = vpack.c.b16 %v1514, %v1506
    %v2211 = vpack.c.b16 %v1515, %v1507
    %v2212 = vpack.c.b16 %v1516, %v1508
    %v2213 = vpack.c.b16 %v1517, %v1509
    %v2214 = vpack.c.b16 %v1518, %v1510
    %v2215 = vpack.c.b16 %v1519, %v1511
    %v2216 = vpack.c.b16 %v1528, %v1520
    %v2217 = vpack.c.b16 %v1529, %v1521
    %v2218 = vpack.c.b16 %v1530, %v1522
    %v2219 = vpack.c.b16 %v1531, %v1523
    %v2220 = vpack.c.b16 %v1532, %v1524
    %v2221 = vpack.c.b16 %v1533, %v1525
    %v2222 = vpack.c.b16 %v1534, %v1526
    %v2223 = vpack.c.b16 %v1535, %v1527
    %v2224 = vpack.c.b16 %v1544, %v1536
    %v2225 = vpack.c.b16 %v1545, %v1537
    %v2226 = vpack.c.b16 %v1546, %v1538
    %v2227 = vpack.c.b16 %v1547, %v1539
    %v2228 = vpack.c.b16 %v1548, %v1540
    %v2229 = vpack.c.b16 %v1549, %v1541
    %v2230 = vpack.c.b16 %v1550, %v1542
    %v2231 = vpack.c.b16 %v1551, %v1543
    %v2232 = vpack.c.b16 %v1560, %v1552
    %v2233 = vpack.c.b16 %v1561, %v1553
    %v2234 = vpack.c.b16 %v1562, %v1554
    %v2235 = vpack.c.b16 %v1563, %v1555
    %v2236 = vpack.c.b16 %v1564, %v1556
    %v2237 = vpack.c.b16 %v1565, %v1557
    %v2238 = vpack.c.b16 %v1566, %v1558
    %v2239 = vpack.c.b16 %v1567, %v1559
    %v2240 = vpack.c.b16 %v1576, %v1568
    %v2241 = vpack.c.b16 %v1577, %v1569
    %v2242 = vpack.c.b16 %v1578, %v1570
    %v2243 = vpack.c.b16 %v1579, %v1571
    %v2244 = vpack.c.b16 %v1580, %v1572
    %v2245 = vpack.c.b16 %v1581, %v1573
    %v2246 = vpack.c.b16 %v1582, %v1574
    %v2247 = vpack.c.b16 %v1583, %v1575
    %v2248 = vpack.c.b16 %v1592, %v1584
    %v2249 = vpack.c.b16 %v1593, %v1585
    %v2250 = vpack.c.b16 %v1594, %v1586
    %v2251 = vpack.c.b16 %v1595, %v1587
    %v2252 = vpack.c.b16 %v1596, %v1588
    %v2253 = vpack.c.b16 %v1597, %v1589
    %v2254 = vpack.c.b16 %v1598, %v1590
    %v2255 = vpack.c.b16 %v1599, %v1591
    %v2256 = vpack.c.b16 %v1608, %v1600
    %v2257 = vpack.c.b16 %v1609, %v1601
    %v2258 = vpack.c.b16 %v1610, %v1602
    %v2259 = vpack.c.b16 %v1611, %v1603
    %v2260 = vpack.c.b16 %v1612, %v1604
    %v2261 = vpack.c.b16 %v1613, %v1605
    %v2262 = vpack.c.b16 %v1614, %v1606
    %v2263 = vpack.c.b16 %v1615, %v1607
    %v2264 = vpack.c.b16 %v1624, %v1616
    %v2265 = vpack.c.b16 %v1625, %v1617
    %v2266 = vpack.c.b16 %v1626, %v1618
    %v2267 = vpack.c.b16 %v1627, %v1619
    %v2268 = vpack.c.b16 %v1628, %v1620
    %v2269 = vpack.c.b16 %v1629, %v1621
    %v2270 = vpack.c.b16 %v1630, %v1622
    %v2271 = vpack.c.b16 %v1631, %v1623
    %v2272 = vpack.c.b16 %v1640, %v1632
    %v2273 = vpack.c.b16 %v1641, %v1633
    %v2274 = vpack.c.b16 %v1642, %v1634
    %v2275 = vpack.c.b16 %v1643, %v1635
    %v2276 = vpack.c.b16 %v1644, %v1636
    %v2277 = vpack.c.b16 %v1645, %v1637
    %v2278 = vpack.c.b16 %v1646, %v1638
    %v2279 = vpack.c.b16 %v1647, %v1639
    %v2280 = vpack.c.b16 %v1656, %v1648
    %v2281 = vpack.c.b16 %v1657, %v1649
    %v2282 = vpack.c.b16 %v1658, %v1650
    %v2283 = vpack.c.b16 %v1659, %v1651
    %v2284 = vpack.c.b16 %v1660, %v1652
    %v2285 = vpack.c.b16 %v1661, %v1653
    %v2286 = vpack.c.b16 %v1662, %v1654
    %v2287 = vpack.c.b16 %v1663, %v1655
    %v2288 = vpack.c.b16 %v1672, %v1664
    %v2289 = vpack.c.b16 %v1673, %v1665
    %v2290 = vpack.c.b16 %v1674, %v1666
    %v2291 = vpack.c.b16 %v1675, %v1667
    %v2292 = vpack.c.b16 %v1676, %v1668
    %v2293 = vpack.c.b16 %v1677, %v1669
    %v2294 = vpack.c.b16 %v1678, %v1670
    %v2295 = vpack.c.b16 %v1679, %v1671
    %v2296 = vpack.c.b16 %v1688, %v1680
    %v2297 = vpack.c.b16 %v1689, %v1681
    %v2298 = vpack.c.b16 %v1690, %v1682
    %v2299 = vpack.c.b16 %v1691, %v1683
    %v2300 = vpack.c.b16 %v1692, %v1684
    %v2301 = vpack.c.b16 %v1693, %v1685
    %v2302 = vpack.c.b16 %v1694, %v1686
    %v2303 = vpack.c.b16 %v1695, %v1687
    %v2304 = vpack.c.b16 %v1704, %v1696
    %v2305 = vpack.c.b16 %v1705, %v1697
    %v2306 = vpack.c.b16 %v1706, %v1698
    %v2307 = vpack.c.b16 %v1707, %v1699
    %v2308 = vpack.c.b16 %v1708, %v1700
    %v2309 = vpack.c.b16 %v1709, %v1701
    %v2310 = vpack.c.b16 %v1710, %v1702
    %v2311 = vpack.c.b16 %v1711, %v1703
    %v2312 = vpack.c.b16 %v1720, %v1712
    %v2313 = vpack.c.b16 %v1721, %v1713
    %v2314 = vpack.c.b16 %v1722, %v1714
    %v2315 = vpack.c.b16 %v1723, %v1715
    %v2316 = vpack.c.b16 %v1724, %v1716
    %v2317 = vpack.c.b16 %v1725, %v1717
    %v2318 = vpack.c.b16 %v1726, %v1718
    %v2319 = vpack.c.b16 %v1727, %v1719
    %v2320 = vpack.c.b16 %v1736, %v1728
    %v2321 = vpack.c.b16 %v1737, %v1729
    %v2322 = vpack.c.b16 %v1738, %v1730
    %v2323 = vpack.c.b16 %v1739, %v1731
    %v2324 = vpack.c.b16 %v1740, %v1732
    %v2325 = vpack.c.b16 %v1741, %v1733
    %v2326 = vpack.c.b16 %v1742, %v1734
    %v2327 = vpack.c.b16 %v1743, %v1735
    %v2328 = vpack.c.b16 %v1752, %v1744
    %v2329 = vpack.c.b16 %v1753, %v1745
    %v2330 = vpack.c.b16 %v1754, %v1746
    %v2331 = vpack.c.b16 %v1755, %v1747
    %v2332 = vpack.c.b16 %v1756, %v1748
    %v2333 = vpack.c.b16 %v1757, %v1749
    %v2334 = vpack.c.b16 %v1758, %v1750
    %v2335 = vpack.c.b16 %v1759, %v1751
    %v2336 = vpack.c.b16 %v1768, %v1760
    %v2337 = vpack.c.b16 %v1769, %v1761
    %v2338 = vpack.c.b16 %v1770, %v1762
    %v2339 = vpack.c.b16 %v1771, %v1763
    %v2340 = vpack.c.b16 %v1772, %v1764
    %v2341 = vpack.c.b16 %v1773, %v1765
    %v2342 = vpack.c.b16 %v1774, %v1766
    %v2343 = vpack.c.b16 %v1775, %v1767
    %v2344 = vpack.c.b16 %v1784, %v1776
    %v2345 = vpack.c.b16 %v1785, %v1777
    %v2346 = vpack.c.b16 %v1786, %v1778
    %v2347 = vpack.c.b16 %v1787, %v1779
    %v2348 = vpack.c.b16 %v1788, %v1780
    %v2349 = vpack.c.b16 %v1789, %v1781
    %v2350 = vpack.c.b16 %v1790, %v1782
    %v2351 = vpack.c.b16 %v1791, %v1783
    %v2352 = vpack.c.b16 %v1800, %v1792
    %v2353 = vpack.c.b16 %v1801, %v1793
    %v2354 = vpack.c.b16 %v1802, %v1794
    %v2355 = vpack.c.b16 %v1803, %v1795
    %v2356 = vpack.c.b16 %v1804, %v1796
    %v2357 = vpack.c.b16 %v1805, %v1797
    %v2358 = vpack.c.b16 %v1806, %v1798
    %v2359 = vpack.c.b16 %v1807, %v1799
    %v2360 = vpack.c.b16 %v1816, %v1808
    %v2361 = vpack.c.b16 %v1817, %v1809
    %v2362 = vpack.c.b16 %v1818, %v1810
    %v2363 = vpack.c.b16 %v1819, %v1811
    %v2364 = vpack.c.b16 %v1820, %v1812
    %v2365 = vpack.c.b16 %v1821, %v1813
    %v2366 = vpack.c.b16 %v1822, %v1814
    %v2367 = vpack.c.b16 %v1823, %v1815
    %v2368 = vpack.c.b16 %v1832, %v1824
    %v2369 = vpack.c.b16 %v1833, %v1825
    %v2370 = vpack.c.b16 %v1834, %v1826
    %v2371 = vpack.c.b16 %v1835, %v1827
    %v2372 = vpack.c.b16 %v1836, %v1828
    %v2373 = vpack.c.b16 %v1837, %v1829
    %v2374 = vpack.c.b16 %v1838, %v1830
    %v2375 = vpack.c.b16 %v1839, %v1831
    %v2376 = vpack.c.b16 %v1848, %v1840
    %v2377 = vpack.c.b16 %v1849, %v1841
    %v2378 = vpack.c.b16 %v1850, %v1842
    %v2379 = vpack.c.b16 %v1851, %v1843
    %v2380 = vpack.c.b16 %v1852, %v1844
    %v2381 = vpack.c.b16 %v1853, %v1845
    %v2382 = vpack.c.b16 %v1854, %v1846
    %v2383 = vpack.c.b16 %v1855, %v1847
    %v2384 = vpack.c.b16 %v1864, %v1856
    %v2385 = vpack.c.b16 %v1865, %v1857
    %v2386 = vpack.c.b16 %v1866, %v1858
    %v2387 = vpack.c.b16 %v1867, %v1859
    %v2388 = vpack.c.b16 %v1868, %v1860
    %v2389 = vpack.c.b16 %v1869, %v1861
    %v2390 = vpack.c.b16 %v1870, %v1862
    %v2391 = vpack.c.b16 %v1871, %v1863
    %v2392 = vpack.c.b16 %v1880, %v1872
    %v2393 = vpack.c.b16 %v1881, %v1873
    %v2394 = vpack.c.b16 %v1882, %v1874
    %v2395 = vpack.c.b16 %v1883, %v1875
    %v2396 = vpack.c.b16 %v1884, %v1876
    %v2397 = vpack.c.b16 %v1885, %v1877
    %v2398 = vpack.c.b16 %v1886, %v1878
    %v2399 = vpack.c.b16 %v1887, %v1879
    %v2400 = vpack.c.b16 %v1896, %v1888
    %v2401 = vpack.c.b16 %v1897, %v1889
    %v2402 = vpack.c.b16 %v1898, %v1890
    %v2403 = vpack.c.b16 %v1899, %v1891
    %v2404 = vpack.c.b16 %v1900, %v1892
    %v2405 = vpack.c.b16 %v1901, %v1893
    %v2406 = vpack.c.b16 %v1902, %v1894
    %v2407 = vpack.c.b16 %v1903, %v1895
    %v2408 = vpack.c.b16 %v1912, %v1904
    %v2409 = vpack.c.b16 %v1913, %v1905
    %v2410 = vpack.c.b16 %v1914, %v1906
    %v2411 = vpack.c.b16 %v1915, %v1907
    %v2412 = vpack.c.b16 %v1916, %v1908
    %v2413 = vpack.c.b16 %v1917, %v1909
    %v2414 = vpack.c.b16 %v1918, %v1910
    %v2415 = vpack.c.b16 %v1919, %v1911
    %v2416 = vpack.c.b16 %v1928, %v1920
    %v2417 = vpack.c.b16 %v1929, %v1921
    %v2418 = vpack.c.b16 %v1930, %v1922
    %v2419 = vpack.c.b16 %v1931, %v1923
    %v2420 = vpack.c.b16 %v1932, %v1924
    %v2421 = vpack.c.b16 %v1933, %v1925
    %v2422 = vpack.c.b16 %v1934, %v1926
    %v2423 = vpack.c.b16 %v1935, %v1927
    %v2424 = vpack.c.b16 %v1944, %v1936
    %v2425 = vpack.c.b16 %v1945, %v1937
    %v2426 = vpack.c.b16 %v1946, %v1938
    %v2427 = vpack.c.b16 %v1947, %v1939
    %v2428 = vpack.c.b16 %v1948, %v1940
    %v2429 = vpack.c.b16 %v1949, %v1941
    %v2430 = vpack.c.b16 %v1950, %v1942
    %v2431 = vpack.c.b16 %v1951, %v1943
    %v2432 = vpack.c.b16 %v1960, %v1952
    %v2433 = vpack.c.b16 %v1961, %v1953
    %v2434 = vpack.c.b16 %v1962, %v1954
    %v2435 = vpack.c.b16 %v1963, %v1955
    %v2436 = vpack.c.b16 %v1964, %v1956
    %v2437 = vpack.c.b16 %v1965, %v1957
    %v2438 = vpack.c.b16 %v1966, %v1958
    %v2439 = vpack.c.b16 %v1967, %v1959
    %v2440 = vpack.c.b16 %v1976, %v1968
    %v2441 = vpack.c.b16 %v1977, %v1969
    %v2442 = vpack.c.b16 %v1978, %v1970
    %v2443 = vpack.c.b16 %v1979, %v1971
    %v2444 = vpack.c.b16 %v1980, %v1972
    %v2445 = vpack.c.b16 %v1981, %v1973
    %v2446 = vpack.c.b16 %v1982, %v1974
    %v2447 = vpack.c.b16 %v1983, %v1975
    %v2448 = vpack.c.b16 %v1992, %v1984
    %v2449 = vpack.c.b16 %v1993, %v1985
    %v2450 = vpack.c.b16 %v1994, %v1986
    %v2451 = vpack.c.b16 %v1995, %v1987
    %v2452 = vpack.c.b16 %v1996, %v1988
    %v2453 = vpack.c.b16 %v1997, %v1989
    %v2454 = vpack.c.b16 %v1998, %v1990
    %v2455 = vpack.c.b16 %v1999, %v1991
    %v2456 = vpack.c.b16 %v2008, %v2000
    %v2457 = vpack.c.b16 %v2009, %v2001
    %v2458 = vpack.c.b16 %v2010, %v2002
    %v2459 = vpack.c.b16 %v2011, %v2003
    %v2460 = vpack.c.b16 %v2012, %v2004
    %v2461 = vpack.c.b16 %v2013, %v2005
    %v2462 = vpack.c.b16 %v2014, %v2006
    %v2463 = vpack.c.b16 %v2015, %v2007
    %2912 = vmatprep.subr.bf16.mxu0 %v2017
    %2913 = vmatpush1.bf16.msra.mxu0 %v2016
    %2914 = vmatprep.subr.bf16.mxu0 %v2025
    %2915 = vmatpush1.bf16.msra.mxu0 %v2024
    %2916 = vmatprep.subr.bf16.mxu0 %v2033
    %2917 = vmatpush1.bf16.msra.mxu0 %v2032
    %2918 = vmatprep.subr.bf16.mxu0 %v2041
    %2919 = vmatpush1.bf16.msra.mxu0 %v2040
    %2920 = vmatprep.subr.bf16.mxu0 %v2049
    %2921 = vmatpush1.bf16.msra.mxu0 %v2048
    %2922 = vmatprep.subr.bf16.mxu0 %v2057
    %2923 = vmatpush1.bf16.msra.mxu0 %v2056
    %2924 = vmatprep.subr.bf16.mxu0 %v2065
    %2925 = vmatpush1.bf16.msra.mxu0 %v2064
    %2926 = vmatprep.subr.bf16.mxu0 %v2073
    %2927 = vmatpush1.bf16.msra.mxu0 %v2072
    %2928 = vmatprep.subr.bf16.mxu0 %v2081
    %2929 = vmatpush1.bf16.msra.mxu0 %v2080
    %2930 = vmatprep.subr.bf16.mxu0 %v2089
    %2931 = vmatpush1.bf16.msra.mxu0 %v2088
    %2932 = vmatprep.subr.bf16.mxu0 %v2097
    %2933 = vmatpush1.bf16.msra.mxu0 %v2096
    %2934 = vmatprep.subr.bf16.mxu0 %v2105
    %2935 = vmatpush1.bf16.msra.mxu0 %v2104
    %2936 = vmatprep.subr.bf16.mxu0 %v2113
    %2937 = vmatpush1.bf16.msra.mxu0 %v2112
    %2938 = vmatprep.subr.bf16.mxu0 %v2121
    %2939 = vmatpush1.bf16.msra.mxu0 %v2120
    %2940 = vmatprep.subr.bf16.mxu0 %v2129
    %2941 = vmatpush1.bf16.msra.mxu0 %v2128
    %2942 = vmatprep.subr.bf16.mxu0 %v2137
    %2943 = vmatpush1.bf16.msra.mxu0 %v2136
    %2944 = vmatprep.mubr.bf16.mxu0 %v176
    %2945 = vmatmul.mubr.bf16.gmra.mrb[0].mxu0 %v175
    %v2946 = vpop.f32.mrb[0].mxu0
    %v2947 = vadd.f32 %v635, %v2946
    %v2948 = vpop.f32.mrb[0].mxu0
    %v2949 = vadd.f32 %v639, %v2948
    %v2950 = vpop.f32.mrb[0].mxu0
    %v2951 = vpop.f32.mrb[0].mxu0
    %2952 = vdwg.mxu0
    %2953 = vmatprep.subr.bf16.mxu0 %v2145
    %2954 = vmatpush1.bf16.msra.mxu0 %v2144
    %2955 = vmatprep.subr.bf16.mxu0 %v2153
    %2956 = vmatpush1.bf16.msra.mxu0 %v2152
    %2957 = vmatprep.subr.bf16.mxu0 %v2161
    %2958 = vmatpush1.bf16.msra.mxu0 %v2160
    %2959 = vmatprep.subr.bf16.mxu0 %v2169
    %2960 = vmatpush1.bf16.msra.mxu0 %v2168
    %2961 = vmatprep.subr.bf16.mxu0 %v2177
    %2962 = vmatpush1.bf16.msra.mxu0 %v2176
    %2963 = vmatprep.subr.bf16.mxu0 %v2185
    %2964 = vmatpush1.bf16.msra.mxu0 %v2184
    %2965 = vmatprep.subr.bf16.mxu0 %v2193
    %2966 = vmatpush1.bf16.msra.mxu0 %v2192
    %2967 = vmatprep.subr.bf16.mxu0 %v2201
    %2968 = vmatpush1.bf16.msra.mxu0 %v2200
    %2969 = vmatprep.subr.bf16.mxu0 %v2209
    %2970 = vmatpush1.bf16.msra.mxu0 %v2208
    %2971 = vmatprep.subr.bf16.mxu0 %v2217
    %2972 = vmatpush1.bf16.msra.mxu0 %v2216
    %2973 = vmatprep.subr.bf16.mxu0 %v2225
    %2974 = vmatpush1.bf16.msra.mxu0 %v2224
    %2975 = vmatprep.subr.bf16.mxu0 %v2233
    %2976 = vmatpush1.bf16.msra.mxu0 %v2232
    %2977 = vmatprep.subr.bf16.mxu0 %v2241
    %2978 = vmatpush1.bf16.msra.mxu0 %v2240
    %2979 = vmatprep.subr.bf16.mxu0 %v2249
    %2980 = vmatpush1.bf16.msra.mxu0 %v2248
    %2981 = vmatprep.subr.bf16.mxu0 %v2257
    %2982 = vmatpush1.bf16.msra.mxu0 %v2256
    %2983 = vmatprep.subr.bf16.mxu0 %v2265
    %2984 = vmatpush1.bf16.msra.mxu0 %v2264
    %2985 = vmatprep.mubr.bf16.mxu0 %v178
    %2986 = vmatmul.mubr.bf16.gmra.mrb[0].mxu0 %v177
    %v2987 = vpop.f32.mrb[0].mxu0
    %v2988 = vadd.f32 %v2947, %v2987
    %v2989 = vpop.f32.mrb[0].mxu0
    %v2990 = vadd.f32 %v2949, %v2989
    %v2991 = vpop.f32.mrb[0].mxu0
    %v2992 = vpop.f32.mrb[0].mxu0
    %2993 = vdwg.mxu0
    %2994 = vmatprep.subr.bf16.mxu0 %v2273
    %2995 = vmatpush1.bf16.msra.mxu0 %v2272
    %2996 = vmatprep.subr.bf16.mxu0 %v2281
    %2997 = vmatpush1.bf16.msra.mxu0 %v2280
    %2998 = vmatprep.subr.bf16.mxu0 %v2289
    %2999 = vmatpush1.bf16.msra.mxu0 %v2288
    %3000 = vmatprep.subr.bf16.mxu0 %v2297
    %3001 = vmatpush1.bf16.msra.mxu0 %v2296
    %3002 = vmatprep.subr.bf16.mxu0 %v2305
    %3003 = vmatpush1.bf16.msra.mxu0 %v2304
    %3004 = vmatprep.subr.bf16.mxu0 %v2313
    %3005 = vmatpush1.bf16.msra.mxu0 %v2312
    %3006 = vmatprep.subr.bf16.mxu0 %v2321
    %3007 = vmatpush1.bf16.msra.mxu0 %v2320
    %3008 = vmatprep.subr.bf16.mxu0 %v2329
    %3009 = vmatpush1.bf16.msra.mxu0 %v2328
    %3010 = vmatprep.subr.bf16.mxu0 %v2337
    %3011 = vmatpush1.bf16.msra.mxu0 %v2336
    %3012 = vmatprep.subr.bf16.mxu0 %v2345
    %3013 = vmatpush1.bf16.msra.mxu0 %v2344
    %3014 = vmatprep.subr.bf16.mxu0 %v2353
    %3015 = vmatpush1.bf16.msra.mxu0 %v2352
    %3016 = vmatprep.subr.bf16.mxu0 %v2361
    %3017 = vmatpush1.bf16.msra.mxu0 %v2360
    %3018 = vmatprep.subr.bf16.mxu0 %v2369
    %3019 = vmatpush1.bf16.msra.mxu0 %v2368
    %3020 = vmatprep.subr.bf16.mxu0 %v2377
    %3021 = vmatpush1.bf16.msra.mxu0 %v2376
    %3022 = vmatprep.subr.bf16.mxu0 %v2385
    %3023 = vmatpush1.bf16.msra.mxu0 %v2384
    %3024 = vmatprep.subr.bf16.mxu0 %v2393
    %3025 = vmatpush1.bf16.msra.mxu0 %v2392
    %3026 = vmatprep.mubr.bf16.mxu0 %v180
    %3027 = vmatmul.mubr.bf16.gmra.mrb[0].mxu0 %v179
    %v3028 = vpop.f32.mrb[0].mxu0
    %v3029 = vadd.f32 %v2988, %v3028
    %v3030 = vpop.f32.mrb[0].mxu0
    %v3031 = vadd.f32 %v2990, %v3030
    %v3032 = vpop.f32.mrb[0].mxu0
    %v3033 = vpop.f32.mrb[0].mxu0
    %3034 = vdwg.mxu0
    %3035 = vmatprep.subr.bf16.mxu0 %v2401
    %3036 = vmatpush1.bf16.msra.mxu0 %v2400
    %3037 = vmatprep.subr.bf16.mxu0 %v2409
    %3038 = vmatpush1.bf16.msra.mxu0 %v2408
    %3039 = vmatprep.subr.bf16.mxu0 %v2417
    %3040 = vmatpush1.bf16.msra.mxu0 %v2416
    %3041 = vmatprep.subr.bf16.mxu0 %v2425
    %3042 = vmatpush1.bf16.msra.mxu0 %v2424
    %3043 = vmatprep.subr.bf16.mxu0 %v2433
    %3044 = vmatpush1.bf16.msra.mxu0 %v2432
    %3045 = vmatprep.subr.bf16.mxu0 %v2441
    %3046 = vmatpush1.bf16.msra.mxu0 %v2440
    %3047 = vmatprep.subr.bf16.mxu0 %v2449
    %3048 = vmatpush1.bf16.msra.mxu0 %v2448
    %3049 = vmatprep.subr.bf16.mxu0 %v2457
    %3050 = vmatpush1.bf16.msra.mxu0 %v2456
    %3051 = vmatprep.subr.bf16.mxu0 0
    %3052 = vmatpush1.bf16.msra.mxu0 0
    %3053 = vmatprep.subr.bf16.mxu0 0
    %3054 = vmatpush1.bf16.msra.mxu0 0
    %3055 = vmatprep.subr.bf16.mxu0 0
    %3056 = vmatpush1.bf16.msra.mxu0 0
    %3057 = vmatprep.subr.bf16.mxu0 0
    %3058 = vmatpush1.bf16.msra.mxu0 0
    %3059 = vmatprep.subr.bf16.mxu0 0
    %3060 = vmatpush1.bf16.msra.mxu0 0
    %3061 = vmatprep.subr.bf16.mxu0 0
    %3062 = vmatpush1.bf16.msra.mxu0 0
    %3063 = vmatprep.subr.bf16.mxu0 0
    %3064 = vmatpush1.bf16.msra.mxu0 0
    %3065 = vmatprep.subr.bf16.mxu0 0
    %3066 = vmatpush1.bf16.msra.mxu0 0
    %3067 = vmatprep.mubr.bf16.mxu0 0
    %3068 = vmatmul.mubr.bf16.gmra.mrb[0].mxu0 %v181
    %v3069 = vpop.f32.mrb[0].mxu0
    %v3070 = vadd.f32 %v3029, %v3069
    %v3071 = vpop.f32.mrb[0].mxu0
    %v3072 = vadd.f32 %v3031, %v3071
    %v3073 = vpop.f32.mrb[0].mxu0
    %v3074 = vpop.f32.mrb[0].mxu0
    %3075 = vdwg.mxu0
    %3076 = vmatprep.subr.bf16.mxu0 %v2019
    %3077 = vmatpush1.bf16.msra.mxu0 %v2018
    %3078 = vmatprep.subr.bf16.mxu0 %v2027
    %3079 = vmatpush1.bf16.msra.mxu0 %v2026
    %3080 = vmatprep.subr.bf16.mxu0 %v2035
    %3081 = vmatpush1.bf16.msra.mxu0 %v2034
    %3082 = vmatprep.subr.bf16.mxu0 %v2043
    %3083 = vmatpush1.bf16.msra.mxu0 %v2042
    %3084 = vmatprep.subr.bf16.mxu0 %v2051
    %3085 = vmatpush1.bf16.msra.mxu0 %v2050
    %3086 = vmatprep.subr.bf16.mxu0 %v2059
    %3087 = vmatpush1.bf16.msra.mxu0 %v2058
    %3088 = vmatprep.subr.bf16.mxu0 %v2067
    %3089 = vmatpush1.bf16.msra.mxu0 %v2066
    %3090 = vmatprep.subr.bf16.mxu0 %v2075
    %3091 = vmatpush1.bf16.msra.mxu0 %v2074
    %3092 = vmatprep.subr.bf16.mxu0 %v2083
    %3093 = vmatpush1.bf16.msra.mxu0 %v2082
    %3094 = vmatprep.subr.bf16.mxu0 %v2091
    %3095 = vmatpush1.bf16.msra.mxu0 %v2090
    %3096 = vmatprep.subr.bf16.mxu0 %v2099
    %3097 = vmatpush1.bf16.msra.mxu0 %v2098
    %3098 = vmatprep.subr.bf16.mxu0 %v2107
    %3099 = vmatpush1.bf16.msra.mxu0 %v2106
    %3100 = vmatprep.subr.bf16.mxu0 %v2115
    %3101 = vmatpush1.bf16.msra.mxu0 %v2114
    %3102 = vmatprep.subr.bf16.mxu0 %v2123
    %3103 = vmatpush1.bf16.msra.mxu0 %v2122
    %3104 = vmatprep.subr.bf16.mxu0 %v2131
    %3105 = vmatpush1.bf16.msra.mxu0 %v2130
    %3106 = vmatprep.subr.bf16.mxu0 %v2139
    %3107 = vmatpush1.bf16.msra.mxu0 %v2138
    %3108 = vmatprep.mubr.bf16.mxu0 %v176
    %3109 = vmatmul.mubr.bf16.gmra.mrb[0].mxu0 %v175
    %v3110 = vpop.f32.mrb[0].mxu0
    %v3111 = vadd.f32 %v643, %v3110
    %v3112 = vpop.f32.mrb[0].mxu0
    %v3113 = vadd.f32 %v647, %v3112
    %v3114 = vpop.f32.mrb[0].mxu0
    %v3115 = vpop.f32.mrb[0].mxu0
    %3116 = vdwg.mxu0
    %3117 = vmatprep.subr.bf16.mxu0 %v2147
    %3118 = vmatpush1.bf16.msra.mxu0 %v2146
    %3119 = vmatprep.subr.bf16.mxu0 %v2155
    %3120 = vmatpush1.bf16.msra.mxu0 %v2154
    %3121 = vmatprep.subr.bf16.mxu0 %v2163
    %3122 = vmatpush1.bf16.msra.mxu0 %v2162
    %3123 = vmatprep.subr.bf16.mxu0 %v2171
    %3124 = vmatpush1.bf16.msra.mxu0 %v2170
    %3125 = vmatprep.subr.bf16.mxu0 %v2179
    %3126 = vmatpush1.bf16.msra.mxu0 %v2178
    %3127 = vmatprep.subr.bf16.mxu0 %v2187
    %3128 = vmatpush1.bf16.msra.mxu0 %v2186
    %3129 = vmatprep.subr.bf16.mxu0 %v2195
    %3130 = vmatpush1.bf16.msra.mxu0 %v2194
    %3131 = vmatprep.subr.bf16.mxu0 %v2203
    %3132 = vmatpush1.bf16.msra.mxu0 %v2202
    %3133 = vmatprep.subr.bf16.mxu0 %v2211
    %3134 = vmatpush1.bf16.msra.mxu0 %v2210
    %3135 = vmatprep.subr.bf16.mxu0 %v2219
    %3136 = vmatpush1.bf16.msra.mxu0 %v2218
    %3137 = vmatprep.subr.bf16.mxu0 %v2227
    %3138 = vmatpush1.bf16.msra.mxu0 %v2226
    %3139 = vmatprep.subr.bf16.mxu0 %v2235
    %3140 = vmatpush1.bf16.msra.mxu0 %v2234
    %3141 = vmatprep.subr.bf16.mxu0 %v2243
    %3142 = vmatpush1.bf16.msra.mxu0 %v2242
    %3143 = vmatprep.subr.bf16.mxu0 %v2251
    %3144 = vmatpush1.bf16.msra.mxu0 %v2250
    %3145 = vmatprep.subr.bf16.mxu0 %v2259
    %3146 = vmatpush1.bf16.msra.mxu0 %v2258
    %3147 = vmatprep.subr.bf16.mxu0 %v2267
    %3148 = vmatpush1.bf16.msra.mxu0 %v2266
    %3149 = vmatprep.mubr.bf16.mxu0 %v178
    %3150 = vmatmul.mubr.bf16.gmra.mrb[0].mxu0 %v177
    %v3151 = vpop.f32.mrb[0].mxu0
    %v3152 = vadd.f32 %v3111, %v3151
    %v3153 = vpop.f32.mrb[0].mxu0
    %v3154 = vadd.f32 %v3113, %v3153
    %v3155 = vpop.f32.mrb[0].mxu0
    %v3156 = vpop.f32.mrb[0].mxu0
    %3157 = vdwg.mxu0
    %3158 = vmatprep.subr.bf16.mxu0 %v2275
    %3159 = vmatpush1.bf16.msra.mxu0 %v2274
    %3160 = vmatprep.subr.bf16.mxu0 %v2283
    %3161 = vmatpush1.bf16.msra.mxu0 %v2282
    %3162 = vmatprep.subr.bf16.mxu0 %v2291
    %3163 = vmatpush1.bf16.msra.mxu0 %v2290
    %3164 = vmatprep.subr.bf16.mxu0 %v2299
    %3165 = vmatpush1.bf16.msra.mxu0 %v2298
    %3166 = vmatprep.subr.bf16.mxu0 %v2307
    %3167 = vmatpush1.bf16.msra.mxu0 %v2306
    %3168 = vmatprep.subr.bf16.mxu0 %v2315
    %3169 = vmatpush1.bf16.msra.mxu0 %v2314
    %3170 = vmatprep.subr.bf16.mxu0 %v2323
    %3171 = vmatpush1.bf16.msra.mxu0 %v2322
    %3172 = vmatprep.subr.bf16.mxu0 %v2331
    %3173 = vmatpush1.bf16.msra.mxu0 %v2330
    %3174 = vmatprep.subr.bf16.mxu0 %v2339
    %3175 = vmatpush1.bf16.msra.mxu0 %v2338
    %3176 = vmatprep.subr.bf16.mxu0 %v2347
    %3177 = vmatpush1.bf16.msra.mxu0 %v2346
    %3178 = vmatprep.subr.bf16.mxu0 %v2355
    %3179 = vmatpush1.bf16.msra.mxu0 %v2354
    %3180 = vmatprep.subr.bf16.mxu0 %v2363
    %3181 = vmatpush1.bf16.msra.mxu0 %v2362
    %3182 = vmatprep.subr.bf16.mxu0 %v2371
    %3183 = vmatpush1.bf16.msra.mxu0 %v2370
    %3184 = vmatprep.subr.bf16.mxu0 %v2379
    %3185 = vmatpush1.bf16.msra.mxu0 %v2378
    %3186 = vmatprep.subr.bf16.mxu0 %v2387
    %3187 = vmatpush1.bf16.msra.mxu0 %v2386
    %3188 = vmatprep.subr.bf16.mxu0 %v2395
    %3189 = vmatpush1.bf16.msra.mxu0 %v2394
    %3190 = vmatprep.mubr.bf16.mxu0 %v180
    %3191 = vmatmul.mubr.bf16.gmra.mrb[0].mxu0 %v179
    %v3192 = vpop.f32.mrb[0].mxu0
    %v3193 = vadd.f32 %v3152, %v3192
    %v3194 = vpop.f32.mrb[0].mxu0
    %v3195 = vadd.f32 %v3154, %v3194
    %v3196 = vpop.f32.mrb[0].mxu0
    %v3197 = vpop.f32.mrb[0].mxu0
    %3198 = vdwg.mxu0
    %3199 = vmatprep.subr.bf16.mxu0 %v2403
    %3200 = vmatpush1.bf16.msra.mxu0 %v2402
    %3201 = vmatprep.subr.bf16.mxu0 %v2411
    %3202 = vmatpush1.bf16.msra.mxu0 %v2410
    %3203 = vmatprep.subr.bf16.mxu0 %v2419
    %3204 = vmatpush1.bf16.msra.mxu0 %v2418
    %3205 = vmatprep.subr.bf16.mxu0 %v2427
    %3206 = vmatpush1.bf16.msra.mxu0 %v2426
    %3207 = vmatprep.subr.bf16.mxu0 %v2435
    %3208 = vmatpush1.bf16.msra.mxu0 %v2434
    %3209 = vmatprep.subr.bf16.mxu0 %v2443
    %3210 = vmatpush1.bf16.msra.mxu0 %v2442
    %3211 = vmatprep.subr.bf16.mxu0 %v2451
    %3212 = vmatpush1.bf16.msra.mxu0 %v2450
    %3213 = vmatprep.subr.bf16.mxu0 %v2459
    %3214 = vmatpush1.bf16.msra.mxu0 %v2458
    %3215 = vmatprep.subr.bf16.mxu0 0
    %3216 = vmatpush1.bf16.msra.mxu0 0
    %3217 = vmatprep.subr.bf16.mxu0 0
    %3218 = vmatpush1.bf16.msra.mxu0 0
    %3219 = vmatprep.subr.bf16.mxu0 0
    %3220 = vmatpush1.bf16.msra.mxu0 0
    %3221 = vmatprep.subr.bf16.mxu0 0
    %3222 = vmatpush1.bf16.msra.mxu0 0
    %3223 = vmatprep.subr.bf16.mxu0 0
    %3224 = vmatpush1.bf16.msra.mxu0 0
    %3225 = vmatprep.subr.bf16.mxu0 0
    %3226 = vmatpush1.bf16.msra.mxu0 0
    %3227 = vmatprep.subr.bf16.mxu0 0
    %3228 = vmatpush1.bf16.msra.mxu0 0
    %3229 = vmatprep.subr.bf16.mxu0 0
    %3230 = vmatpush1.bf16.msra.mxu0 0
    %3231 = vmatprep.mubr.bf16.mxu0 0
    %3232 = vmatmul.mubr.bf16.gmra.mrb[0].mxu0 %v181
    %v3233 = vpop.f32.mrb[0].mxu0
    %v3234 = vadd.f32 %v3193, %v3233
    %v3235 = vpop.f32.mrb[0].mxu0
    %v3236 = vadd.f32 %v3195, %v3235
    %v3237 = vpop.f32.mrb[0].mxu0
    %v3238 = vpop.f32.mrb[0].mxu0
    %3239 = vdwg.mxu0
    %3240 = vmatprep.subr.bf16.mxu0 %v2021
    %3241 = vmatpush1.bf16.msra.mxu0 %v2020
    %3242 = vmatprep.subr.bf16.mxu0 %v2029
    %3243 = vmatpush1.bf16.msra.mxu0 %v2028
    %3244 = vmatprep.subr.bf16.mxu0 %v2037
    %3245 = vmatpush1.bf16.msra.mxu0 %v2036
    %3246 = vmatprep.subr.bf16.mxu0 %v2045
    %3247 = vmatpush1.bf16.msra.mxu0 %v2044
    %3248 = vmatprep.subr.bf16.mxu0 %v2053
    %3249 = vmatpush1.bf16.msra.mxu0 %v2052
    %3250 = vmatprep.subr.bf16.mxu0 %v2061
    %3251 = vmatpush1.bf16.msra.mxu0 %v2060
    %3252 = vmatprep.subr.bf16.mxu0 %v2069
    %3253 = vmatpush1.bf16.msra.mxu0 %v2068
    %3254 = vmatprep.subr.bf16.mxu0 %v2077
    %3255 = vmatpush1.bf16.msra.mxu0 %v2076
    %3256 = vmatprep.subr.bf16.mxu0 %v2085
    %3257 = vmatpush1.bf16.msra.mxu0 %v2084
    %3258 = vmatprep.subr.bf16.mxu0 %v2093
    %3259 = vmatpush1.bf16.msra.mxu0 %v2092
    %3260 = vmatprep.subr.bf16.mxu0 %v2101
    %3261 = vmatpush1.bf16.msra.mxu0 %v2100
    %3262 = vmatprep.subr.bf16.mxu0 %v2109
    %3263 = vmatpush1.bf16.msra.mxu0 %v2108
    %3264 = vmatprep.subr.bf16.mxu0 %v2117
    %3265 = vmatpush1.bf16.msra.mxu0 %v2116
    %3266 = vmatprep.subr.bf16.mxu0 %v2125
    %3267 = vmatpush1.bf16.msra.mxu0 %v2124
    %3268 = vmatprep.subr.bf16.mxu0 %v2133
    %3269 = vmatpush1.bf16.msra.mxu0 %v2132
    %3270 = vmatprep.subr.bf16.mxu0 %v2141
    %3271 = vmatpush1.bf16.msra.mxu0 %v2140
    %3272 = vmatprep.mubr.bf16.mxu0 %v176
    %3273 = vmatmul.mubr.bf16.gmra.mrb[0].mxu0 %v175
    %v3274 = vpop.f32.mrb[0].mxu0
    %v3275 = vadd.f32 %v651, %v3274
    %v3276 = vpop.f32.mrb[0].mxu0
    %v3277 = vadd.f32 %v655, %v3276
    %v3278 = vpop.f32.mrb[0].mxu0
    %v3279 = vpop.f32.mrb[0].mxu0
    %3280 = vdwg.mxu0
    %3281 = vmatprep.subr.bf16.mxu0 %v2149
    %3282 = vmatpush1.bf16.msra.mxu0 %v2148
    %3283 = vmatprep.subr.bf16.mxu0 %v2157
    %3284 = vmatpush1.bf16.msra.mxu0 %v2156
    %3285 = vmatprep.subr.bf16.mxu0 %v2165
    %3286 = vmatpush1.bf16.msra.mxu0 %v2164
    %3287 = vmatprep.subr.bf16.mxu0 %v2173
    %3288 = vmatpush1.bf16.msra.mxu0 %v2172
    %3289 = vmatprep.subr.bf16.mxu0 %v2181
    %3290 = vmatpush1.bf16.msra.mxu0 %v2180
    %3291 = vmatprep.subr.bf16.mxu0 %v2189
    %3292 = vmatpush1.bf16.msra.mxu0 %v2188
    %3293 = vmatprep.subr.bf16.mxu0 %v2197
    %3294 = vmatpush1.bf16.msra.mxu0 %v2196
    %3295 = vmatprep.subr.bf16.mxu0 %v2205
    %3296 = vmatpush1.bf16.msra.mxu0 %v2204
    %3297 = vmatprep.subr.bf16.mxu0 %v2213
    %3298 = vmatpush1.bf16.msra.mxu0 %v2212
    %3299 = vmatprep.subr.bf16.mxu0 %v2221
    %3300 = vmatpush1.bf16.msra.mxu0 %v2220
    %3301 = vmatprep.subr.bf16.mxu0 %v2229
    %3302 = vmatpush1.bf16.msra.mxu0 %v2228
    %3303 = vmatprep.subr.bf16.mxu0 %v2237
    %3304 = vmatpush1.bf16.msra.mxu0 %v2236
    %3305 = vmatprep.subr.bf16.mxu0 %v2245
    %3306 = vmatpush1.bf16.msra.mxu0 %v2244
    %3307 = vmatprep.subr.bf16.mxu0 %v2253
    %3308 = vmatpush1.bf16.msra.mxu0 %v2252
    %3309 = vmatprep.subr.bf16.mxu0 %v2261
    %3310 = vmatpush1.bf16.msra.mxu0 %v2260
    %3311 = vmatprep.subr.bf16.mxu0 %v2269
    %3312 = vmatpush1.bf16.msra.mxu0 %v2268
    %3313 = vmatprep.mubr.bf16.mxu0 %v178
    %3314 = vmatmul.mubr.bf16.gmra.mrb[0].mxu0 %v177
    %v3315 = vpop.f32.mrb[0].mxu0
    %v3316 = vadd.f32 %v3275, %v3315
    %v3317 = vpop.f32.mrb[0].mxu0
    %v3318 = vadd.f32 %v3277, %v3317
    %v3319 = vpop.f32.mrb[0].mxu0
    %v3320 = vpop.f32.mrb[0].mxu0
    %3321 = vdwg.mxu0
    %3322 = vmatprep.subr.bf16.mxu0 %v2277
    %3323 = vmatpush1.bf16.msra.mxu0 %v2276
    %3324 = vmatprep.subr.bf16.mxu0 %v2285
    %3325 = vmatpush1.bf16.msra.mxu0 %v2284
    %3326 = vmatprep.subr.bf16.mxu0 %v2293
    %3327 = vmatpush1.bf16.msra.mxu0 %v2292
    %3328 = vmatprep.subr.bf16.mxu0 %v2301
    %3329 = vmatpush1.bf16.msra.mxu0 %v2300
    %3330 = vmatprep.subr.bf16.mxu0 %v2309
    %3331 = vmatpush1.bf16.msra.mxu0 %v2308
    %3332 = vmatprep.subr.bf16.mxu0 %v2317
    %3333 = vmatpush1.bf16.msra.mxu0 %v2316
    %3334 = vmatprep.subr.bf16.mxu0 %v2325
    %3335 = vmatpush1.bf16.msra.mxu0 %v2324
    %3336 = vmatprep.subr.bf16.mxu0 %v2333
    %3337 = vmatpush1.bf16.msra.mxu0 %v2332
    %3338 = vmatprep.subr.bf16.mxu0 %v2341
    %3339 = vmatpush1.bf16.msra.mxu0 %v2340
    %3340 = vmatprep.subr.bf16.mxu0 %v2349
    %3341 = vmatpush1.bf16.msra.mxu0 %v2348
    %3342 = vmatprep.subr.bf16.mxu0 %v2357
    %3343 = vmatpush1.bf16.msra.mxu0 %v2356
    %3344 = vmatprep.subr.bf16.mxu0 %v2365
    %3345 = vmatpush1.bf16.msra.mxu0 %v2364
    %3346 = vmatprep.subr.bf16.mxu0 %v2373
    %3347 = vmatpush1.bf16.msra.mxu0 %v2372
    %3348 = vmatprep.subr.bf16.mxu0 %v2381
    %3349 = vmatpush1.bf16.msra.mxu0 %v2380
    %3350 = vmatprep.subr.bf16.mxu0 %v2389
    %3351 = vmatpush1.bf16.msra.mxu0 %v2388
    %3352 = vmatprep.subr.bf16.mxu0 %v2397
    %3353 = vmatpush1.bf16.msra.mxu0 %v2396
    %3354 = vmatprep.mubr.bf16.mxu0 %v180
    %3355 = vmatmul.mubr.bf16.gmra.mrb[0].mxu0 %v179
    %v3356 = vpop.f32.mrb[0].mxu0
    %v3357 = vadd.f32 %v3316, %v3356
    %v3358 = vpop.f32.mrb[0].mxu0
    %v3359 = vadd.f32 %v3318, %v3358
    %v3360 = vpop.f32.mrb[0].mxu0
    %v3361 = vpop.f32.mrb[0].mxu0
    %3362 = vdwg.mxu0
    %3363 = vmatprep.subr.bf16.mxu0 %v2405
    %3364 = vmatpush1.bf16.msra.mxu0 %v2404
    %3365 = vmatprep.subr.bf16.mxu0 %v2413
    %3366 = vmatpush1.bf16.msra.mxu0 %v2412
    %3367 = vmatprep.subr.bf16.mxu0 %v2421
    %3368 = vmatpush1.bf16.msra.mxu0 %v2420
    %3369 = vmatprep.subr.bf16.mxu0 %v2429
    %3370 = vmatpush1.bf16.msra.mxu0 %v2428
    %3371 = vmatprep.subr.bf16.mxu0 %v2437
    %3372 = vmatpush1.bf16.msra.mxu0 %v2436
    %3373 = vmatprep.subr.bf16.mxu0 %v2445
    %3374 = vmatpush1.bf16.msra.mxu0 %v2444
    %3375 = vmatprep.subr.bf16.mxu0 %v2453
    %3376 = vmatpush1.bf16.msra.mxu0 %v2452
    %3377 = vmatprep.subr.bf16.mxu0 %v2461
    %3378 = vmatpush1.bf16.msra.mxu0 %v2460
    %3379 = vmatprep.subr.bf16.mxu0 0
    %3380 = vmatpush1.bf16.msra.mxu0 0
    %3381 = vmatprep.subr.bf16.mxu0 0
    %3382 = vmatpush1.bf16.msra.mxu0 0
    %3383 = vmatprep.subr.bf16.mxu0 0
    %3384 = vmatpush1.bf16.msra.mxu0 0
    %3385 = vmatprep.subr.bf16.mxu0 0
    %3386 = vmatpush1.bf16.msra.mxu0 0
    %3387 = vmatprep.subr.bf16.mxu0 0
    %3388 = vmatpush1.bf16.msra.mxu0 0
    %3389 = vmatprep.subr.bf16.mxu0 0
    %3390 = vmatpush1.bf16.msra.mxu0 0
    %3391 = vmatprep.subr.bf16.mxu0 0
    %3392 = vmatpush1.bf16.msra.mxu0 0
    %3393 = vmatprep.subr.bf16.mxu0 0
    %3394 = vmatpush1.bf16.msra.mxu0 0
    %3395 = vmatprep.mubr.bf16.mxu0 0
    %3396 = vmatmul.mubr.bf16.gmra.mrb[0].mxu0 %v181
    %v3397 = vpop.f32.mrb[0].mxu0
    %v3398 = vadd.f32 %v3357, %v3397
    %v3399 = vpop.f32.mrb[0].mxu0
    %v3400 = vadd.f32 %v3359, %v3399
    %v3401 = vpop.f32.mrb[0].mxu0
    %v3402 = vpop.f32.mrb[0].mxu0
    %3403 = vdwg.mxu0
    %3404 = vmatprep.subr.bf16.mxu0 %v2023
    %3405 = vmatpush1.bf16.msra.mxu0 %v2022
    %3406 = vmatprep.subr.bf16.mxu0 %v2031
    %3407 = vmatpush1.bf16.msra.mxu0 %v2030
    %3408 = vmatprep.subr.bf16.mxu0 %v2039
    %3409 = vmatpush1.bf16.msra.mxu0 %v2038
    %3410 = vmatprep.subr.bf16.mxu0 %v2047
    %3411 = vmatpush1.bf16.msra.mxu0 %v2046
    %3412 = vmatprep.subr.bf16.mxu0 %v2055
    %3413 = vmatpush1.bf16.msra.mxu0 %v2054
    %3414 = vmatprep.subr.bf16.mxu0 %v2063
    %3415 = vmatpush1.bf16.msra.mxu0 %v2062
    %3416 = vmatprep.subr.bf16.mxu0 %v2071
    %3417 = vmatpush1.bf16.msra.mxu0 %v2070
    %3418 = vmatprep.subr.bf16.mxu0 %v2079
    %3419 = vmatpush1.bf16.msra.mxu0 %v2078
    %3420 = vmatprep.subr.bf16.mxu0 %v2087
    %3421 = vmatpush1.bf16.msra.mxu0 %v2086
    %3422 = vmatprep.subr.bf16.mxu0 %v2095
    %3423 = vmatpush1.bf16.msra.mxu0 %v2094
    %3424 = vmatprep.subr.bf16.mxu0 %v2103
    %3425 = vmatpush1.bf16.msra.mxu0 %v2102
    %3426 = vmatprep.subr.bf16.mxu0 %v2111
    %3427 = vmatpush1.bf16.msra.mxu0 %v2110
    %3428 = vmatprep.subr.bf16.mxu0 %v2119
    %3429 = vmatpush1.bf16.msra.mxu0 %v2118
    %3430 = vmatprep.subr.bf16.mxu0 %v2127
    %3431 = vmatpush1.bf16.msra.mxu0 %v2126
    %3432 = vmatprep.subr.bf16.mxu0 %v2135
    %3433 = vmatpush1.bf16.msra.mxu0 %v2134
    %3434 = vmatprep.subr.bf16.mxu0 %v2143
    %3435 = vmatpush1.bf16.msra.mxu0 %v2142
    %3436 = vmatprep.mubr.bf16.mxu0 %v176
    %3437 = vmatmul.mubr.bf16.gmra.mrb[0].mxu0 %v175
    %v3438 = vpop.f32.mrb[0].mxu0
    %v3439 = vadd.f32 %v659, %v3438
    %v3440 = vpop.f32.mrb[0].mxu0
    %v3441 = vadd.f32 %v663, %v3440
    %v3442 = vpop.f32.mrb[0].mxu0
    %v3443 = vpop.f32.mrb[0].mxu0
    %3444 = vdwg.mxu0
    %3445 = vmatprep.subr.bf16.mxu0 %v2151
    %3446 = vmatpush1.bf16.msra.mxu0 %v2150
    %3447 = vmatprep.subr.bf16.mxu0 %v2159
    %3448 = vmatpush1.bf16.msra.mxu0 %v2158
    %3449 = vmatprep.subr.bf16.mxu0 %v2167
    %3450 = vmatpush1.bf16.msra.mxu0 %v2166
    %3451 = vmatprep.subr.bf16.mxu0 %v2175
    %3452 = vmatpush1.bf16.msra.mxu0 %v2174
    %3453 = vmatprep.subr.bf16.mxu0 %v2183
    %3454 = vmatpush1.bf16.msra.mxu0 %v2182
    %3455 = vmatprep.subr.bf16.mxu0 %v2191
    %3456 = vmatpush1.bf16.msra.mxu0 %v2190
    %3457 = vmatprep.subr.bf16.mxu0 %v2199
    %3458 = vmatpush1.bf16.msra.mxu0 %v2198
    %3459 = vmatprep.subr.bf16.mxu0 %v2207
    %3460 = vmatpush1.bf16.msra.mxu0 %v2206
    %3461 = vmatprep.subr.bf16.mxu0 %v2215
    %3462 = vmatpush1.bf16.msra.mxu0 %v2214
    %3463 = vmatprep.subr.bf16.mxu0 %v2223
    %3464 = vmatpush1.bf16.msra.mxu0 %v2222
    %3465 = vmatprep.subr.bf16.mxu0 %v2231
    %3466 = vmatpush1.bf16.msra.mxu0 %v2230
    %3467 = vmatprep.subr.bf16.mxu0 %v2239
    %3468 = vmatpush1.bf16.msra.mxu0 %v2238
    %3469 = vmatprep.subr.bf16.mxu0 %v2247
    %3470 = vmatpush1.bf16.msra.mxu0 %v2246
    %3471 = vmatprep.subr.bf16.mxu0 %v2255
    %3472 = vmatpush1.bf16.msra.mxu0 %v2254
    %3473 = vmatprep.subr.bf16.mxu0 %v2263
    %3474 = vmatpush1.bf16.msra.mxu0 %v2262
    %3475 = vmatprep.subr.bf16.mxu0 %v2271
    %3476 = vmatpush1.bf16.msra.mxu0 %v2270
    %3477 = vmatprep.mubr.bf16.mxu0 %v178
    %3478 = vmatmul.mubr.bf16.gmra.mrb[0].mxu0 %v177
    %v3479 = vpop.f32.mrb[0].mxu0
    %v3480 = vadd.f32 %v3439, %v3479
    %v3481 = vpop.f32.mrb[0].mxu0
    %v3482 = vadd.f32 %v3441, %v3481
    %v3483 = vpop.f32.mrb[0].mxu0
    %v3484 = vpop.f32.mrb[0].mxu0
    %3485 = vdwg.mxu0
    %3486 = vmatprep.subr.bf16.mxu0 %v2279
    %3487 = vmatpush1.bf16.msra.mxu0 %v2278
    %3488 = vmatprep.subr.bf16.mxu0 %v2287
    %3489 = vmatpush1.bf16.msra.mxu0 %v2286
    %3490 = vmatprep.subr.bf16.mxu0 %v2295
    %3491 = vmatpush1.bf16.msra.mxu0 %v2294
    %3492 = vmatprep.subr.bf16.mxu0 %v2303
    %3493 = vmatpush1.bf16.msra.mxu0 %v2302
    %3494 = vmatprep.subr.bf16.mxu0 %v2311
    %3495 = vmatpush1.bf16.msra.mxu0 %v2310
    %3496 = vmatprep.subr.bf16.mxu0 %v2319
    %3497 = vmatpush1.bf16.msra.mxu0 %v2318
    %3498 = vmatprep.subr.bf16.mxu0 %v2327
    %3499 = vmatpush1.bf16.msra.mxu0 %v2326
    %3500 = vmatprep.subr.bf16.mxu0 %v2335
    %3501 = vmatpush1.bf16.msra.mxu0 %v2334
    %3502 = vmatprep.subr.bf16.mxu0 %v2343
    %3503 = vmatpush1.bf16.msra.mxu0 %v2342
    %3504 = vmatprep.subr.bf16.mxu0 %v2351
    %3505 = vmatpush1.bf16.msra.mxu0 %v2350
    %3506 = vmatprep.subr.bf16.mxu0 %v2359
    %3507 = vmatpush1.bf16.msra.mxu0 %v2358
    %3508 = vmatprep.subr.bf16.mxu0 %v2367
    %3509 = vmatpush1.bf16.msra.mxu0 %v2366
    %3510 = vmatprep.subr.bf16.mxu0 %v2375
    %3511 = vmatpush1.bf16.msra.mxu0 %v2374
    %3512 = vmatprep.subr.bf16.mxu0 %v2383
    %3513 = vmatpush1.bf16.msra.mxu0 %v2382
    %3514 = vmatprep.subr.bf16.mxu0 %v2391
    %3515 = vmatpush1.bf16.msra.mxu0 %v2390
    %3516 = vmatprep.subr.bf16.mxu0 %v2399
    %3517 = vmatpush1.bf16.msra.mxu0 %v2398
    %3518 = vmatprep.mubr.bf16.mxu0 %v180
    %3519 = vmatmul.mubr.bf16.gmra.mrb[0].mxu0 %v179
    %v3520 = vpop.f32.mrb[0].mxu0
    %v3521 = vadd.f32 %v3480, %v3520
    %v3522 = vpop.f32.mrb[0].mxu0
    %v3523 = vadd.f32 %v3482, %v3522
    %v3524 = vpop.f32.mrb[0].mxu0
    %v3525 = vpop.f32.mrb[0].mxu0
    %3526 = vdwg.mxu0
    %3527 = vmatprep.subr.bf16.mxu0 %v2407
    %3528 = vmatpush1.bf16.msra.mxu0 %v2406
    %3529 = vmatprep.subr.bf16.mxu0 %v2415
    %3530 = vmatpush1.bf16.msra.mxu0 %v2414
    %3531 = vmatprep.subr.bf16.mxu0 %v2423
    %3532 = vmatpush1.bf16.msra.mxu0 %v2422
    %3533 = vmatprep.subr.bf16.mxu0 %v2431
    %3534 = vmatpush1.bf16.msra.mxu0 %v2430
    %3535 = vmatprep.subr.bf16.mxu0 %v2439
    %3536 = vmatpush1.bf16.msra.mxu0 %v2438
    %3537 = vmatprep.subr.bf16.mxu0 %v2447
    %3538 = vmatpush1.bf16.msra.mxu0 %v2446
    %3539 = vmatprep.subr.bf16.mxu0 %v2455
    %3540 = vmatpush1.bf16.msra.mxu0 %v2454
    %3541 = vmatprep.subr.bf16.mxu0 %v2463
    %3542 = vmatpush1.bf16.msra.mxu0 %v2462
    %3543 = vmatprep.subr.bf16.mxu0 0
    %3544 = vmatpush1.bf16.msra.mxu0 0
    %3545 = vmatprep.subr.bf16.mxu0 0
    %3546 = vmatpush1.bf16.msra.mxu0 0
    %3547 = vmatprep.subr.bf16.mxu0 0
    %3548 = vmatpush1.bf16.msra.mxu0 0
    %3549 = vmatprep.subr.bf16.mxu0 0
    %3550 = vmatpush1.bf16.msra.mxu0 0
    %3551 = vmatprep.subr.bf16.mxu0 0
    %3552 = vmatpush1.bf16.msra.mxu0 0
    %3553 = vmatprep.subr.bf16.mxu0 0
    %3554 = vmatpush1.bf16.msra.mxu0 0
    %3555 = vmatprep.subr.bf16.mxu0 0
    %3556 = vmatpush1.bf16.msra.mxu0 0
    %3557 = vmatprep.subr.bf16.mxu0 0
    %3558 = vmatpush1.bf16.msra.mxu0 0
    %3559 = vmatprep.mubr.bf16.mxu0 0
    %3560 = vmatmul.mubr.bf16.gmra.mrb[0].mxu0 %v181
    %v3561 = vpop.f32.mrb[0].mxu0
    %v3562 = vadd.f32 %v3521, %v3561
    %v3563 = vpop.f32.mrb[0].mxu0
    %v3564 = vadd.f32 %v3523, %v3563
    %v3565 = vpop.f32.mrb[0].mxu0
    %v3566 = vpop.f32.mrb[0].mxu0
    %3567 = vdwg.mxu0
    %vm3568 = vcmp.gt.f32.partialorder %v3070, 0.0
    %vm3569 = vcmp.gt.f32.partialorder %v3072, 0.0
    %vm3570 = vcmp.gt.f32.partialorder %v3234, 0.0
    %vm3571 = vcmp.gt.f32.partialorder %v3236, 0.0
    %vm3572 = vcmp.gt.f32.partialorder %v3398, 0.0
    %vm3573 = vcmp.gt.f32.partialorder %v3400, 0.0
    %vm3574 = vcmp.gt.f32.partialorder %v3562, 0.0
    %vm3575 = vcmp.gt.f32.partialorder %v3564, 0.0
    %v3576 = vmul.f32 %v3070, 0.2
    %v3577 = vmul.f32 %v3072, 0.2
    %v3578 = vmul.f32 %v3234, 0.2
    %v3579 = vmul.f32 %v3236, 0.2
    %v3580 = vmul.f32 %v3398, 0.2
    %v3581 = vmul.f32 %v3400, 0.2
    %v3582 = vmul.f32 %v3562, 0.2
    %v3583 = vmul.f32 %v3564, 0.2
    %v3584 = vsel %vm3568, %v3070, %v3576
    %v3585 = vsel %vm3569, %v3072, %v3577
    %v3586 = vsel %vm3570, %v3234, %v3578
    %v3587 = vsel %vm3571, %v3236, %v3579
    %v3588 = vsel %vm3572, %v3398, %v3580
    %v3589 = vsel %vm3573, %v3400, %v3581
    %v3590 = vsel %vm3574, %v3562, %v3582
    %v3591 = vsel %vm3575, %v3564, %v3583
    %v3592 = vld [vmem:[%s1] sm:$0xff]
    %v3593 = vunpack.c.l.bf16 %v3592
    %v3594 = vunpack.c.h.bf16 %v3592
    %v3595 = vmul.f32 %v3593, 1.4285715
    %v3596 = vmul.f32 %v3594, 1.4285715
    %v3599 = vcombine.high %v3595, %v3595
    %v3601 = vunpack.c.l.s4 1983009808
    %v3602 = vunpack.c.0.s8 %v3601
    %v3603 = vlaneseq
    %v3604 = vshrl.u32 %v3603, 7
    %v3605 = vsub.s32 %v3602, %v3604
    %v3606 = vrot.slane %v3595, %v3605
    %v3608 = vunpack.c.l.s4 1983009808
    %v3609 = vunpack.c.0.s8 %v3608
    %v3610 = vlaneseq
    %v3611 = vshrl.u32 %v3610, 7
    %v3612 = vsub.s32 %v3609, %v3611
    %v3613 = vrot.slane %v3599, %v3612
    %v3614 = vcombine.high %v3606, %v3606
    %v3615 = vcombine.high %v3613, %v3613
    %v3616 = vcombine.high %v3596, %v3596
    %v3618 = vunpack.c.l.s4 1983009808
    %v3619 = vunpack.c.0.s8 %v3618
    %v3620 = vlaneseq
    %v3621 = vshrl.u32 %v3620, 7
    %v3622 = vsub.s32 %v3619, %v3621
    %v3623 = vrot.slane %v3596, %v3622
    %v3625 = vunpack.c.l.s4 1983009808
    %v3626 = vunpack.c.0.s8 %v3625
    %v3627 = vlaneseq
    %v3628 = vshrl.u32 %v3627, 7
    %v3629 = vsub.s32 %v3626, %v3628
    %v3630 = vrot.slane %v3616, %v3629
    %v3631 = vcombine.high %v3623, %v3623
    %v3632 = vcombine.high %v3630, %v3630
    %v3641 = vmul.f32 %v3584, %v3606
    %v3642 = vmul.f32 %v3585, %v3614
    %v3643 = vmul.f32 %v3586, %v3613
    %v3644 = vmul.f32 %v3587, %v3615
    %v3645 = vmul.f32 %v3588, %v3623
    %v3646 = vmul.f32 %v3589, %v3631
    %v3647 = vmul.f32 %v3590, %v3630
    %v3648 = vmul.f32 %v3591, %v3632
    %v3649 = vpack.c.bf16 %v3641, %v3641
    %v3650 = vpack.c.bf16 %v3642, %v3642
    %v3651 = vpack.c.bf16 %v3643, %v3643
    %v3652 = vpack.c.bf16 %v3644, %v3644
    %v3653 = vpack.c.bf16 %v3645, %v3645
    %v3654 = vpack.c.bf16 %v3646, %v3646
    %v3655 = vpack.c.bf16 %v3647, %v3647
    %v3656 = vpack.c.bf16 %v3648, %v3648
    %v3657 = vld [vmem:[#allocation7] sm:$0xff]
    %v3658 = vld [vmem:[#allocation7 + $0x8] sm:$0xff]
    %v3659 = vld [vmem:[#allocation7 + $0x10] sm:$0xff]
    %v3660 = vld [vmem:[#allocation7 + $0x18] sm:$0xff]
    %v3661 = vld [vmem:[#allocation7 + $0x20] sm:$0xff]
    %v3662 = vld [vmem:[#allocation7 + $0x28] sm:$0xff]
    %v3663 = vld [vmem:[#allocation7 + $0x30] sm:$0xff]
    %v3664 = vld [vmem:[#allocation7 + $0x38] sm:$0xff]
    %v3665 = vld [vmem:[#allocation7 + $0x40] sm:$0xff]
    %v3666 = vld [vmem:[#allocation7 + $0x48] sm:$0xff]
    %v3667 = vld [vmem:[#allocation7 + $0x50] sm:$0xff]
    %v3668 = vld [vmem:[#allocation7 + $0x58] sm:$0xff]
    %v3669 = vld [vmem:[#allocation7 + $0x60] sm:$0xff]
    %v3670 = vld [vmem:[#allocation7 + $0x68] sm:$0xff]
    %v3671 = vld [vmem:[#allocation7 + $0x70] sm:$0xff]
    %v3672 = vld [vmem:[#allocation7 + $0x78] sm:$0xff]
    %v3673 = vld [vmem:[#allocation7 + $0x80] sm:$0xff]
    %v3674 = vld [vmem:[#allocation7 + $0x88] sm:$0xff]
    %v3675 = vld [vmem:[#allocation7 + $0x90] sm:$0xff]
    %v3676 = vld [vmem:[#allocation7 + $0x98] sm:$0xff]
    %v3677 = vld [vmem:[#allocation7 + $0xa0] sm:$0xff]
    %v3678 = vld [vmem:[#allocation7 + $0xa8] sm:$0xff]
    %v3679 = vld [vmem:[#allocation7 + $0xb0] sm:$0xff]
    %v3680 = vld [vmem:[#allocation7 + $0xb8] sm:$0xff]
    %v3681 = vld [vmem:[#allocation7 + $0xc0] sm:$0xff]
    %v3682 = vld [vmem:[#allocation7 + $0xc8] sm:$0xff]
    %v3683 = vld [vmem:[#allocation7 + $0xd0] sm:$0xff]
    %v3684 = vld [vmem:[#allocation7 + $0xd8] sm:$0xff]
    %v3685 = vld [vmem:[#allocation7 + $0xe0] sm:$0xff]
    %v3686 = vld [vmem:[#allocation7 + $0xe8] sm:$0xff]
    %v3687 = vld [vmem:[#allocation7 + $0xf0] sm:$0xff]
    %v3688 = vld [vmem:[#allocation7 + $0xf8] sm:$0xff]
    %v3689 = vld [vmem:[#allocation7 + $0x100] sm:$0xff]
    %v3690 = vld [vmem:[#allocation7 + $0x108] sm:$0xff]
    %v3691 = vld [vmem:[#allocation7 + $0x110] sm:$0xff]
    %v3692 = vld [vmem:[#allocation7 + $0x118] sm:$0xff]
    %v3693 = vld [vmem:[#allocation7 + $0x120] sm:$0xff]
    %v3694 = vld [vmem:[#allocation7 + $0x128] sm:$0xff]
    %v3695 = vld [vmem:[#allocation7 + $0x130] sm:$0xff]
    %v3696 = vld [vmem:[#allocation7 + $0x138] sm:$0xff]
    %v3697 = vld [vmem:[#allocation7 + $0x140] sm:$0xff]
    %v3698 = vld [vmem:[#allocation7 + $0x148] sm:$0xff]
    %v3699 = vld [vmem:[#allocation7 + $0x150] sm:$0xff]
    %v3700 = vld [vmem:[#allocation7 + $0x158] sm:$0xff]
    %v3701 = vld [vmem:[#allocation7 + $0x160] sm:$0xff]
    %v3702 = vld [vmem:[#allocation7 + $0x168] sm:$0xff]
    %v3703 = vld [vmem:[#allocation7 + $0x170] sm:$0xff]
    %v3704 = vld [vmem:[#allocation7 + $0x178] sm:$0xff]
    %v3705 = vld [vmem:[#allocation7 + $0x180] sm:$0xff]
    %v3706 = vld [vmem:[#allocation7 + $0x188] sm:$0xff]
    %v3707 = vld [vmem:[#allocation7 + $0x190] sm:$0xff]
    %v3708 = vld [vmem:[#allocation7 + $0x198] sm:$0xff]
    %v3709 = vld [vmem:[#allocation7 + $0x1a0] sm:$0xff]
    %v3710 = vld [vmem:[#allocation7 + $0x1a8] sm:$0xff]
    %v3711 = vld [vmem:[#allocation7 + $0x1b0] sm:$0xff]
    %v3712 = vld [vmem:[#allocation7 + $0x1b8] sm:$0xff]
    %v3713 = vld [vmem:[#allocation7 + $0x1c0] sm:$0xff]
    %v3714 = vld [vmem:[#allocation7 + $0x1c8] sm:$0xff]
    %v3715 = vld [vmem:[#allocation7 + $0x1d0] sm:$0xff]
    %v3716 = vld [vmem:[#allocation7 + $0x1d8] sm:$0xff]
    %v3717 = vld [vmem:[#allocation7 + $0x1e0] sm:$0xff]
    %v3718 = vld [vmem:[#allocation7 + $0x1e8] sm:$0xff]
    %v3719 = vld [vmem:[#allocation7 + $0x1f0] sm:$0xff]
    %v3720 = vld [vmem:[#allocation7 + $0x1f8] sm:$0xff]
    %v3721 = vld [vmem:[#allocation7 + $0x200] sm:$0xff]
    %v3722 = vld [vmem:[#allocation7 + $0x208] sm:$0xff]
    %v3723 = vld [vmem:[#allocation7 + $0x210] sm:$0xff]
    %v3724 = vld [vmem:[#allocation7 + $0x218] sm:$0xff]
    %v3725 = vld [vmem:[#allocation7 + $0x220] sm:$0xff]
    %v3726 = vld [vmem:[#allocation7 + $0x228] sm:$0xff]
    %v3727 = vld [vmem:[#allocation7 + $0x230] sm:$0xff]
    %v3728 = vld [vmem:[#allocation7 + $0x238] sm:$0xff]
    %v3729 = vld [vmem:[#allocation7 + $0x240] sm:$0xff]
    %v3730 = vld [vmem:[#allocation7 + $0x248] sm:$0xff]
    %v3731 = vld [vmem:[#allocation7 + $0x250] sm:$0xff]
    %v3732 = vld [vmem:[#allocation7 + $0x258] sm:$0xff]
    %v3733 = vld [vmem:[#allocation7 + $0x260] sm:$0xff]
    %v3734 = vld [vmem:[#allocation7 + $0x268] sm:$0xff]
    %v3735 = vld [vmem:[#allocation7 + $0x270] sm:$0xff]
    %v3736 = vld [vmem:[#allocation7 + $0x278] sm:$0xff]
    %v3737 = vld [vmem:[#allocation7 + $0x280] sm:$0xff]
    %v3738 = vld [vmem:[#allocation7 + $0x288] sm:$0xff]
    %v3739 = vld [vmem:[#allocation7 + $0x290] sm:$0xff]
    %v3740 = vld [vmem:[#allocation7 + $0x298] sm:$0xff]
    %v3741 = vld [vmem:[#allocation7 + $0x2a0] sm:$0xff]
    %v3742 = vld [vmem:[#allocation7 + $0x2a8] sm:$0xff]
    %v3743 = vld [vmem:[#allocation7 + $0x2b0] sm:$0xff]
    %v3744 = vld [vmem:[#allocation7 + $0x2b8] sm:$0xff]
    %v3745 = vld [vmem:[#allocation7 + $0x2c0] sm:$0xff]
    %v3746 = vld [vmem:[#allocation7 + $0x2c8] sm:$0xff]
    %v3747 = vld [vmem:[#allocation7 + $0x2d0] sm:$0xff]
    %v3748 = vld [vmem:[#allocation7 + $0x2d8] sm:$0xff]
    %v3749 = vld [vmem:[#allocation7 + $0x2e0] sm:$0xff]
    %v3750 = vld [vmem:[#allocation7 + $0x2e8] sm:$0xff]
    %v3751 = vld [vmem:[#allocation7 + $0x2f0] sm:$0xff]
    %v3752 = vld [vmem:[#allocation7 + $0x2f8] sm:$0xff]
    %v3753 = vld [vmem:[#allocation7 + $0x300] sm:$0xff]
    %v3754 = vld [vmem:[#allocation7 + $0x308] sm:$0xff]
    %v3755 = vld [vmem:[#allocation7 + $0x310] sm:$0xff]
    %v3756 = vld [vmem:[#allocation7 + $0x318] sm:$0xff]
    %v3757 = vld [vmem:[#allocation7 + $0x320] sm:$0xff]
    %v3758 = vld [vmem:[#allocation7 + $0x328] sm:$0xff]
    %v3759 = vld [vmem:[#allocation7 + $0x330] sm:$0xff]
    %v3760 = vld [vmem:[#allocation7 + $0x338] sm:$0xff]
    %v3761 = vld [vmem:[#allocation7 + $0x340] sm:$0xff]
    %v3762 = vld [vmem:[#allocation7 + $0x348] sm:$0xff]
    %v3763 = vld [vmem:[#allocation7 + $0x350] sm:$0xff]
    %v3764 = vld [vmem:[#allocation7 + $0x358] sm:$0xff]
    %v3765 = vld [vmem:[#allocation7 + $0x360] sm:$0xff]
    %v3766 = vld [vmem:[#allocation7 + $0x368] sm:$0xff]
    %v3767 = vld [vmem:[#allocation7 + $0x370] sm:$0xff]
    %v3768 = vld [vmem:[#allocation7 + $0x378] sm:$0xff]
    %v3769 = vld [vmem:[#allocation7 + $0x380] sm:$0xff]
    %v3770 = vld [vmem:[#allocation7 + $0x388] sm:$0xff]
    %v3771 = vld [vmem:[#allocation7 + $0x390] sm:$0xff]
    %v3772 = vld [vmem:[#allocation7 + $0x398] sm:$0xff]
    %v3773 = vld [vmem:[#allocation7 + $0x3a0] sm:$0xff]
    %v3774 = vld [vmem:[#allocation7 + $0x3a8] sm:$0xff]
    %v3775 = vld [vmem:[#allocation7 + $0x3b0] sm:$0xff]
    %v3776 = vld [vmem:[#allocation7 + $0x3b8] sm:$0xff]
    %v3777 = vld [vmem:[#allocation7 + $0x3c0] sm:$0xff]
    %v3778 = vld [vmem:[#allocation7 + $0x3c8] sm:$0xff]
    %v3779 = vld [vmem:[#allocation7 + $0x3d0] sm:$0xff]
    %v3780 = vld [vmem:[#allocation7 + $0x3d8] sm:$0xff]
    %v3781 = vld [vmem:[#allocation7 + $0x3e0] sm:$0xff]
    %v3782 = vld [vmem:[#allocation7 + $0x3e8] sm:$0xff]
    %v3783 = vld [vmem:[#allocation7 + $0x3f0] sm:$0xff]
    %v3784 = vld [vmem:[#allocation7 + $0x3f8] sm:$0xff]
    %v3785 = vld [vmem:[#allocation7 + $0x400] sm:$0xff]
    %v3786 = vld [vmem:[#allocation7 + $0x408] sm:$0xff]
    %v3787 = vld [vmem:[#allocation7 + $0x410] sm:$0xff]
    %v3788 = vld [vmem:[#allocation7 + $0x418] sm:$0xff]
    %v3789 = vld [vmem:[#allocation7 + $0x420] sm:$0xff]
    %v3790 = vld [vmem:[#allocation7 + $0x428] sm:$0xff]
    %v3791 = vld [vmem:[#allocation7 + $0x430] sm:$0xff]
    %v3792 = vld [vmem:[#allocation7 + $0x438] sm:$0xff]
    %v3793 = vld [vmem:[#allocation7 + $0x440] sm:$0xff]
    %v3794 = vld [vmem:[#allocation7 + $0x448] sm:$0xff]
    %v3795 = vld [vmem:[#allocation7 + $0x450] sm:$0xff]
    %v3796 = vld [vmem:[#allocation7 + $0x458] sm:$0xff]
    %v3797 = vld [vmem:[#allocation7 + $0x460] sm:$0xff]
    %v3798 = vld [vmem:[#allocation7 + $0x468] sm:$0xff]
    %v3799 = vld [vmem:[#allocation7 + $0x470] sm:$0xff]
    %v3800 = vld [vmem:[#allocation7 + $0x478] sm:$0xff]
    %v3801 = vld [vmem:[#allocation7 + $0x480] sm:$0xff]
    %v3802 = vld [vmem:[#allocation7 + $0x488] sm:$0xff]
    %v3803 = vld [vmem:[#allocation7 + $0x490] sm:$0xff]
    %v3804 = vld [vmem:[#allocation7 + $0x498] sm:$0xff]
    %v3805 = vld [vmem:[#allocation7 + $0x4a0] sm:$0xff]
    %v3806 = vld [vmem:[#allocation7 + $0x4a8] sm:$0xff]
    %v3807 = vld [vmem:[#allocation7 + $0x4b0] sm:$0xff]
    %v3808 = vld [vmem:[#allocation7 + $0x4b8] sm:$0xff]
    %v3809 = vld [vmem:[#allocation7 + $0x4c0] sm:$0xff]
    %v3810 = vld [vmem:[#allocation7 + $0x4c8] sm:$0xff]
    %v3811 = vld [vmem:[#allocation7 + $0x4d0] sm:$0xff]
    %v3812 = vld [vmem:[#allocation7 + $0x4d8] sm:$0xff]
    %v3813 = vld [vmem:[#allocation7 + $0x4e0] sm:$0xff]
    %v3814 = vld [vmem:[#allocation7 + $0x4e8] sm:$0xff]
    %v3815 = vld [vmem:[#allocation7 + $0x4f0] sm:$0xff]
    %v3816 = vld [vmem:[#allocation7 + $0x4f8] sm:$0xff]
    %v3817 = vld [vmem:[#allocation7 + $0x500] sm:$0xff]
    %v3818 = vld [vmem:[#allocation7 + $0x508] sm:$0xff]
    %v3819 = vld [vmem:[#allocation7 + $0x510] sm:$0xff]
    %v3820 = vld [vmem:[#allocation7 + $0x518] sm:$0xff]
    %v3821 = vld [vmem:[#allocation7 + $0x520] sm:$0xff]
    %v3822 = vld [vmem:[#allocation7 + $0x528] sm:$0xff]
    %v3823 = vld [vmem:[#allocation7 + $0x530] sm:$0xff]
    %v3824 = vld [vmem:[#allocation7 + $0x538] sm:$0xff]
    %v3825 = vld [vmem:[#allocation7 + $0x540] sm:$0xff]
    %v3826 = vld [vmem:[#allocation7 + $0x548] sm:$0xff]
    %v3827 = vld [vmem:[#allocation7 + $0x550] sm:$0xff]
    %v3828 = vld [vmem:[#allocation7 + $0x558] sm:$0xff]
    %v3829 = vld [vmem:[#allocation7 + $0x560] sm:$0xff]
    %v3830 = vld [vmem:[#allocation7 + $0x568] sm:$0xff]
    %v3831 = vld [vmem:[#allocation7 + $0x570] sm:$0xff]
    %v3832 = vld [vmem:[#allocation7 + $0x578] sm:$0xff]
    %v3833 = vld [vmem:[#allocation7 + $0x580] sm:$0xff]
    %v3834 = vld [vmem:[#allocation7 + $0x588] sm:$0xff]
    %v3835 = vld [vmem:[#allocation7 + $0x590] sm:$0xff]
    %v3836 = vld [vmem:[#allocation7 + $0x598] sm:$0xff]
    %v3837 = vld [vmem:[#allocation7 + $0x5a0] sm:$0xff]
    %v3838 = vld [vmem:[#allocation7 + $0x5a8] sm:$0xff]
    %v3839 = vld [vmem:[#allocation7 + $0x5b0] sm:$0xff]
    %v3840 = vld [vmem:[#allocation7 + $0x5b8] sm:$0xff]
    %v3841 = vld [vmem:[#allocation7 + $0x5c0] sm:$0xff]
    %v3842 = vld [vmem:[#allocation7 + $0x5c8] sm:$0xff]
    %v3843 = vld [vmem:[#allocation7 + $0x5d0] sm:$0xff]
    %v3844 = vld [vmem:[#allocation7 + $0x5d8] sm:$0xff]
    %v3845 = vld [vmem:[#allocation7 + $0x5e0] sm:$0xff]
    %v3846 = vld [vmem:[#allocation7 + $0x5e8] sm:$0xff]
    %v3847 = vld [vmem:[#allocation7 + $0x5f0] sm:$0xff]
    %v3848 = vld [vmem:[#allocation7 + $0x5f8] sm:$0xff]
    %v3849 = vld [vmem:[#allocation7 + $0x600] sm:$0xff]
    %v3850 = vld [vmem:[#allocation7 + $0x608] sm:$0xff]
    %v3851 = vld [vmem:[#allocation7 + $0x610] sm:$0xff]
    %v3852 = vld [vmem:[#allocation7 + $0x618] sm:$0xff]
    %v3853 = vld [vmem:[#allocation7 + $0x620] sm:$0xff]
    %v3854 = vld [vmem:[#allocation7 + $0x628] sm:$0xff]
    %v3855 = vld [vmem:[#allocation7 + $0x630] sm:$0xff]
    %v3856 = vld [vmem:[#allocation7 + $0x638] sm:$0xff]
    %v3857 = vld [vmem:[#allocation7 + $0x640] sm:$0xff]
    %v3858 = vld [vmem:[#allocation7 + $0x648] sm:$0xff]
    %v3859 = vld [vmem:[#allocation7 + $0x650] sm:$0xff]
    %v3860 = vld [vmem:[#allocation7 + $0x658] sm:$0xff]
    %v3861 = vld [vmem:[#allocation7 + $0x660] sm:$0xff]
    %v3862 = vld [vmem:[#allocation7 + $0x668] sm:$0xff]
    %v3863 = vld [vmem:[#allocation7 + $0x670] sm:$0xff]
    %v3864 = vld [vmem:[#allocation7 + $0x678] sm:$0xff]
    %v3865 = vld [vmem:[#allocation7 + $0x680] sm:$0xff]
    %v3866 = vld [vmem:[#allocation7 + $0x688] sm:$0xff]
    %v3867 = vld [vmem:[#allocation7 + $0x690] sm:$0xff]
    %v3868 = vld [vmem:[#allocation7 + $0x698] sm:$0xff]
    %v3869 = vld [vmem:[#allocation7 + $0x6a0] sm:$0xff]
    %v3870 = vld [vmem:[#allocation7 + $0x6a8] sm:$0xff]
    %v3871 = vld [vmem:[#allocation7 + $0x6b0] sm:$0xff]
    %v3872 = vld [vmem:[#allocation7 + $0x6b8] sm:$0xff]
    %v3873 = vld [vmem:[#allocation7 + $0x6c0] sm:$0xff]
    %v3874 = vld [vmem:[#allocation7 + $0x6c8] sm:$0xff]
    %v3875 = vld [vmem:[#allocation7 + $0x6d0] sm:$0xff]
    %v3876 = vld [vmem:[#allocation7 + $0x6d8] sm:$0xff]
    %v3877 = vld [vmem:[#allocation7 + $0x6e0] sm:$0xff]
    %v3878 = vld [vmem:[#allocation7 + $0x6e8] sm:$0xff]
    %v3879 = vld [vmem:[#allocation7 + $0x6f0] sm:$0xff]
    %v3880 = vld [vmem:[#allocation7 + $0x6f8] sm:$0xff]
    %v3881 = vld [vmem:[#allocation7 + $0x700] sm:$0xff]
    %v3882 = vld [vmem:[#allocation7 + $0x708] sm:$0xff]
    %v3883 = vld [vmem:[#allocation7 + $0x710] sm:$0xff]
    %v3884 = vld [vmem:[#allocation7 + $0x718] sm:$0xff]
    %v3885 = vld [vmem:[#allocation7 + $0x720] sm:$0xff]
    %v3886 = vld [vmem:[#allocation7 + $0x728] sm:$0xff]
    %v3887 = vld [vmem:[#allocation7 + $0x730] sm:$0xff]
    %v3888 = vld [vmem:[#allocation7 + $0x738] sm:$0xff]
    %v3889 = vld [vmem:[#allocation7 + $0x740] sm:$0xff]
    %v3890 = vld [vmem:[#allocation7 + $0x748] sm:$0xff]
    %v3891 = vld [vmem:[#allocation7 + $0x750] sm:$0xff]
    %v3892 = vld [vmem:[#allocation7 + $0x758] sm:$0xff]
    %v3893 = vld [vmem:[#allocation7 + $0x760] sm:$0xff]
    %v3894 = vld [vmem:[#allocation7 + $0x768] sm:$0xff]
    %v3895 = vld [vmem:[#allocation7 + $0x770] sm:$0xff]
    %v3896 = vld [vmem:[#allocation7 + $0x778] sm:$0xff]
    %v3897 = vld [vmem:[#allocation7 + $0x780] sm:$0xff]
    %v3898 = vld [vmem:[#allocation7 + $0x788] sm:$0xff]
    %v3899 = vld [vmem:[#allocation7 + $0x790] sm:$0xff]
    %v3900 = vld [vmem:[#allocation7 + $0x798] sm:$0xff]
    %v3901 = vld [vmem:[#allocation7 + $0x7a0] sm:$0xff]
    %v3902 = vld [vmem:[#allocation7 + $0x7a8] sm:$0xff]
    %v3903 = vld [vmem:[#allocation7 + $0x7b0] sm:$0xff]
    %v3904 = vld [vmem:[#allocation7 + $0x7b8] sm:$0xff]
    %v3905 = vld [vmem:[#allocation7 + $0x7c0] sm:$0xff]
    %v3906 = vld [vmem:[#allocation7 + $0x7c8] sm:$0xff]
    %v3907 = vld [vmem:[#allocation7 + $0x7d0] sm:$0xff]
    %v3908 = vld [vmem:[#allocation7 + $0x7d8] sm:$0xff]
    %v3909 = vld [vmem:[#allocation7 + $0x7e0] sm:$0xff]
    %v3910 = vld [vmem:[#allocation7 + $0x7e8] sm:$0xff]
    %v3911 = vld [vmem:[#allocation7 + $0x7f0] sm:$0xff]
    %v3912 = vld [vmem:[#allocation7 + $0x7f8] sm:$0xff]
    %v3913 = vld [vmem:[#allocation8] sm:$0xf]
    %v3915 = vlaneseq
    %v3916 = vshrl.u32 %v3915, 7
    %v3917 = vsub.s32 0, %v3916
    %v3918 = vrot.slane %v3913, %v3917
    %v3919 = vlaneseq
    %v3920 = vshrl.u32 %v3919, 7
    %v3921 = vsub.s32 1, %v3920
    %v3922 = vrot.slane %v3913, %v3921
    %v3923 = vlaneseq
    %v3924 = vshrl.u32 %v3923, 7
    %v3925 = vsub.s32 2, %v3924
    %v3926 = vrot.slane %v3913, %v3925
    %v3927 = vlaneseq
    %v3928 = vshrl.u32 %v3927, 7
    %v3929 = vsub.s32 3, %v3928
    %v3930 = vrot.slane %v3913, %v3929
    %v4191 = vunpack.c.l.b16 %v3657
    %v4192 = vunpack.c.h.b16 %v3657
    %v4193 = vunpack.c.l.b16 %v3658
    %v4194 = vunpack.c.h.b16 %v3658
    %v4195 = vunpack.c.l.b16 %v3659
    %v4196 = vunpack.c.h.b16 %v3659
    %v4197 = vunpack.c.l.b16 %v3660
    %v4198 = vunpack.c.h.b16 %v3660
    %v4199 = vunpack.c.l.b16 %v3661
    %v4200 = vunpack.c.h.b16 %v3661
    %v4201 = vunpack.c.l.b16 %v3662
    %v4202 = vunpack.c.h.b16 %v3662
    %v4203 = vunpack.c.l.b16 %v3663
    %v4204 = vunpack.c.h.b16 %v3663
    %v4205 = vunpack.c.l.b16 %v3664
    %v4206 = vunpack.c.h.b16 %v3664
    %v4207 = vunpack.c.l.b16 %v3665
    %v4208 = vunpack.c.h.b16 %v3665
    %v4209 = vunpack.c.l.b16 %v3666
    %v4210 = vunpack.c.h.b16 %v3666
    %v4211 = vunpack.c.l.b16 %v3667
    %v4212 = vunpack.c.h.b16 %v3667
    %v4213 = vunpack.c.l.b16 %v3668
    %v4214 = vunpack.c.h.b16 %v3668
    %v4215 = vunpack.c.l.b16 %v3669
    %v4216 = vunpack.c.h.b16 %v3669
    %v4217 = vunpack.c.l.b16 %v3670
    %v4218 = vunpack.c.h.b16 %v3670
    %v4219 = vunpack.c.l.b16 %v3671
    %v4220 = vunpack.c.h.b16 %v3671
    %v4221 = vunpack.c.l.b16 %v3672
    %v4222 = vunpack.c.h.b16 %v3672
    %v4223 = vunpack.c.l.b16 %v3673
    %v4224 = vunpack.c.h.b16 %v3673
    %v4225 = vunpack.c.l.b16 %v3674
    %v4226 = vunpack.c.h.b16 %v3674
    %v4227 = vunpack.c.l.b16 %v3675
    %v4228 = vunpack.c.h.b16 %v3675
    %v4229 = vunpack.c.l.b16 %v3676
    %v4230 = vunpack.c.h.b16 %v3676
    %v4231 = vunpack.c.l.b16 %v3677
    %v4232 = vunpack.c.h.b16 %v3677
    %v4233 = vunpack.c.l.b16 %v3678
    %v4234 = vunpack.c.h.b16 %v3678
    %v4235 = vunpack.c.l.b16 %v3679
    %v4236 = vunpack.c.h.b16 %v3679
    %v4237 = vunpack.c.l.b16 %v3680
    %v4238 = vunpack.c.h.b16 %v3680
    %v4239 = vunpack.c.l.b16 %v3681
    %v4240 = vunpack.c.h.b16 %v3681
    %v4241 = vunpack.c.l.b16 %v3682
    %v4242 = vunpack.c.h.b16 %v3682
    %v4243 = vunpack.c.l.b16 %v3683
    %v4244 = vunpack.c.h.b16 %v3683
    %v4245 = vunpack.c.l.b16 %v3684
    %v4246 = vunpack.c.h.b16 %v3684
    %v4247 = vunpack.c.l.b16 %v3685
    %v4248 = vunpack.c.h.b16 %v3685
    %v4249 = vunpack.c.l.b16 %v3686
    %v4250 = vunpack.c.h.b16 %v3686
    %v4251 = vunpack.c.l.b16 %v3687
    %v4252 = vunpack.c.h.b16 %v3687
    %v4253 = vunpack.c.l.b16 %v3688
    %v4254 = vunpack.c.h.b16 %v3688
    %v4255 = vunpack.c.l.b16 %v3689
    %v4256 = vunpack.c.h.b16 %v3689
    %v4257 = vunpack.c.l.b16 %v3690
    %v4258 = vunpack.c.h.b16 %v3690
    %v4259 = vunpack.c.l.b16 %v3691
    %v4260 = vunpack.c.h.b16 %v3691
    %v4261 = vunpack.c.l.b16 %v3692
    %v4262 = vunpack.c.h.b16 %v3692
    %v4263 = vunpack.c.l.b16 %v3693
    %v4264 = vunpack.c.h.b16 %v3693
    %v4265 = vunpack.c.l.b16 %v3694
    %v4266 = vunpack.c.h.b16 %v3694
    %v4267 = vunpack.c.l.b16 %v3695
    %v4268 = vunpack.c.h.b16 %v3695
    %v4269 = vunpack.c.l.b16 %v3696
    %v4270 = vunpack.c.h.b16 %v3696
    %v4271 = vunpack.c.l.b16 %v3697
    %v4272 = vunpack.c.h.b16 %v3697
    %v4273 = vunpack.c.l.b16 %v3698
    %v4274 = vunpack.c.h.b16 %v3698
    %v4275 = vunpack.c.l.b16 %v3699
    %v4276 = vunpack.c.h.b16 %v3699
    %v4277 = vunpack.c.l.b16 %v3700
    %v4278 = vunpack.c.h.b16 %v3700
    %v4279 = vunpack.c.l.b16 %v3701
    %v4280 = vunpack.c.h.b16 %v3701
    %v4281 = vunpack.c.l.b16 %v3702
    %v4282 = vunpack.c.h.b16 %v3702
    %v4283 = vunpack.c.l.b16 %v3703
    %v4284 = vunpack.c.h.b16 %v3703
    %v4285 = vunpack.c.l.b16 %v3704
    %v4286 = vunpack.c.h.b16 %v3704
    %v4287 = vunpack.c.l.b16 %v3705
    %v4288 = vunpack.c.h.b16 %v3705
    %v4289 = vunpack.c.l.b16 %v3706
    %v4290 = vunpack.c.h.b16 %v3706
    %v4291 = vunpack.c.l.b16 %v3707
    %v4292 = vunpack.c.h.b16 %v3707
    %v4293 = vunpack.c.l.b16 %v3708
    %v4294 = vunpack.c.h.b16 %v3708
    %v4295 = vunpack.c.l.b16 %v3709
    %v4296 = vunpack.c.h.b16 %v3709
    %v4297 = vunpack.c.l.b16 %v3710
    %v4298 = vunpack.c.h.b16 %v3710
    %v4299 = vunpack.c.l.b16 %v3711
    %v4300 = vunpack.c.h.b16 %v3711
    %v4301 = vunpack.c.l.b16 %v3712
    %v4302 = vunpack.c.h.b16 %v3712
    %v4303 = vunpack.c.l.b16 %v3713
    %v4304 = vunpack.c.h.b16 %v3713
    %v4305 = vunpack.c.l.b16 %v3714
    %v4306 = vunpack.c.h.b16 %v3714
    %v4307 = vunpack.c.l.b16 %v3715
    %v4308 = vunpack.c.h.b16 %v3715
    %v4309 = vunpack.c.l.b16 %v3716
    %v4310 = vunpack.c.h.b16 %v3716
    %v4311 = vunpack.c.l.b16 %v3717
    %v4312 = vunpack.c.h.b16 %v3717
    %v4313 = vunpack.c.l.b16 %v3718
    %v4314 = vunpack.c.h.b16 %v3718
    %v4315 = vunpack.c.l.b16 %v3719
    %v4316 = vunpack.c.h.b16 %v3719
    %v4317 = vunpack.c.l.b16 %v3720
    %v4318 = vunpack.c.h.b16 %v3720
    %v4319 = vunpack.c.l.b16 %v3721
    %v4320 = vunpack.c.h.b16 %v3721
    %v4321 = vunpack.c.l.b16 %v3722
    %v4322 = vunpack.c.h.b16 %v3722
    %v4323 = vunpack.c.l.b16 %v3723
    %v4324 = vunpack.c.h.b16 %v3723
    %v4325 = vunpack.c.l.b16 %v3724
    %v4326 = vunpack.c.h.b16 %v3724
    %v4327 = vunpack.c.l.b16 %v3725
    %v4328 = vunpack.c.h.b16 %v3725
    %v4329 = vunpack.c.l.b16 %v3726
    %v4330 = vunpack.c.h.b16 %v3726
    %v4331 = vunpack.c.l.b16 %v3727
    %v4332 = vunpack.c.h.b16 %v3727
    %v4333 = vunpack.c.l.b16 %v3728
    %v4334 = vunpack.c.h.b16 %v3728
    %v4335 = vunpack.c.l.b16 %v3729
    %v4336 = vunpack.c.h.b16 %v3729
    %v4337 = vunpack.c.l.b16 %v3730
    %v4338 = vunpack.c.h.b16 %v3730
    %v4339 = vunpack.c.l.b16 %v3731
    %v4340 = vunpack.c.h.b16 %v3731
    %v4341 = vunpack.c.l.b16 %v3732
    %v4342 = vunpack.c.h.b16 %v3732
    %v4343 = vunpack.c.l.b16 %v3733
    %v4344 = vunpack.c.h.b16 %v3733
    %v4345 = vunpack.c.l.b16 %v3734
    %v4346 = vunpack.c.h.b16 %v3734
    %v4347 = vunpack.c.l.b16 %v3735
    %v4348 = vunpack.c.h.b16 %v3735
    %v4349 = vunpack.c.l.b16 %v3736
    %v4350 = vunpack.c.h.b16 %v3736
    %v4351 = vunpack.c.l.b16 %v3737
    %v4352 = vunpack.c.h.b16 %v3737
    %v4353 = vunpack.c.l.b16 %v3738
    %v4354 = vunpack.c.h.b16 %v3738
    %v4355 = vunpack.c.l.b16 %v3739
    %v4356 = vunpack.c.h.b16 %v3739
    %v4357 = vunpack.c.l.b16 %v3740
    %v4358 = vunpack.c.h.b16 %v3740
    %v4359 = vunpack.c.l.b16 %v3741
    %v4360 = vunpack.c.h.b16 %v3741
    %v4361 = vunpack.c.l.b16 %v3742
    %v4362 = vunpack.c.h.b16 %v3742
    %v4363 = vunpack.c.l.b16 %v3743
    %v4364 = vunpack.c.h.b16 %v3743
    %v4365 = vunpack.c.l.b16 %v3744
    %v4366 = vunpack.c.h.b16 %v3744
    %v4367 = vunpack.c.l.b16 %v3745
    %v4368 = vunpack.c.h.b16 %v3745
    %v4369 = vunpack.c.l.b16 %v3746
    %v4370 = vunpack.c.h.b16 %v3746
    %v4371 = vunpack.c.l.b16 %v3747
    %v4372 = vunpack.c.h.b16 %v3747
    %v4373 = vunpack.c.l.b16 %v3748
    %v4374 = vunpack.c.h.b16 %v3748
    %v4375 = vunpack.c.l.b16 %v3749
    %v4376 = vunpack.c.h.b16 %v3749
    %v4377 = vunpack.c.l.b16 %v3750
    %v4378 = vunpack.c.h.b16 %v3750
    %v4379 = vunpack.c.l.b16 %v3751
    %v4380 = vunpack.c.h.b16 %v3751
    %v4381 = vunpack.c.l.b16 %v3752
    %v4382 = vunpack.c.h.b16 %v3752
    %v4383 = vunpack.c.l.b16 %v3753
    %v4384 = vunpack.c.h.b16 %v3753
    %v4385 = vunpack.c.l.b16 %v3754
    %v4386 = vunpack.c.h.b16 %v3754
    %v4387 = vunpack.c.l.b16 %v3755
    %v4388 = vunpack.c.h.b16 %v3755
    %v4389 = vunpack.c.l.b16 %v3756
    %v4390 = vunpack.c.h.b16 %v3756
    %v4391 = vunpack.c.l.b16 %v3757
    %v4392 = vunpack.c.h.b16 %v3757
    %v4393 = vunpack.c.l.b16 %v3758
    %v4394 = vunpack.c.h.b16 %v3758
    %v4395 = vunpack.c.l.b16 %v3759
    %v4396 = vunpack.c.h.b16 %v3759
    %v4397 = vunpack.c.l.b16 %v3760
    %v4398 = vunpack.c.h.b16 %v3760
    %v4399 = vunpack.c.l.b16 %v3761
    %v4400 = vunpack.c.h.b16 %v3761
    %v4401 = vunpack.c.l.b16 %v3762
    %v4402 = vunpack.c.h.b16 %v3762
    %v4403 = vunpack.c.l.b16 %v3763
    %v4404 = vunpack.c.h.b16 %v3763
    %v4405 = vunpack.c.l.b16 %v3764
    %v4406 = vunpack.c.h.b16 %v3764
    %v4407 = vunpack.c.l.b16 %v3765
    %v4408 = vunpack.c.h.b16 %v3765
    %v4409 = vunpack.c.l.b16 %v3766
    %v4410 = vunpack.c.h.b16 %v3766
    %v4411 = vunpack.c.l.b16 %v3767
    %v4412 = vunpack.c.h.b16 %v3767
    %v4413 = vunpack.c.l.b16 %v3768
    %v4414 = vunpack.c.h.b16 %v3768
    %v4415 = vunpack.c.l.b16 %v3769
    %v4416 = vunpack.c.h.b16 %v3769
    %v4417 = vunpack.c.l.b16 %v3770
    %v4418 = vunpack.c.h.b16 %v3770
    %v4419 = vunpack.c.l.b16 %v3771
    %v4420 = vunpack.c.h.b16 %v3771
    %v4421 = vunpack.c.l.b16 %v3772
    %v4422 = vunpack.c.h.b16 %v3772
    %v4423 = vunpack.c.l.b16 %v3773
    %v4424 = vunpack.c.h.b16 %v3773
    %v4425 = vunpack.c.l.b16 %v3774
    %v4426 = vunpack.c.h.b16 %v3774
    %v4427 = vunpack.c.l.b16 %v3775
    %v4428 = vunpack.c.h.b16 %v3775
    %v4429 = vunpack.c.l.b16 %v3776
    %v4430 = vunpack.c.h.b16 %v3776
    %v4431 = vunpack.c.l.b16 %v3777
    %v4432 = vunpack.c.h.b16 %v3777
    %v4433 = vunpack.c.l.b16 %v3778
    %v4434 = vunpack.c.h.b16 %v3778
    %v4435 = vunpack.c.l.b16 %v3779
    %v4436 = vunpack.c.h.b16 %v3779
    %v4437 = vunpack.c.l.b16 %v3780
    %v4438 = vunpack.c.h.b16 %v3780
    %v4439 = vunpack.c.l.b16 %v3781
    %v4440 = vunpack.c.h.b16 %v3781
    %v4441 = vunpack.c.l.b16 %v3782
    %v4442 = vunpack.c.h.b16 %v3782
    %v4443 = vunpack.c.l.b16 %v3783
    %v4444 = vunpack.c.h.b16 %v3783
    %v4445 = vunpack.c.l.b16 %v3784
    %v4446 = vunpack.c.h.b16 %v3784
    %v4447 = vunpack.c.l.b16 %v3785
    %v4448 = vunpack.c.h.b16 %v3785
    %v4449 = vunpack.c.l.b16 %v3786
    %v4450 = vunpack.c.h.b16 %v3786
    %v4451 = vunpack.c.l.b16 %v3787
    %v4452 = vunpack.c.h.b16 %v3787
    %v4453 = vunpack.c.l.b16 %v3788
    %v4454 = vunpack.c.h.b16 %v3788
    %v4455 = vunpack.c.l.b16 %v3789
    %v4456 = vunpack.c.h.b16 %v3789
    %v4457 = vunpack.c.l.b16 %v3790
    %v4458 = vunpack.c.h.b16 %v3790
    %v4459 = vunpack.c.l.b16 %v3791
    %v4460 = vunpack.c.h.b16 %v3791
    %v4461 = vunpack.c.l.b16 %v3792
    %v4462 = vunpack.c.h.b16 %v3792
    %v4463 = vunpack.c.l.b16 %v3793
    %v4464 = vunpack.c.h.b16 %v3793
    %v4465 = vunpack.c.l.b16 %v3794
    %v4466 = vunpack.c.h.b16 %v3794
    %v4467 = vunpack.c.l.b16 %v3795
    %v4468 = vunpack.c.h.b16 %v3795
    %v4469 = vunpack.c.l.b16 %v3796
    %v4470 = vunpack.c.h.b16 %v3796
    %v4471 = vunpack.c.l.b16 %v3797
    %v4472 = vunpack.c.h.b16 %v3797
    %v4473 = vunpack.c.l.b16 %v3798
    %v4474 = vunpack.c.h.b16 %v3798
    %v4475 = vunpack.c.l.b16 %v3799
    %v4476 = vunpack.c.h.b16 %v3799
    %v4477 = vunpack.c.l.b16 %v3800
    %v4478 = vunpack.c.h.b16 %v3800
    %v4479 = vunpack.c.l.b16 %v3801
    %v4480 = vunpack.c.h.b16 %v3801
    %v4481 = vunpack.c.l.b16 %v3802
    %v4482 = vunpack.c.h.b16 %v3802
    %v4483 = vunpack.c.l.b16 %v3803
    %v4484 = vunpack.c.h.b16 %v3803
    %v4485 = vunpack.c.l.b16 %v3804
    %v4486 = vunpack.c.h.b16 %v3804
    %v4487 = vunpack.c.l.b16 %v3805
    %v4488 = vunpack.c.h.b16 %v3805
    %v4489 = vunpack.c.l.b16 %v3806
    %v4490 = vunpack.c.h.b16 %v3806
    %v4491 = vunpack.c.l.b16 %v3807
    %v4492 = vunpack.c.h.b16 %v3807
    %v4493 = vunpack.c.l.b16 %v3808
    %v4494 = vunpack.c.h.b16 %v3808
    %v4495 = vunpack.c.l.b16 %v3809
    %v4496 = vunpack.c.h.b16 %v3809
    %v4497 = vunpack.c.l.b16 %v3810
    %v4498 = vunpack.c.h.b16 %v3810
    %v4499 = vunpack.c.l.b16 %v3811
    %v4500 = vunpack.c.h.b16 %v3811
    %v4501 = vunpack.c.l.b16 %v3812
    %v4502 = vunpack.c.h.b16 %v3812
    %v4503 = vunpack.c.l.b16 %v3813
    %v4504 = vunpack.c.h.b16 %v3813
    %v4505 = vunpack.c.l.b16 %v3814
    %v4506 = vunpack.c.h.b16 %v3814
    %v4507 = vunpack.c.l.b16 %v3815
    %v4508 = vunpack.c.h.b16 %v3815
    %v4509 = vunpack.c.l.b16 %v3816
    %v4510 = vunpack.c.h.b16 %v3816
    %v4511 = vunpack.c.l.b16 %v3817
    %v4512 = vunpack.c.h.b16 %v3817
    %v4513 = vunpack.c.l.b16 %v3818
    %v4514 = vunpack.c.h.b16 %v3818
    %v4515 = vunpack.c.l.b16 %v3819
    %v4516 = vunpack.c.h.b16 %v3819
    %v4517 = vunpack.c.l.b16 %v3820
    %v4518 = vunpack.c.h.b16 %v3820
    %v4519 = vunpack.c.l.b16 %v3821
    %v4520 = vunpack.c.h.b16 %v3821
    %v4521 = vunpack.c.l.b16 %v3822
    %v4522 = vunpack.c.h.b16 %v3822
    %v4523 = vunpack.c.l.b16 %v3823
    %v4524 = vunpack.c.h.b16 %v3823
    %v4525 = vunpack.c.l.b16 %v3824
    %v4526 = vunpack.c.h.b16 %v3824
    %v4527 = vunpack.c.l.b16 %v3825
    %v4528 = vunpack.c.h.b16 %v3825
    %v4529 = vunpack.c.l.b16 %v3826
    %v4530 = vunpack.c.h.b16 %v3826
    %v4531 = vunpack.c.l.b16 %v3827
    %v4532 = vunpack.c.h.b16 %v3827
    %v4533 = vunpack.c.l.b16 %v3828
    %v4534 = vunpack.c.h.b16 %v3828
    %v4535 = vunpack.c.l.b16 %v3829
    %v4536 = vunpack.c.h.b16 %v3829
    %v4537 = vunpack.c.l.b16 %v3830
    %v4538 = vunpack.c.h.b16 %v3830
    %v4539 = vunpack.c.l.b16 %v3831
    %v4540 = vunpack.c.h.b16 %v3831
    %v4541 = vunpack.c.l.b16 %v3832
    %v4542 = vunpack.c.h.b16 %v3832
    %v4543 = vunpack.c.l.b16 %v3833
    %v4544 = vunpack.c.h.b16 %v3833
    %v4545 = vunpack.c.l.b16 %v3834
    %v4546 = vunpack.c.h.b16 %v3834
    %v4547 = vunpack.c.l.b16 %v3835
    %v4548 = vunpack.c.h.b16 %v3835
    %v4549 = vunpack.c.l.b16 %v3836
    %v4550 = vunpack.c.h.b16 %v3836
    %v4551 = vunpack.c.l.b16 %v3837
    %v4552 = vunpack.c.h.b16 %v3837
    %v4553 = vunpack.c.l.b16 %v3838
    %v4554 = vunpack.c.h.b16 %v3838
    %v4555 = vunpack.c.l.b16 %v3839
    %v4556 = vunpack.c.h.b16 %v3839
    %v4557 = vunpack.c.l.b16 %v3840
    %v4558 = vunpack.c.h.b16 %v3840
    %v4559 = vunpack.c.l.b16 %v3841
    %v4560 = vunpack.c.h.b16 %v3841
    %v4561 = vunpack.c.l.b16 %v3842
    %v4562 = vunpack.c.h.b16 %v3842
    %v4563 = vunpack.c.l.b16 %v3843
    %v4564 = vunpack.c.h.b16 %v3843
    %v4565 = vunpack.c.l.b16 %v3844
    %v4566 = vunpack.c.h.b16 %v3844
    %v4567 = vunpack.c.l.b16 %v3845
    %v4568 = vunpack.c.h.b16 %v3845
    %v4569 = vunpack.c.l.b16 %v3846
    %v4570 = vunpack.c.h.b16 %v3846
    %v4571 = vunpack.c.l.b16 %v3847
    %v4572 = vunpack.c.h.b16 %v3847
    %v4573 = vunpack.c.l.b16 %v3848
    %v4574 = vunpack.c.h.b16 %v3848
    %v4575 = vunpack.c.l.b16 %v3849
    %v4576 = vunpack.c.h.b16 %v3849
    %v4577 = vunpack.c.l.b16 %v3850
    %v4578 = vunpack.c.h.b16 %v3850
    %v4579 = vunpack.c.l.b16 %v3851
    %v4580 = vunpack.c.h.b16 %v3851
    %v4581 = vunpack.c.l.b16 %v3852
    %v4582 = vunpack.c.h.b16 %v3852
    %v4583 = vunpack.c.l.b16 %v3853
    %v4584 = vunpack.c.h.b16 %v3853
    %v4585 = vunpack.c.l.b16 %v3854
    %v4586 = vunpack.c.h.b16 %v3854
    %v4587 = vunpack.c.l.b16 %v3855
    %v4588 = vunpack.c.h.b16 %v3855
    %v4589 = vunpack.c.l.b16 %v3856
    %v4590 = vunpack.c.h.b16 %v3856
    %v4591 = vunpack.c.l.b16 %v3857
    %v4592 = vunpack.c.h.b16 %v3857
    %v4593 = vunpack.c.l.b16 %v3858
    %v4594 = vunpack.c.h.b16 %v3858
    %v4595 = vunpack.c.l.b16 %v3859
    %v4596 = vunpack.c.h.b16 %v3859
    %v4597 = vunpack.c.l.b16 %v3860
    %v4598 = vunpack.c.h.b16 %v3860
    %v4599 = vunpack.c.l.b16 %v3861
    %v4600 = vunpack.c.h.b16 %v3861
    %v4601 = vunpack.c.l.b16 %v3862
    %v4602 = vunpack.c.h.b16 %v3862
    %v4603 = vunpack.c.l.b16 %v3863
    %v4604 = vunpack.c.h.b16 %v3863
    %v4605 = vunpack.c.l.b16 %v3864
    %v4606 = vunpack.c.h.b16 %v3864
    %v4607 = vunpack.c.l.b16 %v3865
    %v4608 = vunpack.c.h.b16 %v3865
    %v4609 = vunpack.c.l.b16 %v3866
    %v4610 = vunpack.c.h.b16 %v3866
    %v4611 = vunpack.c.l.b16 %v3867
    %v4612 = vunpack.c.h.b16 %v3867
    %v4613 = vunpack.c.l.b16 %v3868
    %v4614 = vunpack.c.h.b16 %v3868
    %v4615 = vunpack.c.l.b16 %v3869
    %v4616 = vunpack.c.h.b16 %v3869
    %v4617 = vunpack.c.l.b16 %v3870
    %v4618 = vunpack.c.h.b16 %v3870
    %v4619 = vunpack.c.l.b16 %v3871
    %v4620 = vunpack.c.h.b16 %v3871
    %v4621 = vunpack.c.l.b16 %v3872
    %v4622 = vunpack.c.h.b16 %v3872
    %v4623 = vunpack.c.l.b16 %v3873
    %v4624 = vunpack.c.h.b16 %v3873
    %v4625 = vunpack.c.l.b16 %v3874
    %v4626 = vunpack.c.h.b16 %v3874
    %v4627 = vunpack.c.l.b16 %v3875
    %v4628 = vunpack.c.h.b16 %v3875
    %v4629 = vunpack.c.l.b16 %v3876
    %v4630 = vunpack.c.h.b16 %v3876
    %v4631 = vunpack.c.l.b16 %v3877
    %v4632 = vunpack.c.h.b16 %v3877
    %v4633 = vunpack.c.l.b16 %v3878
    %v4634 = vunpack.c.h.b16 %v3878
    %v4635 = vunpack.c.l.b16 %v3879
    %v4636 = vunpack.c.h.b16 %v3879
    %v4637 = vunpack.c.l.b16 %v3880
    %v4638 = vunpack.c.h.b16 %v3880
    %v4639 = vunpack.c.l.b16 %v3881
    %v4640 = vunpack.c.h.b16 %v3881
    %v4641 = vunpack.c.l.b16 %v3882
    %v4642 = vunpack.c.h.b16 %v3882
    %v4643 = vunpack.c.l.b16 %v3883
    %v4644 = vunpack.c.h.b16 %v3883
    %v4645 = vunpack.c.l.b16 %v3884
    %v4646 = vunpack.c.h.b16 %v3884
    %v4647 = vunpack.c.l.b16 %v3885
    %v4648 = vunpack.c.h.b16 %v3885
    %v4649 = vunpack.c.l.b16 %v3886
    %v4650 = vunpack.c.h.b16 %v3886
    %v4651 = vunpack.c.l.b16 %v3887
    %v4652 = vunpack.c.h.b16 %v3887
    %v4653 = vunpack.c.l.b16 %v3888
    %v4654 = vunpack.c.h.b16 %v3888
    %v4655 = vunpack.c.l.b16 %v3889
    %v4656 = vunpack.c.h.b16 %v3889
    %v4657 = vunpack.c.l.b16 %v3890
    %v4658 = vunpack.c.h.b16 %v3890
    %v4659 = vunpack.c.l.b16 %v3891
    %v4660 = vunpack.c.h.b16 %v3891
    %v4661 = vunpack.c.l.b16 %v3892
    %v4662 = vunpack.c.h.b16 %v3892
    %v4663 = vunpack.c.l.b16 %v3893
    %v4664 = vunpack.c.h.b16 %v3893
    %v4665 = vunpack.c.l.b16 %v3894
    %v4666 = vunpack.c.h.b16 %v3894
    %v4667 = vunpack.c.l.b16 %v3895
    %v4668 = vunpack.c.h.b16 %v3895
    %v4669 = vunpack.c.l.b16 %v3896
    %v4670 = vunpack.c.h.b16 %v3896
    %v4671 = vunpack.c.l.b16 %v3897
    %v4672 = vunpack.c.h.b16 %v3897
    %v4673 = vunpack.c.l.b16 %v3898
    %v4674 = vunpack.c.h.b16 %v3898
    %v4675 = vunpack.c.l.b16 %v3899
    %v4676 = vunpack.c.h.b16 %v3899
    %v4677 = vunpack.c.l.b16 %v3900
    %v4678 = vunpack.c.h.b16 %v3900
    %v4679 = vunpack.c.l.b16 %v3901
    %v4680 = vunpack.c.h.b16 %v3901
    %v4681 = vunpack.c.l.b16 %v3902
    %v4682 = vunpack.c.h.b16 %v3902
    %v4683 = vunpack.c.l.b16 %v3903
    %v4684 = vunpack.c.h.b16 %v3903
    %v4685 = vunpack.c.l.b16 %v3904
    %v4686 = vunpack.c.h.b16 %v3904
    %v4687 = vunpack.c.l.b16 %v3905
    %v4688 = vunpack.c.h.b16 %v3905
    %v4689 = vunpack.c.l.b16 %v3906
    %v4690 = vunpack.c.h.b16 %v3906
    %v4691 = vunpack.c.l.b16 %v3907
    %v4692 = vunpack.c.h.b16 %v3907
    %v4693 = vunpack.c.l.b16 %v3908
    %v4694 = vunpack.c.h.b16 %v3908
    %v4695 = vunpack.c.l.b16 %v3909
    %v4696 = vunpack.c.h.b16 %v3909
    %v4697 = vunpack.c.l.b16 %v3910
    %v4698 = vunpack.c.h.b16 %v3910
    %v4699 = vunpack.c.l.b16 %v3911
    %v4700 = vunpack.c.h.b16 %v3911
    %v4701 = vunpack.c.l.b16 %v3912
    %v4702 = vunpack.c.h.b16 %v3912
    %v4703 = vpack.c.b16 %v4195, %v4191
    %v4704 = vpack.c.b16 %v4196, %v4192
    %v4705 = vpack.c.b16 %v4197, %v4193
    %v4706 = vpack.c.b16 %v4198, %v4194
    %v4707 = vpack.c.b16 %v4203, %v4199
    %v4708 = vpack.c.b16 %v4204, %v4200
    %v4709 = vpack.c.b16 %v4205, %v4201
    %v4710 = vpack.c.b16 %v4206, %v4202
    %v4711 = vpack.c.b16 %v4211, %v4207
    %v4712 = vpack.c.b16 %v4212, %v4208
    %v4713 = vpack.c.b16 %v4213, %v4209
    %v4714 = vpack.c.b16 %v4214, %v4210
    %v4715 = vpack.c.b16 %v4219, %v4215
    %v4716 = vpack.c.b16 %v4220, %v4216
    %v4717 = vpack.c.b16 %v4221, %v4217
    %v4718 = vpack.c.b16 %v4222, %v4218
    %v4719 = vpack.c.b16 %v4227, %v4223
    %v4720 = vpack.c.b16 %v4228, %v4224
    %v4721 = vpack.c.b16 %v4229, %v4225
    %v4722 = vpack.c.b16 %v4230, %v4226
    %v4723 = vpack.c.b16 %v4235, %v4231
    %v4724 = vpack.c.b16 %v4236, %v4232
    %v4725 = vpack.c.b16 %v4237, %v4233
    %v4726 = vpack.c.b16 %v4238, %v4234
    %v4727 = vpack.c.b16 %v4243, %v4239
    %v4728 = vpack.c.b16 %v4244, %v4240
    %v4729 = vpack.c.b16 %v4245, %v4241
    %v4730 = vpack.c.b16 %v4246, %v4242
    %v4731 = vpack.c.b16 %v4251, %v4247
    %v4732 = vpack.c.b16 %v4252, %v4248
    %v4733 = vpack.c.b16 %v4253, %v4249
    %v4734 = vpack.c.b16 %v4254, %v4250
    %v4735 = vpack.c.b16 %v4259, %v4255
    %v4736 = vpack.c.b16 %v4260, %v4256
    %v4737 = vpack.c.b16 %v4261, %v4257
    %v4738 = vpack.c.b16 %v4262, %v4258
    %v4739 = vpack.c.b16 %v4267, %v4263
    %v4740 = vpack.c.b16 %v4268, %v4264
    %v4741 = vpack.c.b16 %v4269, %v4265
    %v4742 = vpack.c.b16 %v4270, %v4266
    %v4743 = vpack.c.b16 %v4275, %v4271
    %v4744 = vpack.c.b16 %v4276, %v4272
    %v4745 = vpack.c.b16 %v4277, %v4273
    %v4746 = vpack.c.b16 %v4278, %v4274
    %v4747 = vpack.c.b16 %v4283, %v4279
    %v4748 = vpack.c.b16 %v4284, %v4280
    %v4749 = vpack.c.b16 %v4285, %v4281
    %v4750 = vpack.c.b16 %v4286, %v4282
    %v4751 = vpack.c.b16 %v4291, %v4287
    %v4752 = vpack.c.b16 %v4292, %v4288
    %v4753 = vpack.c.b16 %v4293, %v4289
    %v4754 = vpack.c.b16 %v4294, %v4290
    %v4755 = vpack.c.b16 %v4299, %v4295
    %v4756 = vpack.c.b16 %v4300, %v4296
    %v4757 = vpack.c.b16 %v4301, %v4297
    %v4758 = vpack.c.b16 %v4302, %v4298
    %v4759 = vpack.c.b16 %v4307, %v4303
    %v4760 = vpack.c.b16 %v4308, %v4304
    %v4761 = vpack.c.b16 %v4309, %v4305
    %v4762 = vpack.c.b16 %v4310, %v4306
    %v4763 = vpack.c.b16 %v4315, %v4311
    %v4764 = vpack.c.b16 %v4316, %v4312
    %v4765 = vpack.c.b16 %v4317, %v4313
    %v4766 = vpack.c.b16 %v4318, %v4314
    %v4767 = vpack.c.b16 %v4323, %v4319
    %v4768 = vpack.c.b16 %v4324, %v4320
    %v4769 = vpack.c.b16 %v4325, %v4321
    %v4770 = vpack.c.b16 %v4326, %v4322
    %v4771 = vpack.c.b16 %v4331, %v4327
    %v4772 = vpack.c.b16 %v4332, %v4328
    %v4773 = vpack.c.b16 %v4333, %v4329
    %v4774 = vpack.c.b16 %v4334, %v4330
    %v4775 = vpack.c.b16 %v4339, %v4335
    %v4776 = vpack.c.b16 %v4340, %v4336
    %v4777 = vpack.c.b16 %v4341, %v4337
    %v4778 = vpack.c.b16 %v4342, %v4338
    %v4779 = vpack.c.b16 %v4347, %v4343
    %v4780 = vpack.c.b16 %v4348, %v4344
    %v4781 = vpack.c.b16 %v4349, %v4345
    %v4782 = vpack.c.b16 %v4350, %v4346
    %v4783 = vpack.c.b16 %v4355, %v4351
    %v4784 = vpack.c.b16 %v4356, %v4352
    %v4785 = vpack.c.b16 %v4357, %v4353
    %v4786 = vpack.c.b16 %v4358, %v4354
    %v4787 = vpack.c.b16 %v4363, %v4359
    %v4788 = vpack.c.b16 %v4364, %v4360
    %v4789 = vpack.c.b16 %v4365, %v4361
    %v4790 = vpack.c.b16 %v4366, %v4362
    %v4791 = vpack.c.b16 %v4371, %v4367
    %v4792 = vpack.c.b16 %v4372, %v4368
    %v4793 = vpack.c.b16 %v4373, %v4369
    %v4794 = vpack.c.b16 %v4374, %v4370
    %v4795 = vpack.c.b16 %v4379, %v4375
    %v4796 = vpack.c.b16 %v4380, %v4376
    %v4797 = vpack.c.b16 %v4381, %v4377
    %v4798 = vpack.c.b16 %v4382, %v4378
    %v4799 = vpack.c.b16 %v4387, %v4383
    %v4800 = vpack.c.b16 %v4388, %v4384
    %v4801 = vpack.c.b16 %v4389, %v4385
    %v4802 = vpack.c.b16 %v4390, %v4386
    %v4803 = vpack.c.b16 %v4395, %v4391
    %v4804 = vpack.c.b16 %v4396, %v4392
    %v4805 = vpack.c.b16 %v4397, %v4393
    %v4806 = vpack.c.b16 %v4398, %v4394
    %v4807 = vpack.c.b16 %v4403, %v4399
    %v4808 = vpack.c.b16 %v4404, %v4400
    %v4809 = vpack.c.b16 %v4405, %v4401
    %v4810 = vpack.c.b16 %v4406, %v4402
    %v4811 = vpack.c.b16 %v4411, %v4407
    %v4812 = vpack.c.b16 %v4412, %v4408
    %v4813 = vpack.c.b16 %v4413, %v4409
    %v4814 = vpack.c.b16 %v4414, %v4410
    %v4815 = vpack.c.b16 %v4419, %v4415
    %v4816 = vpack.c.b16 %v4420, %v4416
    %v4817 = vpack.c.b16 %v4421, %v4417
    %v4818 = vpack.c.b16 %v4422, %v4418
    %v4819 = vpack.c.b16 %v4427, %v4423
    %v4820 = vpack.c.b16 %v4428, %v4424
    %v4821 = vpack.c.b16 %v4429, %v4425
    %v4822 = vpack.c.b16 %v4430, %v4426
    %v4823 = vpack.c.b16 %v4435, %v4431
    %v4824 = vpack.c.b16 %v4436, %v4432
    %v4825 = vpack.c.b16 %v4437, %v4433
    %v4826 = vpack.c.b16 %v4438, %v4434
    %v4827 = vpack.c.b16 %v4443, %v4439
    %v4828 = vpack.c.b16 %v4444, %v4440
    %v4829 = vpack.c.b16 %v4445, %v4441
    %v4830 = vpack.c.b16 %v4446, %v4442
    %v4831 = vpack.c.b16 %v4451, %v4447
    %v4832 = vpack.c.b16 %v4452, %v4448
    %v4833 = vpack.c.b16 %v4453, %v4449
    %v4834 = vpack.c.b16 %v4454, %v4450
    %v4835 = vpack.c.b16 %v4459, %v4455
    %v4836 = vpack.c.b16 %v4460, %v4456
    %v4837 = vpack.c.b16 %v4461, %v4457
    %v4838 = vpack.c.b16 %v4462, %v4458
    %v4839 = vpack.c.b16 %v4467, %v4463
    %v4840 = vpack.c.b16 %v4468, %v4464
    %v4841 = vpack.c.b16 %v4469, %v4465
    %v4842 = vpack.c.b16 %v4470, %v4466
    %v4843 = vpack.c.b16 %v4475, %v4471
    %v4844 = vpack.c.b16 %v4476, %v4472
    %v4845 = vpack.c.b16 %v4477, %v4473
    %v4846 = vpack.c.b16 %v4478, %v4474
    %v4847 = vpack.c.b16 %v4483, %v4479
    %v4848 = vpack.c.b16 %v4484, %v4480
    %v4849 = vpack.c.b16 %v4485, %v4481
    %v4850 = vpack.c.b16 %v4486, %v4482
    %v4851 = vpack.c.b16 %v4491, %v4487
    %v4852 = vpack.c.b16 %v4492, %v4488
    %v4853 = vpack.c.b16 %v4493, %v4489
    %v4854 = vpack.c.b16 %v4494, %v4490
    %v4855 = vpack.c.b16 %v4499, %v4495
    %v4856 = vpack.c.b16 %v4500, %v4496
    %v4857 = vpack.c.b16 %v4501, %v4497
    %v4858 = vpack.c.b16 %v4502, %v4498
    %v4859 = vpack.c.b16 %v4507, %v4503
    %v4860 = vpack.c.b16 %v4508, %v4504
    %v4861 = vpack.c.b16 %v4509, %v4505
    %v4862 = vpack.c.b16 %v4510, %v4506
    %v4863 = vpack.c.b16 %v4515, %v4511
    %v4864 = vpack.c.b16 %v4516, %v4512
    %v4865 = vpack.c.b16 %v4517, %v4513
    %v4866 = vpack.c.b16 %v4518, %v4514
    %v4867 = vpack.c.b16 %v4523, %v4519
    %v4868 = vpack.c.b16 %v4524, %v4520
    %v4869 = vpack.c.b16 %v4525, %v4521
    %v4870 = vpack.c.b16 %v4526, %v4522
    %v4871 = vpack.c.b16 %v4531, %v4527
    %v4872 = vpack.c.b16 %v4532, %v4528
    %v4873 = vpack.c.b16 %v4533, %v4529
    %v4874 = vpack.c.b16 %v4534, %v4530
    %v4875 = vpack.c.b16 %v4539, %v4535
    %v4876 = vpack.c.b16 %v4540, %v4536
    %v4877 = vpack.c.b16 %v4541, %v4537
    %v4878 = vpack.c.b16 %v4542, %v4538
    %v4879 = vpack.c.b16 %v4547, %v4543
    %v4880 = vpack.c.b16 %v4548, %v4544
    %v4881 = vpack.c.b16 %v4549, %v4545
    %v4882 = vpack.c.b16 %v4550, %v4546
    %v4883 = vpack.c.b16 %v4555, %v4551
    %v4884 = vpack.c.b16 %v4556, %v4552
    %v4885 = vpack.c.b16 %v4557, %v4553
    %v4886 = vpack.c.b16 %v4558, %v4554
    %v4887 = vpack.c.b16 %v4563, %v4559
    %v4888 = vpack.c.b16 %v4564, %v4560
    %v4889 = vpack.c.b16 %v4565, %v4561
    %v4890 = vpack.c.b16 %v4566, %v4562
    %v4891 = vpack.c.b16 %v4571, %v4567
    %v4892 = vpack.c.b16 %v4572, %v4568
    %v4893 = vpack.c.b16 %v4573, %v4569
    %v4894 = vpack.c.b16 %v4574, %v4570
    %v4895 = vpack.c.b16 %v4579, %v4575
    %v4896 = vpack.c.b16 %v4580, %v4576
    %v4897 = vpack.c.b16 %v4581, %v4577
    %v4898 = vpack.c.b16 %v4582, %v4578
    %v4899 = vpack.c.b16 %v4587, %v4583
    %v4900 = vpack.c.b16 %v4588, %v4584
    %v4901 = vpack.c.b16 %v4589, %v4585
    %v4902 = vpack.c.b16 %v4590, %v4586
    %v4903 = vpack.c.b16 %v4595, %v4591
    %v4904 = vpack.c.b16 %v4596, %v4592
    %v4905 = vpack.c.b16 %v4597, %v4593
    %v4906 = vpack.c.b16 %v4598, %v4594
    %v4907 = vpack.c.b16 %v4603, %v4599
    %v4908 = vpack.c.b16 %v4604, %v4600
    %v4909 = vpack.c.b16 %v4605, %v4601
    %v4910 = vpack.c.b16 %v4606, %v4602
    %v4911 = vpack.c.b16 %v4611, %v4607
    %v4912 = vpack.c.b16 %v4612, %v4608
    %v4913 = vpack.c.b16 %v4613, %v4609
    %v4914 = vpack.c.b16 %v4614, %v4610
    %v4915 = vpack.c.b16 %v4619, %v4615
    %v4916 = vpack.c.b16 %v4620, %v4616
    %v4917 = vpack.c.b16 %v4621, %v4617
    %v4918 = vpack.c.b16 %v4622, %v4618
    %v4919 = vpack.c.b16 %v4627, %v4623
    %v4920 = vpack.c.b16 %v4628, %v4624
    %v4921 = vpack.c.b16 %v4629, %v4625
    %v4922 = vpack.c.b16 %v4630, %v4626
    %v4923 = vpack.c.b16 %v4635, %v4631
    %v4924 = vpack.c.b16 %v4636, %v4632
    %v4925 = vpack.c.b16 %v4637, %v4633
    %v4926 = vpack.c.b16 %v4638, %v4634
    %v4927 = vpack.c.b16 %v4643, %v4639
    %v4928 = vpack.c.b16 %v4644, %v4640
    %v4929 = vpack.c.b16 %v4645, %v4641
    %v4930 = vpack.c.b16 %v4646, %v4642
    %v4931 = vpack.c.b16 %v4651, %v4647
    %v4932 = vpack.c.b16 %v4652, %v4648
    %v4933 = vpack.c.b16 %v4653, %v4649
    %v4934 = vpack.c.b16 %v4654, %v4650
    %v4935 = vpack.c.b16 %v4659, %v4655
    %v4936 = vpack.c.b16 %v4660, %v4656
    %v4937 = vpack.c.b16 %v4661, %v4657
    %v4938 = vpack.c.b16 %v4662, %v4658
    %v4939 = vpack.c.b16 %v4667, %v4663
    %v4940 = vpack.c.b16 %v4668, %v4664
    %v4941 = vpack.c.b16 %v4669, %v4665
    %v4942 = vpack.c.b16 %v4670, %v4666
    %v4943 = vpack.c.b16 %v4675, %v4671
    %v4944 = vpack.c.b16 %v4676, %v4672
    %v4945 = vpack.c.b16 %v4677, %v4673
    %v4946 = vpack.c.b16 %v4678, %v4674
    %v4947 = vpack.c.b16 %v4683, %v4679
    %v4948 = vpack.c.b16 %v4684, %v4680
    %v4949 = vpack.c.b16 %v4685, %v4681
    %v4950 = vpack.c.b16 %v4686, %v4682
    %v4951 = vpack.c.b16 %v4691, %v4687
    %v4952 = vpack.c.b16 %v4692, %v4688
    %v4953 = vpack.c.b16 %v4693, %v4689
    %v4954 = vpack.c.b16 %v4694, %v4690
    %v4955 = vpack.c.b16 %v4699, %v4695
    %v4956 = vpack.c.b16 %v4700, %v4696
    %v4957 = vpack.c.b16 %v4701, %v4697
    %v4958 = vpack.c.b16 %v4702, %v4698
    %5215 = vmatprep.subr.bf16.mxu0 %v4704
    %5216 = vmatpush1.bf16.msra.mxu0 %v4703
    %5217 = vmatprep.subr.bf16.mxu0 %v4708
    %5218 = vmatpush1.bf16.msra.mxu0 %v4707
    %5219 = vmatprep.subr.bf16.mxu0 %v4712
    %5220 = vmatpush1.bf16.msra.mxu0 %v4711
    %5221 = vmatprep.subr.bf16.mxu0 %v4716
    %5222 = vmatpush1.bf16.msra.mxu0 %v4715
    %5223 = vmatprep.subr.bf16.mxu0 %v4720
    %5224 = vmatpush1.bf16.msra.mxu0 %v4719
    %5225 = vmatprep.subr.bf16.mxu0 %v4724
    %5226 = vmatpush1.bf16.msra.mxu0 %v4723
    %5227 = vmatprep.subr.bf16.mxu0 %v4728
    %5228 = vmatpush1.bf16.msra.mxu0 %v4727
    %5229 = vmatprep.subr.bf16.mxu0 %v4732
    %5230 = vmatpush1.bf16.msra.mxu0 %v4731
    %5231 = vmatprep.subr.bf16.mxu0 %v4736
    %5232 = vmatpush1.bf16.msra.mxu0 %v4735
    %5233 = vmatprep.subr.bf16.mxu0 %v4740
    %5234 = vmatpush1.bf16.msra.mxu0 %v4739
    %5235 = vmatprep.subr.bf16.mxu0 %v4744
    %5236 = vmatpush1.bf16.msra.mxu0 %v4743
    %5237 = vmatprep.subr.bf16.mxu0 %v4748
    %5238 = vmatpush1.bf16.msra.mxu0 %v4747
    %5239 = vmatprep.subr.bf16.mxu0 %v4752
    %5240 = vmatpush1.bf16.msra.mxu0 %v4751
    %5241 = vmatprep.subr.bf16.mxu0 %v4756
    %5242 = vmatpush1.bf16.msra.mxu0 %v4755
    %5243 = vmatprep.subr.bf16.mxu0 %v4760
    %5244 = vmatpush1.bf16.msra.mxu0 %v4759
    %5245 = vmatprep.subr.bf16.mxu0 %v4764
    %5246 = vmatpush1.bf16.msra.mxu0 %v4763
    %5247 = vmatprep.mubr.bf16.mxu0 %v3650
    %5248 = vmatmul.mubr.bf16.gmra.mrb[0].mxu0 %v3649
    %v5249 = vpop.f32.mrb[0].mxu0
    %v5250 = vadd.f32 %v3918, %v5249
    %v5251 = vpop.f32.mrb[0].mxu0
    %v5252 = vadd.f32 %v3922, %v5251
    %v5253 = vpop.f32.mrb[0].mxu0
    %v5254 = vpop.f32.mrb[0].mxu0
    %5255 = vdwg.mxu0
    %5256 = vmatprep.subr.bf16.mxu0 %v4768
    %5257 = vmatpush1.bf16.msra.mxu0 %v4767
    %5258 = vmatprep.subr.bf16.mxu0 %v4772
    %5259 = vmatpush1.bf16.msra.mxu0 %v4771
    %5260 = vmatprep.subr.bf16.mxu0 %v4776
    %5261 = vmatpush1.bf16.msra.mxu0 %v4775
    %5262 = vmatprep.subr.bf16.mxu0 %v4780
    %5263 = vmatpush1.bf16.msra.mxu0 %v4779
    %5264 = vmatprep.subr.bf16.mxu0 %v4784
    %5265 = vmatpush1.bf16.msra.mxu0 %v4783
    %5266 = vmatprep.subr.bf16.mxu0 %v4788
    %5267 = vmatpush1.bf16.msra.mxu0 %v4787
    %5268 = vmatprep.subr.bf16.mxu0 %v4792
    %5269 = vmatpush1.bf16.msra.mxu0 %v4791
    %5270 = vmatprep.subr.bf16.mxu0 %v4796
    %5271 = vmatpush1.bf16.msra.mxu0 %v4795
    %5272 = vmatprep.subr.bf16.mxu0 %v4800
    %5273 = vmatpush1.bf16.msra.mxu0 %v4799
    %5274 = vmatprep.subr.bf16.mxu0 %v4804
    %5275 = vmatpush1.bf16.msra.mxu0 %v4803
    %5276 = vmatprep.subr.bf16.mxu0 %v4808
    %5277 = vmatpush1.bf16.msra.mxu0 %v4807
    %5278 = vmatprep.subr.bf16.mxu0 %v4812
    %5279 = vmatpush1.bf16.msra.mxu0 %v4811
    %5280 = vmatprep.subr.bf16.mxu0 %v4816
    %5281 = vmatpush1.bf16.msra.mxu0 %v4815
    %5282 = vmatprep.subr.bf16.mxu0 %v4820
    %5283 = vmatpush1.bf16.msra.mxu0 %v4819
    %5284 = vmatprep.subr.bf16.mxu0 %v4824
    %5285 = vmatpush1.bf16.msra.mxu0 %v4823
    %5286 = vmatprep.subr.bf16.mxu0 %v4828
    %5287 = vmatpush1.bf16.msra.mxu0 %v4827
    %5288 = vmatprep.mubr.bf16.mxu0 %v3652
    %5289 = vmatmul.mubr.bf16.gmra.mrb[0].mxu0 %v3651
    %v5290 = vpop.f32.mrb[0].mxu0
    %v5291 = vadd.f32 %v5250, %v5290
    %v5292 = vpop.f32.mrb[0].mxu0
    %v5293 = vadd.f32 %v5252, %v5292
    %v5294 = vpop.f32.mrb[0].mxu0
    %v5295 = vpop.f32.mrb[0].mxu0
    %5296 = vdwg.mxu0
    %5297 = vmatprep.subr.bf16.mxu0 %v4832
    %5298 = vmatpush1.bf16.msra.mxu0 %v4831
    %5299 = vmatprep.subr.bf16.mxu0 %v4836
    %5300 = vmatpush1.bf16.msra.mxu0 %v4835
    %5301 = vmatprep.subr.bf16.mxu0 %v4840
    %5302 = vmatpush1.bf16.msra.mxu0 %v4839
    %5303 = vmatprep.subr.bf16.mxu0 %v4844
    %5304 = vmatpush1.bf16.msra.mxu0 %v4843
    %5305 = vmatprep.subr.bf16.mxu0 %v4848
    %5306 = vmatpush1.bf16.msra.mxu0 %v4847
    %5307 = vmatprep.subr.bf16.mxu0 %v4852
    %5308 = vmatpush1.bf16.msra.mxu0 %v4851
    %5309 = vmatprep.subr.bf16.mxu0 %v4856
    %5310 = vmatpush1.bf16.msra.mxu0 %v4855
    %5311 = vmatprep.subr.bf16.mxu0 %v4860
    %5312 = vmatpush1.bf16.msra.mxu0 %v4859
    %5313 = vmatprep.subr.bf16.mxu0 %v4864
    %5314 = vmatpush1.bf16.msra.mxu0 %v4863
    %5315 = vmatprep.subr.bf16.mxu0 %v4868
    %5316 = vmatpush1.bf16.msra.mxu0 %v4867
    %5317 = vmatprep.subr.bf16.mxu0 %v4872
    %5318 = vmatpush1.bf16.msra.mxu0 %v4871
    %5319 = vmatprep.subr.bf16.mxu0 %v4876
    %5320 = vmatpush1.bf16.msra.mxu0 %v4875
    %5321 = vmatprep.subr.bf16.mxu0 %v4880
    %5322 = vmatpush1.bf16.msra.mxu0 %v4879
    %5323 = vmatprep.subr.bf16.mxu0 %v4884
    %5324 = vmatpush1.bf16.msra.mxu0 %v4883
    %5325 = vmatprep.subr.bf16.mxu0 %v4888
    %5326 = vmatpush1.bf16.msra.mxu0 %v4887
    %5327 = vmatprep.subr.bf16.mxu0 %v4892
    %5328 = vmatpush1.bf16.msra.mxu0 %v4891
    %5329 = vmatprep.mubr.bf16.mxu0 %v3654
    %5330 = vmatmul.mubr.bf16.gmra.mrb[0].mxu0 %v3653
    %v5331 = vpop.f32.mrb[0].mxu0
    %v5332 = vadd.f32 %v5291, %v5331
    %v5333 = vpop.f32.mrb[0].mxu0
    %v5334 = vadd.f32 %v5293, %v5333
    %v5335 = vpop.f32.mrb[0].mxu0
    %v5336 = vpop.f32.mrb[0].mxu0
    %5337 = vdwg.mxu0
    %5338 = vmatprep.subr.bf16.mxu0 %v4896
    %5339 = vmatpush1.bf16.msra.mxu0 %v4895
    %5340 = vmatprep.subr.bf16.mxu0 %v4900
    %5341 = vmatpush1.bf16.msra.mxu0 %v4899
    %5342 = vmatprep.subr.bf16.mxu0 %v4904
    %5343 = vmatpush1.bf16.msra.mxu0 %v4903
    %5344 = vmatprep.subr.bf16.mxu0 %v4908
    %5345 = vmatpush1.bf16.msra.mxu0 %v4907
    %5346 = vmatprep.subr.bf16.mxu0 %v4912
    %5347 = vmatpush1.bf16.msra.mxu0 %v4911
    %5348 = vmatprep.subr.bf16.mxu0 %v4916
    %5349 = vmatpush1.bf16.msra.mxu0 %v4915
    %5350 = vmatprep.subr.bf16.mxu0 %v4920
    %5351 = vmatpush1.bf16.msra.mxu0 %v4919
    %5352 = vmatprep.subr.bf16.mxu0 %v4924
    %5353 = vmatpush1.bf16.msra.mxu0 %v4923
    %5354 = vmatprep.subr.bf16.mxu0 %v4928
    %5355 = vmatpush1.bf16.msra.mxu0 %v4927
    %5356 = vmatprep.subr.bf16.mxu0 %v4932
    %5357 = vmatpush1.bf16.msra.mxu0 %v4931
    %5358 = vmatprep.subr.bf16.mxu0 %v4936
    %5359 = vmatpush1.bf16.msra.mxu0 %v4935
    %5360 = vmatprep.subr.bf16.mxu0 %v4940
    %5361 = vmatpush1.bf16.msra.mxu0 %v4939
    %5362 = vmatprep.subr.bf16.mxu0 %v4944
    %5363 = vmatpush1.bf16.msra.mxu0 %v4943
    %5364 = vmatprep.subr.bf16.mxu0 %v4948
    %5365 = vmatpush1.bf16.msra.mxu0 %v4947
    %5366 = vmatprep.subr.bf16.mxu0 %v4952
    %5367 = vmatpush1.bf16.msra.mxu0 %v4951
    %5368 = vmatprep.subr.bf16.mxu0 %v4956
    %5369 = vmatpush1.bf16.msra.mxu0 %v4955
    %5370 = vmatprep.mubr.bf16.mxu0 %v3656
    %5371 = vmatmul.mubr.bf16.gmra.mrb[0].mxu0 %v3655
    %v5372 = vpop.f32.mrb[0].mxu0
    %v5373 = vadd.f32 %v5332, %v5372
    %v5374 = vpop.f32.mrb[0].mxu0
    %v5375 = vadd.f32 %v5334, %v5374
    %v5376 = vpop.f32.mrb[0].mxu0
    %v5377 = vpop.f32.mrb[0].mxu0
    %5378 = vdwg.mxu0
    %5379 = vmatprep.subr.bf16.mxu0 %v4706
    %5380 = vmatpush1.bf16.msra.mxu0 %v4705
    %5381 = vmatprep.subr.bf16.mxu0 %v4710
    %5382 = vmatpush1.bf16.msra.mxu0 %v4709
    %5383 = vmatprep.subr.bf16.mxu0 %v4714
    %5384 = vmatpush1.bf16.msra.mxu0 %v4713
    %5385 = vmatprep.subr.bf16.mxu0 %v4718
    %5386 = vmatpush1.bf16.msra.mxu0 %v4717
    %5387 = vmatprep.subr.bf16.mxu0 %v4722
    %5388 = vmatpush1.bf16.msra.mxu0 %v4721
    %5389 = vmatprep.subr.bf16.mxu0 %v4726
    %5390 = vmatpush1.bf16.msra.mxu0 %v4725
    %5391 = vmatprep.subr.bf16.mxu0 %v4730
    %5392 = vmatpush1.bf16.msra.mxu0 %v4729
    %5393 = vmatprep.subr.bf16.mxu0 %v4734
    %5394 = vmatpush1.bf16.msra.mxu0 %v4733
    %5395 = vmatprep.subr.bf16.mxu0 %v4738
    %5396 = vmatpush1.bf16.msra.mxu0 %v4737
    %5397 = vmatprep.subr.bf16.mxu0 %v4742
    %5398 = vmatpush1.bf16.msra.mxu0 %v4741
    %5399 = vmatprep.subr.bf16.mxu0 %v4746
    %5400 = vmatpush1.bf16.msra.mxu0 %v4745
    %5401 = vmatprep.subr.bf16.mxu0 %v4750
    %5402 = vmatpush1.bf16.msra.mxu0 %v4749
    %5403 = vmatprep.subr.bf16.mxu0 %v4754
    %5404 = vmatpush1.bf16.msra.mxu0 %v4753
    %5405 = vmatprep.subr.bf16.mxu0 %v4758
    %5406 = vmatpush1.bf16.msra.mxu0 %v4757
    %5407 = vmatprep.subr.bf16.mxu0 %v4762
    %5408 = vmatpush1.bf16.msra.mxu0 %v4761
    %5409 = vmatprep.subr.bf16.mxu0 %v4766
    %5410 = vmatpush1.bf16.msra.mxu0 %v4765
    %5411 = vmatprep.mubr.bf16.mxu0 %v3650
    %5412 = vmatmul.mubr.bf16.gmra.mrb[0].mxu0 %v3649
    %v5413 = vpop.f32.mrb[0].mxu0
    %v5414 = vadd.f32 %v3926, %v5413
    %v5415 = vpop.f32.mrb[0].mxu0
    %v5416 = vadd.f32 %v3930, %v5415
    %v5417 = vpop.f32.mrb[0].mxu0
    %v5418 = vpop.f32.mrb[0].mxu0
    %5419 = vdwg.mxu0
    %5420 = vmatprep.subr.bf16.mxu0 %v4770
    %5421 = vmatpush1.bf16.msra.mxu0 %v4769
    %5422 = vmatprep.subr.bf16.mxu0 %v4774
    %5423 = vmatpush1.bf16.msra.mxu0 %v4773
    %5424 = vmatprep.subr.bf16.mxu0 %v4778
    %5425 = vmatpush1.bf16.msra.mxu0 %v4777
    %5426 = vmatprep.subr.bf16.mxu0 %v4782
    %5427 = vmatpush1.bf16.msra.mxu0 %v4781
    %5428 = vmatprep.subr.bf16.mxu0 %v4786
    %5429 = vmatpush1.bf16.msra.mxu0 %v4785
    %5430 = vmatprep.subr.bf16.mxu0 %v4790
    %5431 = vmatpush1.bf16.msra.mxu0 %v4789
    %5432 = vmatprep.subr.bf16.mxu0 %v4794
    %5433 = vmatpush1.bf16.msra.mxu0 %v4793
    %5434 = vmatprep.subr.bf16.mxu0 %v4798
    %5435 = vmatpush1.bf16.msra.mxu0 %v4797
    %5436 = vmatprep.subr.bf16.mxu0 %v4802
    %5437 = vmatpush1.bf16.msra.mxu0 %v4801
    %5438 = vmatprep.subr.bf16.mxu0 %v4806
    %5439 = vmatpush1.bf16.msra.mxu0 %v4805
    %5440 = vmatprep.subr.bf16.mxu0 %v4810
    %5441 = vmatpush1.bf16.msra.mxu0 %v4809
    %5442 = vmatprep.subr.bf16.mxu0 %v4814
    %5443 = vmatpush1.bf16.msra.mxu0 %v4813
    %5444 = vmatprep.subr.bf16.mxu0 %v4818
    %5445 = vmatpush1.bf16.msra.mxu0 %v4817
    %5446 = vmatprep.subr.bf16.mxu0 %v4822
    %5447 = vmatpush1.bf16.msra.mxu0 %v4821
    %5448 = vmatprep.subr.bf16.mxu0 %v4826
    %5449 = vmatpush1.bf16.msra.mxu0 %v4825
    %5450 = vmatprep.subr.bf16.mxu0 %v4830
    %5451 = vmatpush1.bf16.msra.mxu0 %v4829
    %5452 = vmatprep.mubr.bf16.mxu0 %v3652
    %5453 = vmatmul.mubr.bf16.gmra.mrb[0].mxu0 %v3651
    %v5454 = vpop.f32.mrb[0].mxu0
    %v5455 = vadd.f32 %v5414, %v5454
    %v5456 = vpop.f32.mrb[0].mxu0
    %v5457 = vadd.f32 %v5416, %v5456
    %v5458 = vpop.f32.mrb[0].mxu0
    %v5459 = vpop.f32.mrb[0].mxu0
    %5460 = vdwg.mxu0
    %5461 = vmatprep.subr.bf16.mxu0 %v4834
    %5462 = vmatpush1.bf16.msra.mxu0 %v4833
    %5463 = vmatprep.subr.bf16.mxu0 %v4838
    %5464 = vmatpush1.bf16.msra.mxu0 %v4837
    %5465 = vmatprep.subr.bf16.mxu0 %v4842
    %5466 = vmatpush1.bf16.msra.mxu0 %v4841
    %5467 = vmatprep.subr.bf16.mxu0 %v4846
    %5468 = vmatpush1.bf16.msra.mxu0 %v4845
    %5469 = vmatprep.subr.bf16.mxu0 %v4850
    %5470 = vmatpush1.bf16.msra.mxu0 %v4849
    %5471 = vmatprep.subr.bf16.mxu0 %v4854
    %5472 = vmatpush1.bf16.msra.mxu0 %v4853
    %5473 = vmatprep.subr.bf16.mxu0 %v4858
    %5474 = vmatpush1.bf16.msra.mxu0 %v4857
    %5475 = vmatprep.subr.bf16.mxu0 %v4862
    %5476 = vmatpush1.bf16.msra.mxu0 %v4861
    %5477 = vmatprep.subr.bf16.mxu0 %v4866
    %5478 = vmatpush1.bf16.msra.mxu0 %v4865
    %5479 = vmatprep.subr.bf16.mxu0 %v4870
    %5480 = vmatpush1.bf16.msra.mxu0 %v4869
    %5481 = vmatprep.subr.bf16.mxu0 %v4874
    %5482 = vmatpush1.bf16.msra.mxu0 %v4873
    %5483 = vmatprep.subr.bf16.mxu0 %v4878
    %5484 = vmatpush1.bf16.msra.mxu0 %v4877
    %5485 = vmatprep.subr.bf16.mxu0 %v4882
    %5486 = vmatpush1.bf16.msra.mxu0 %v4881
    %5487 = vmatprep.subr.bf16.mxu0 %v4886
    %5488 = vmatpush1.bf16.msra.mxu0 %v4885
    %5489 = vmatprep.subr.bf16.mxu0 %v4890
    %5490 = vmatpush1.bf16.msra.mxu0 %v4889
    %5491 = vmatprep.subr.bf16.mxu0 %v4894
    %5492 = vmatpush1.bf16.msra.mxu0 %v4893
    %5493 = vmatprep.mubr.bf16.mxu0 %v3654
    %5494 = vmatmul.mubr.bf16.gmra.mrb[0].mxu0 %v3653
    %v5495 = vpop.f32.mrb[0].mxu0
    %v5496 = vadd.f32 %v5455, %v5495
    %v5497 = vpop.f32.mrb[0].mxu0
    %v5498 = vadd.f32 %v5457, %v5497
    %v5499 = vpop.f32.mrb[0].mxu0
    %v5500 = vpop.f32.mrb[0].mxu0
    %5501 = vdwg.mxu0
    %5502 = vmatprep.subr.bf16.mxu0 %v4898
    %5503 = vmatpush1.bf16.msra.mxu0 %v4897
    %5504 = vmatprep.subr.bf16.mxu0 %v4902
    %5505 = vmatpush1.bf16.msra.mxu0 %v4901
    %5506 = vmatprep.subr.bf16.mxu0 %v4906
    %5507 = vmatpush1.bf16.msra.mxu0 %v4905
    %5508 = vmatprep.subr.bf16.mxu0 %v4910
    %5509 = vmatpush1.bf16.msra.mxu0 %v4909
    %5510 = vmatprep.subr.bf16.mxu0 %v4914
    %5511 = vmatpush1.bf16.msra.mxu0 %v4913
    %5512 = vmatprep.subr.bf16.mxu0 %v4918
    %5513 = vmatpush1.bf16.msra.mxu0 %v4917
    %5514 = vmatprep.subr.bf16.mxu0 %v4922
    %5515 = vmatpush1.bf16.msra.mxu0 %v4921
    %5516 = vmatprep.subr.bf16.mxu0 %v4926
    %5517 = vmatpush1.bf16.msra.mxu0 %v4925
    %5518 = vmatprep.subr.bf16.mxu0 %v4930
    %5519 = vmatpush1.bf16.msra.mxu0 %v4929
    %5520 = vmatprep.subr.bf16.mxu0 %v4934
    %5521 = vmatpush1.bf16.msra.mxu0 %v4933
    %5522 = vmatprep.subr.bf16.mxu0 %v4938
    %5523 = vmatpush1.bf16.msra.mxu0 %v4937
    %5524 = vmatprep.subr.bf16.mxu0 %v4942
    %5525 = vmatpush1.bf16.msra.mxu0 %v4941
    %5526 = vmatprep.subr.bf16.mxu0 %v4946
    %5527 = vmatpush1.bf16.msra.mxu0 %v4945
    %5528 = vmatprep.subr.bf16.mxu0 %v4950
    %5529 = vmatpush1.bf16.msra.mxu0 %v4949
    %5530 = vmatprep.subr.bf16.mxu0 %v4954
    %5531 = vmatpush1.bf16.msra.mxu0 %v4953
    %5532 = vmatprep.subr.bf16.mxu0 %v4958
    %5533 = vmatpush1.bf16.msra.mxu0 %v4957
    %5534 = vmatprep.mubr.bf16.mxu0 %v3656
    %5535 = vmatmul.mubr.bf16.gmra.mrb[0].mxu0 %v3655
    %v5536 = vpop.f32.mrb[0].mxu0
    %v5537 = vadd.f32 %v5496, %v5536
    %v5538 = vpop.f32.mrb[0].mxu0
    %v5539 = vadd.f32 %v5498, %v5538
    %v5540 = vpop.f32.mrb[0].mxu0
    %v5541 = vpop.f32.mrb[0].mxu0
    %5542 = vdwg.mxu0
    %vm5543 = vcmp.gt.f32.partialorder %v5373, 0.0
    %vm5544 = vcmp.gt.f32.partialorder %v5375, 0.0
    %vm5545 = vcmp.gt.f32.partialorder %v5537, 0.0
    %vm5546 = vcmp.gt.f32.partialorder %v5539, 0.0
    %v5547 = vmul.f32 %v5373, 0.2
    %v5548 = vmul.f32 %v5375, 0.2
    %v5549 = vmul.f32 %v5537, 0.2
    %v5550 = vmul.f32 %v5539, 0.2
    %v5551 = vsel %vm5543, %v5373, %v5547
    %v5552 = vsel %vm5544, %v5375, %v5548
    %v5553 = vsel %vm5545, %v5537, %v5549
    %v5554 = vsel %vm5546, %v5539, %v5550
    %v5555 = vld [vmem:[%s2] sm:$0xf]
    %v5556 = vunpack.c.l.bf16 %v5555
    %v5557 = vmul.f32 %v5556, 1.4285715
    %v5559 = vcombine.high %v5557, %v5557
    %v5561 = vunpack.c.l.s4 1983009808
    %v5562 = vunpack.c.0.s8 %v5561
    %v5563 = vlaneseq
    %v5564 = vshrl.u32 %v5563, 7
    %v5565 = vsub.s32 %v5562, %v5564
    %v5566 = vrot.slane %v5557, %v5565
    %v5568 = vunpack.c.l.s4 1983009808
    %v5569 = vunpack.c.0.s8 %v5568
    %v5570 = vlaneseq
    %v5571 = vshrl.u32 %v5570, 7
    %v5572 = vsub.s32 %v5569, %v5571
    %v5573 = vrot.slane %v5559, %v5572
    %v5574 = vcombine.high %v5566, %v5566
    %v5575 = vcombine.high %v5573, %v5573
    %v5580 = vmul.f32 %v5551, %v5566
    %v5581 = vmul.f32 %v5552, %v5574
    %v5582 = vmul.f32 %v5553, %v5573
    %v5583 = vmul.f32 %v5554, %v5575
    %v5584 = vpack.c.bf16 %v5580, %v5580
    %v5585 = vpack.c.bf16 %v5581, %v5581
    %v5586 = vpack.c.bf16 %v5582, %v5582
    %v5587 = vpack.c.bf16 %v5583, %v5583
    %v5588 = vld [vmem:[#allocation10] sm:$0xff]
    %v5589 = vld [vmem:[#allocation10 + $0x8] sm:$0xff]
    %v5590 = vld [vmem:[#allocation10 + $0x10] sm:$0xff]
    %v5591 = vld [vmem:[#allocation10 + $0x18] sm:$0xff]
    %v5592 = vld [vmem:[#allocation10 + $0x20] sm:$0xff]
    %v5593 = vld [vmem:[#allocation10 + $0x28] sm:$0xff]
    %v5594 = vld [vmem:[#allocation10 + $0x30] sm:$0xff]
    %v5595 = vld [vmem:[#allocation10 + $0x38] sm:$0xff]
    %v5596 = vld [vmem:[#allocation10 + $0x40] sm:$0xff]
    %v5597 = vld [vmem:[#allocation10 + $0x48] sm:$0xff]
    %v5598 = vld [vmem:[#allocation10 + $0x50] sm:$0xff]
    %v5599 = vld [vmem:[#allocation10 + $0x58] sm:$0xff]
    %v5600 = vld [vmem:[#allocation10 + $0x60] sm:$0xff]
    %v5601 = vld [vmem:[#allocation10 + $0x68] sm:$0xff]
    %v5602 = vld [vmem:[#allocation10 + $0x70] sm:$0xff]
    %v5603 = vld [vmem:[#allocation10 + $0x78] sm:$0xff]
    %v5604 = vld [vmem:[#allocation10 + $0x80] sm:$0xff]
    %v5605 = vld [vmem:[#allocation10 + $0x88] sm:$0xff]
    %v5606 = vld [vmem:[#allocation10 + $0x90] sm:$0xff]
    %v5607 = vld [vmem:[#allocation10 + $0x98] sm:$0xff]
    %v5608 = vld [vmem:[#allocation10 + $0xa0] sm:$0xff]
    %v5609 = vld [vmem:[#allocation10 + $0xa8] sm:$0xff]
    %v5610 = vld [vmem:[#allocation10 + $0xb0] sm:$0xff]
    %v5611 = vld [vmem:[#allocation10 + $0xb8] sm:$0xff]
    %v5612 = vld [vmem:[#allocation10 + $0xc0] sm:$0xff]
    %v5613 = vld [vmem:[#allocation10 + $0xc8] sm:$0xff]
    %v5614 = vld [vmem:[#allocation10 + $0xd0] sm:$0xff]
    %v5615 = vld [vmem:[#allocation10 + $0xd8] sm:$0xff]
    %v5616 = vld [vmem:[#allocation10 + $0xe0] sm:$0xff]
    %v5617 = vld [vmem:[#allocation10 + $0xe8] sm:$0xff]
    %v5618 = vld [vmem:[#allocation10 + $0xf0] sm:$0xff]
    %v5619 = vld [vmem:[#allocation10 + $0xf8] sm:$0xff]
    %v5620 = vld [vmem:[#allocation10 + $0x100] sm:$0xff]
    %v5621 = vld [vmem:[#allocation10 + $0x108] sm:$0xff]
    %v5622 = vld [vmem:[#allocation10 + $0x110] sm:$0xff]
    %v5623 = vld [vmem:[#allocation10 + $0x118] sm:$0xff]
    %v5624 = vld [vmem:[#allocation10 + $0x120] sm:$0xff]
    %v5625 = vld [vmem:[#allocation10 + $0x128] sm:$0xff]
    %v5626 = vld [vmem:[#allocation10 + $0x130] sm:$0xff]
    %v5627 = vld [vmem:[#allocation10 + $0x138] sm:$0xff]
    %v5628 = vld [vmem:[#allocation10 + $0x140] sm:$0xff]
    %v5629 = vld [vmem:[#allocation10 + $0x148] sm:$0xff]
    %v5630 = vld [vmem:[#allocation10 + $0x150] sm:$0xff]
    %v5631 = vld [vmem:[#allocation10 + $0x158] sm:$0xff]
    %v5632 = vld [vmem:[#allocation10 + $0x160] sm:$0xff]
    %v5633 = vld [vmem:[#allocation10 + $0x168] sm:$0xff]
    %v5634 = vld [vmem:[#allocation10 + $0x170] sm:$0xff]
    %v5635 = vld [vmem:[#allocation10 + $0x178] sm:$0xff]
    %v5636 = vld [vmem:[#allocation10 + $0x180] sm:$0xff]
    %v5637 = vld [vmem:[#allocation10 + $0x188] sm:$0xff]
    %v5638 = vld [vmem:[#allocation10 + $0x190] sm:$0xff]
    %v5639 = vld [vmem:[#allocation10 + $0x198] sm:$0xff]
    %v5640 = vld [vmem:[#allocation10 + $0x1a0] sm:$0xff]
    %v5641 = vld [vmem:[#allocation10 + $0x1a8] sm:$0xff]
    %v5642 = vld [vmem:[#allocation10 + $0x1b0] sm:$0xff]
    %v5643 = vld [vmem:[#allocation10 + $0x1b8] sm:$0xff]
    %v5644 = vld [vmem:[#allocation10 + $0x1c0] sm:$0xff]
    %v5645 = vld [vmem:[#allocation10 + $0x1c8] sm:$0xff]
    %v5646 = vld [vmem:[#allocation10 + $0x1d0] sm:$0xff]
    %v5647 = vld [vmem:[#allocation10 + $0x1d8] sm:$0xff]
    %v5648 = vld [vmem:[#allocation10 + $0x1e0] sm:$0xff]
    %v5649 = vld [vmem:[#allocation10 + $0x1e8] sm:$0xff]
    %v5650 = vld [vmem:[#allocation10 + $0x1f0] sm:$0xff]
    %v5651 = vld [vmem:[#allocation10 + $0x1f8] sm:$0xff]
    %v5652 = vld [vmem:[#allocation11] sm:$0x3]
    %v5654 = vlaneseq
    %v5655 = vshrl.u32 %v5654, 7
    %v5656 = vsub.s32 0, %v5655
    %v5657 = vrot.slane %v5652, %v5656
    %v5658 = vlaneseq
    %v5659 = vshrl.u32 %v5658, 7
    %v5660 = vsub.s32 1, %v5659
    %v5661 = vrot.slane %v5652, %v5660
    %v5728 = vunpack.c.l.b16 %v5588
    %v5729 = vunpack.c.h.b16 %v5588
    %v5730 = vunpack.c.l.b16 %v5589
    %v5731 = vunpack.c.h.b16 %v5589
    %v5732 = vunpack.c.l.b16 %v5590
    %v5733 = vunpack.c.h.b16 %v5590
    %v5734 = vunpack.c.l.b16 %v5591
    %v5735 = vunpack.c.h.b16 %v5591
    %v5736 = vunpack.c.l.b16 %v5592
    %v5737 = vunpack.c.h.b16 %v5592
    %v5738 = vunpack.c.l.b16 %v5593
    %v5739 = vunpack.c.h.b16 %v5593
    %v5740 = vunpack.c.l.b16 %v5594
    %v5741 = vunpack.c.h.b16 %v5594
    %v5742 = vunpack.c.l.b16 %v5595
    %v5743 = vunpack.c.h.b16 %v5595
    %v5744 = vunpack.c.l.b16 %v5596
    %v5745 = vunpack.c.h.b16 %v5596
    %v5746 = vunpack.c.l.b16 %v5597
    %v5747 = vunpack.c.h.b16 %v5597
    %v5748 = vunpack.c.l.b16 %v5598
    %v5749 = vunpack.c.h.b16 %v5598
    %v5750 = vunpack.c.l.b16 %v5599
    %v5751 = vunpack.c.h.b16 %v5599
    %v5752 = vunpack.c.l.b16 %v5600
    %v5753 = vunpack.c.h.b16 %v5600
    %v5754 = vunpack.c.l.b16 %v5601
    %v5755 = vunpack.c.h.b16 %v5601
    %v5756 = vunpack.c.l.b16 %v5602
    %v5757 = vunpack.c.h.b16 %v5602
    %v5758 = vunpack.c.l.b16 %v5603
    %v5759 = vunpack.c.h.b16 %v5603
    %v5760 = vunpack.c.l.b16 %v5604
    %v5761 = vunpack.c.h.b16 %v5604
    %v5762 = vunpack.c.l.b16 %v5605
    %v5763 = vunpack.c.h.b16 %v5605
    %v5764 = vunpack.c.l.b16 %v5606
    %v5765 = vunpack.c.h.b16 %v5606
    %v5766 = vunpack.c.l.b16 %v5607
    %v5767 = vunpack.c.h.b16 %v5607
    %v5768 = vunpack.c.l.b16 %v5608
    %v5769 = vunpack.c.h.b16 %v5608
    %v5770 = vunpack.c.l.b16 %v5609
    %v5771 = vunpack.c.h.b16 %v5609
    %v5772 = vunpack.c.l.b16 %v5610
    %v5773 = vunpack.c.h.b16 %v5610
    %v5774 = vunpack.c.l.b16 %v5611
    %v5775 = vunpack.c.h.b16 %v5611
    %v5776 = vunpack.c.l.b16 %v5612
    %v5777 = vunpack.c.h.b16 %v5612
    %v5778 = vunpack.c.l.b16 %v5613
    %v5779 = vunpack.c.h.b16 %v5613
    %v5780 = vunpack.c.l.b16 %v5614
    %v5781 = vunpack.c.h.b16 %v5614
    %v5782 = vunpack.c.l.b16 %v5615
    %v5783 = vunpack.c.h.b16 %v5615
    %v5784 = vunpack.c.l.b16 %v5616
    %v5785 = vunpack.c.h.b16 %v5616
    %v5786 = vunpack.c.l.b16 %v5617
    %v5787 = vunpack.c.h.b16 %v5617
    %v5788 = vunpack.c.l.b16 %v5618
    %v5789 = vunpack.c.h.b16 %v5618
    %v5790 = vunpack.c.l.b16 %v5619
    %v5791 = vunpack.c.h.b16 %v5619
    %v5792 = vunpack.c.l.b16 %v5620
    %v5793 = vunpack.c.h.b16 %v5620
    %v5794 = vunpack.c.l.b16 %v5621
    %v5795 = vunpack.c.h.b16 %v5621
    %v5796 = vunpack.c.l.b16 %v5622
    %v5797 = vunpack.c.h.b16 %v5622
    %v5798 = vunpack.c.l.b16 %v5623
    %v5799 = vunpack.c.h.b16 %v5623
    %v5800 = vunpack.c.l.b16 %v5624
    %v5801 = vunpack.c.h.b16 %v5624
    %v5802 = vunpack.c.l.b16 %v5625
    %v5803 = vunpack.c.h.b16 %v5625
    %v5804 = vunpack.c.l.b16 %v5626
    %v5805 = vunpack.c.h.b16 %v5626
    %v5806 = vunpack.c.l.b16 %v5627
    %v5807 = vunpack.c.h.b16 %v5627
    %v5808 = vunpack.c.l.b16 %v5628
    %v5809 = vunpack.c.h.b16 %v5628
    %v5810 = vunpack.c.l.b16 %v5629
    %v5811 = vunpack.c.h.b16 %v5629
    %v5812 = vunpack.c.l.b16 %v5630
    %v5813 = vunpack.c.h.b16 %v5630
    %v5814 = vunpack.c.l.b16 %v5631
    %v5815 = vunpack.c.h.b16 %v5631
    %v5816 = vunpack.c.l.b16 %v5632
    %v5817 = vunpack.c.h.b16 %v5632
    %v5818 = vunpack.c.l.b16 %v5633
    %v5819 = vunpack.c.h.b16 %v5633
    %v5820 = vunpack.c.l.b16 %v5634
    %v5821 = vunpack.c.h.b16 %v5634
    %v5822 = vunpack.c.l.b16 %v5635
    %v5823 = vunpack.c.h.b16 %v5635
    %v5824 = vunpack.c.l.b16 %v5636
    %v5825 = vunpack.c.h.b16 %v5636
    %v5826 = vunpack.c.l.b16 %v5637
    %v5827 = vunpack.c.h.b16 %v5637
    %v5828 = vunpack.c.l.b16 %v5638
    %v5829 = vunpack.c.h.b16 %v5638
    %v5830 = vunpack.c.l.b16 %v5639
    %v5831 = vunpack.c.h.b16 %v5639
    %v5832 = vunpack.c.l.b16 %v5640
    %v5833 = vunpack.c.h.b16 %v5640
    %v5834 = vunpack.c.l.b16 %v5641
    %v5835 = vunpack.c.h.b16 %v5641
    %v5836 = vunpack.c.l.b16 %v5642
    %v5837 = vunpack.c.h.b16 %v5642
    %v5838 = vunpack.c.l.b16 %v5643
    %v5839 = vunpack.c.h.b16 %v5643
    %v5840 = vunpack.c.l.b16 %v5644
    %v5841 = vunpack.c.h.b16 %v5644
    %v5842 = vunpack.c.l.b16 %v5645
    %v5843 = vunpack.c.h.b16 %v5645
    %v5844 = vunpack.c.l.b16 %v5646
    %v5845 = vunpack.c.h.b16 %v5646
    %v5846 = vunpack.c.l.b16 %v5647
    %v5847 = vunpack.c.h.b16 %v5647
    %v5848 = vunpack.c.l.b16 %v5648
    %v5849 = vunpack.c.h.b16 %v5648
    %v5850 = vunpack.c.l.b16 %v5649
    %v5851 = vunpack.c.h.b16 %v5649
    %v5852 = vunpack.c.l.b16 %v5650
    %v5853 = vunpack.c.h.b16 %v5650
    %v5854 = vunpack.c.l.b16 %v5651
    %v5855 = vunpack.c.h.b16 %v5651
    %v5856 = vpack.c.b16 %v5730, %v5728
    %v5857 = vpack.c.b16 %v5731, %v5729
    %v5858 = vpack.c.b16 %v5734, %v5732
    %v5859 = vpack.c.b16 %v5735, %v5733
    %v5860 = vpack.c.b16 %v5738, %v5736
    %v5861 = vpack.c.b16 %v5739, %v5737
    %v5862 = vpack.c.b16 %v5742, %v5740
    %v5863 = vpack.c.b16 %v5743, %v5741
    %v5864 = vpack.c.b16 %v5746, %v5744
    %v5865 = vpack.c.b16 %v5747, %v5745
    %v5866 = vpack.c.b16 %v5750, %v5748
    %v5867 = vpack.c.b16 %v5751, %v5749
    %v5868 = vpack.c.b16 %v5754, %v5752
    %v5869 = vpack.c.b16 %v5755, %v5753
    %v5870 = vpack.c.b16 %v5758, %v5756
    %v5871 = vpack.c.b16 %v5759, %v5757
    %v5872 = vpack.c.b16 %v5762, %v5760
    %v5873 = vpack.c.b16 %v5763, %v5761
    %v5874 = vpack.c.b16 %v5766, %v5764
    %v5875 = vpack.c.b16 %v5767, %v5765
    %v5876 = vpack.c.b16 %v5770, %v5768
    %v5877 = vpack.c.b16 %v5771, %v5769
    %v5878 = vpack.c.b16 %v5774, %v5772
    %v5879 = vpack.c.b16 %v5775, %v5773
    %v5880 = vpack.c.b16 %v5778, %v5776
    %v5881 = vpack.c.b16 %v5779, %v5777
    %v5882 = vpack.c.b16 %v5782, %v5780
    %v5883 = vpack.c.b16 %v5783, %v5781
    %v5884 = vpack.c.b16 %v5786, %v5784
    %v5885 = vpack.c.b16 %v5787, %v5785
    %v5886 = vpack.c.b16 %v5790, %v5788
    %v5887 = vpack.c.b16 %v5791, %v5789
    %v5888 = vpack.c.b16 %v5794, %v5792
    %v5889 = vpack.c.b16 %v5795, %v5793
    %v5890 = vpack.c.b16 %v5798, %v5796
    %v5891 = vpack.c.b16 %v5799, %v5797
    %v5892 = vpack.c.b16 %v5802, %v5800
    %v5893 = vpack.c.b16 %v5803, %v5801
    %v5894 = vpack.c.b16 %v5806, %v5804
    %v5895 = vpack.c.b16 %v5807, %v5805
    %v5896 = vpack.c.b16 %v5810, %v5808
    %v5897 = vpack.c.b16 %v5811, %v5809
    %v5898 = vpack.c.b16 %v5814, %v5812
    %v5899 = vpack.c.b16 %v5815, %v5813
    %v5900 = vpack.c.b16 %v5818, %v5816
    %v5901 = vpack.c.b16 %v5819, %v5817
    %v5902 = vpack.c.b16 %v5822, %v5820
    %v5903 = vpack.c.b16 %v5823, %v5821
    %v5904 = vpack.c.b16 %v5826, %v5824
    %v5905 = vpack.c.b16 %v5827, %v5825
    %v5906 = vpack.c.b16 %v5830, %v5828
    %v5907 = vpack.c.b16 %v5831, %v5829
    %v5908 = vpack.c.b16 %v5834, %v5832
    %v5909 = vpack.c.b16 %v5835, %v5833
    %v5910 = vpack.c.b16 %v5838, %v5836
    %v5911 = vpack.c.b16 %v5839, %v5837
    %v5912 = vpack.c.b16 %v5842, %v5840
    %v5913 = vpack.c.b16 %v5843, %v5841
    %v5914 = vpack.c.b16 %v5846, %v5844
    %v5915 = vpack.c.b16 %v5847, %v5845
    %v5916 = vpack.c.b16 %v5850, %v5848
    %v5917 = vpack.c.b16 %v5851, %v5849
    %v5918 = vpack.c.b16 %v5854, %v5852
    %v5919 = vpack.c.b16 %v5855, %v5853
    %5984 = vmatprep.subr.bf16.mxu0 %v5857
    %5985 = vmatpush1.bf16.msra.mxu0 %v5856
    %5986 = vmatprep.subr.bf16.mxu0 %v5859
    %5987 = vmatpush1.bf16.msra.mxu0 %v5858
    %5988 = vmatprep.subr.bf16.mxu0 %v5861
    %5989 = vmatpush1.bf16.msra.mxu0 %v5860
    %5990 = vmatprep.subr.bf16.mxu0 %v5863
    %5991 = vmatpush1.bf16.msra.mxu0 %v5862
    %5992 = vmatprep.subr.bf16.mxu0 %v5865
    %5993 = vmatpush1.bf16.msra.mxu0 %v5864
    %5994 = vmatprep.subr.bf16.mxu0 %v5867
    %5995 = vmatpush1.bf16.msra.mxu0 %v5866
    %5996 = vmatprep.subr.bf16.mxu0 %v5869
    %5997 = vmatpush1.bf16.msra.mxu0 %v5868
    %5998 = vmatprep.subr.bf16.mxu0 %v5871
    %5999 = vmatpush1.bf16.msra.mxu0 %v5870
    %6000 = vmatprep.subr.bf16.mxu0 %v5873
    %6001 = vmatpush1.bf16.msra.mxu0 %v5872
    %6002 = vmatprep.subr.bf16.mxu0 %v5875
    %6003 = vmatpush1.bf16.msra.mxu0 %v5874
    %6004 = vmatprep.subr.bf16.mxu0 %v5877
    %6005 = vmatpush1.bf16.msra.mxu0 %v5876
    %6006 = vmatprep.subr.bf16.mxu0 %v5879
    %6007 = vmatpush1.bf16.msra.mxu0 %v5878
    %6008 = vmatprep.subr.bf16.mxu0 %v5881
    %6009 = vmatpush1.bf16.msra.mxu0 %v5880
    %6010 = vmatprep.subr.bf16.mxu0 %v5883
    %6011 = vmatpush1.bf16.msra.mxu0 %v5882
    %6012 = vmatprep.subr.bf16.mxu0 %v5885
    %6013 = vmatpush1.bf16.msra.mxu0 %v5884
    %6014 = vmatprep.subr.bf16.mxu0 %v5887
    %6015 = vmatpush1.bf16.msra.mxu0 %v5886
    %6016 = vmatprep.mubr.bf16.mxu0 %v5585
    %6017 = vmatmul.mubr.bf16.gmra.mrb[0].mxu0 %v5584
    %v6018 = vpop.f32.mrb[0].mxu0
    %v6019 = vadd.f32 %v5657, %v6018
    %v6020 = vpop.f32.mrb[0].mxu0
    %v6021 = vadd.f32 %v5661, %v6020
    %v6022 = vpop.f32.mrb[0].mxu0
    %v6023 = vpop.f32.mrb[0].mxu0
    %6024 = vdwg.mxu0
    %6025 = vmatprep.subr.bf16.mxu0 %v5889
    %6026 = vmatpush1.bf16.msra.mxu0 %v5888
    %6027 = vmatprep.subr.bf16.mxu0 %v5891
    %6028 = vmatpush1.bf16.msra.mxu0 %v5890
    %6029 = vmatprep.subr.bf16.mxu0 %v5893
    %6030 = vmatpush1.bf16.msra.mxu0 %v5892
    %6031 = vmatprep.subr.bf16.mxu0 %v5895
    %6032 = vmatpush1.bf16.msra.mxu0 %v5894
    %6033 = vmatprep.subr.bf16.mxu0 %v5897
    %6034 = vmatpush1.bf16.msra.mxu0 %v5896
    %6035 = vmatprep.subr.bf16.mxu0 %v5899
    %6036 = vmatpush1.bf16.msra.mxu0 %v5898
    %6037 = vmatprep.subr.bf16.mxu0 %v5901
    %6038 = vmatpush1.bf16.msra.mxu0 %v5900
    %6039 = vmatprep.subr.bf16.mxu0 %v5903
    %6040 = vmatpush1.bf16.msra.mxu0 %v5902
    %6041 = vmatprep.subr.bf16.mxu0 %v5905
    %6042 = vmatpush1.bf16.msra.mxu0 %v5904
    %6043 = vmatprep.subr.bf16.mxu0 %v5907
    %6044 = vmatpush1.bf16.msra.mxu0 %v5906
    %6045 = vmatprep.subr.bf16.mxu0 %v5909
    %6046 = vmatpush1.bf16.msra.mxu0 %v5908
    %6047 = vmatprep.subr.bf16.mxu0 %v5911
    %6048 = vmatpush1.bf16.msra.mxu0 %v5910
    %6049 = vmatprep.subr.bf16.mxu0 %v5913
    %6050 = vmatpush1.bf16.msra.mxu0 %v5912
    %6051 = vmatprep.subr.bf16.mxu0 %v5915
    %6052 = vmatpush1.bf16.msra.mxu0 %v5914
    %6053 = vmatprep.subr.bf16.mxu0 %v5917
    %6054 = vmatpush1.bf16.msra.mxu0 %v5916
    %6055 = vmatprep.subr.bf16.mxu0 %v5919
    %6056 = vmatpush1.bf16.msra.mxu0 %v5918
    %6057 = vmatprep.mubr.bf16.mxu0 %v5587
    %6058 = vmatmul.mubr.bf16.gmra.mrb[0].mxu0 %v5586
    %v6059 = vpop.f32.mrb[0].mxu0
    %v6060 = vadd.f32 %v6019, %v6059
    %v6061 = vpop.f32.mrb[0].mxu0
    %v6062 = vadd.f32 %v6021, %v6061
    %v6063 = vpop.f32.mrb[0].mxu0
    %v6064 = vpop.f32.mrb[0].mxu0
    %6065 = vdwg.mxu0
    %vm6066 = vcmp.gt.f32.partialorder %v6060, 0.0
    %vm6067 = vcmp.gt.f32.partialorder %v6062, 0.0
    %v6068 = vmul.f32 %v6060, 0.2
    %v6069 = vmul.f32 %v6062, 0.2
    %v6070 = vsel %vm6066, %v6060, %v6068
    %v6071 = vsel %vm6067, %v6062, %v6069
    %v6072 = vld [vmem:[%s3] sm:$0x3]
    %v6073 = vunpack.c.l.bf16 %v6072
    %v6074 = vmul.f32 %v6073, 1.4285715
    %v6077 = vunpack.c.l.s4 1983009808
    %v6078 = vunpack.c.0.s8 %v6077
    %v6079 = vlaneseq
    %v6080 = vshrl.u32 %v6079, 7
    %v6081 = vsub.s32 %v6078, %v6080
    %v6082 = vrot.slane %v6074, %v6081
    %v6083 = vcombine.high %v6082, %v6082
    %v6086 = vmul.f32 %v6070, %v6082
    %v6087 = vmul.f32 %v6071, %v6083
    %v6088 = vld [vmem:[#allocation13] sm:$0x3]
    %v6090 = vlaneseq
    %v6091 = vshrl.u32 %v6090, 7
    %v6092 = vsub.s32 0, %v6091
    %v6093 = vrot.slane %v6088, %v6092
    %v6094 = vlaneseq
    %v6095 = vshrl.u32 %v6094, 7
    %v6096 = vsub.s32 1, %v6095
    %v6097 = vrot.slane %v6088, %v6096
    %v6100 = vmul.f32 %v6086, %v6093
    %v6101 = vmul.f32 %v6087, %v6097
    %vm6102 = vcmask 1041408
    %v6103 = vsel %vm6102, %v6100, 0.0
    %v6104 = vsel %vm6102, %v6101, 0.0
    %v6105 = vadd.f32 %v6103, %v6104
    %6106 = vadd.xlane.f32.xlu0 %v6105
    %v6107 = vpop.xlane.xlu0 %6106
    %v6108 = vld [vmem:[#allocation2] sm:$0x1]
    %v6110 = vlaneseq
    %v6111 = vshrl.u32 %v6110, 7
    %v6112 = vsub.s32 0, %v6111
    %v6113 = vrot.slane %v6108, %v6112
    %v6115 = vadd.f32 %v6107, %v6113
    %v6116 = vxor.u32 %v6115, 2147483648
    %v6117 = vmul.f32 %v6116, 1.442695
    %v6118 = vpow.pop %v6117
    %v6119 = vadd.f32 %v6118, 1.0
    %v6120 = vrcp.pop %v6119
    %v6121 = vmul.f32 1.0, %v6120
    %vm6122 = vcmask 1024
    %6123 = vst.msk [vmem:[%s12] sm:$0x3] %vm6122, %v6121
    // Predicated region
    $region78: #{dnet_forward.3} parent=1 // pred_check
      _
    $region79: #{dnet_forward.3} parent=1 // pred_check_branch
      %6125 = sbr.rel (0) target = $region81
    $region80: #{dnet_forward.3} parent=1 // pred_region
      _
    $region81: #{dnet_forward.3} parent=1 // pred_fallthru
      _
    // Predicated region
    $region82: #{dnet_forward.3} parent=1 // pred_check
      _
    $region83: #{dnet_forward.3} parent=1 // pred_check_branch
      %6127 = sbr.rel (0) target = $region85
    $region84: #{dnet_forward.3} parent=1 // pred_region
      _
    $region85: #{dnet_forward.3} parent=1 // pred_fallthru
      _
    %6128 = vsyncpa [#allocation4], 1
    %6129 = vsyncpa [#allocation6], 1
    %6130 = vsyncpa [#allocation9], 1
    %6131 = vsyncpa [#allocation12], 1

</llo_original>
